<compile_context>
chip_gen: v5e
topology: v5e:2x2
jax: 0.10.0
libtpu: 0.0.40
codegen_flags: <defaults>
</compile_context>

<pallas_src>
import functools
import math

import jax
import jax.numpy as jnp
from jax import lax
from jax.experimental import pallas as pl
from jax.experimental.pallas import tpu as pltpu

F32 = jnp.float32
BF16 = jnp.bfloat16

# ------------------------- model / layout constants -------------------------
LANE = 128            # TPU lane width; every feature segment padded to this
SUB = 8               # sublane quantum (f32)

IN_CH = 3
WINDOW = 5
DIM = 32              # d_model (small test config)
DEPTH = 2
D_STATE = 16
D_CONV = 4
EXPAND = 2
HEADDIM = 16
NUM_CLASSES = 1
MLP_HID = 128

D_INNER = EXPAND * DIM            # 64
NHEADS = D_INNER // HEADDIM       # 4
N_IN_SEG = 4                      # [z+dt | x | B | C], each padded to LANE
CONV_SEG = 3                      # [x | B | C]

RMS_EPS = 1e-5
LN_EPS = 1e-5


def _round_up(x, m):
    return (x + m - 1) // m * m


# ----------------------------- in-kernel helpers -----------------------------

def _erf(x):
    # Abramowitz & Stegun 7.1.26 (|abs err| <= 1.5e-7): fp32-accurate erf
    # from exp / mul / add / div only (always lowers on Mosaic).
    p = 0.3275911
    a1, a2, a3, a4, a5 = (0.254829592, -0.284496736, 1.421413741,
                          -1.453152027, 1.061405429)
    s = jnp.where(x >= 0.0, 1.0, -1.0)
    z = jnp.abs(x)
    t = 1.0 / (1.0 + p * z)
    poly = ((((a5 * t + a4) * t + a3) * t + a2) * t + a1) * t
    return s * (1.0 - poly * jnp.exp(-z * z))


def _gelu_exact(x):
    # nn.GELU() exact-erf semantics via the A&S erf polynomial above.
    return 0.5 * x * (1.0 + _erf(x * 0.7071067811865476))


def _softplus(x):
    # overflow-safe softplus: max(x,0) + log(1 + exp(-|x|))
    return jnp.maximum(x, 0.0) + jnp.log(1.0 + jnp.exp(-jnp.abs(x)))


def _sigmoid(x):
    return 1.0 / (1.0 + jnp.exp(-x))


def _silu(x):
    return x * _sigmoid(x)


# ------------------------- fully fused forward kernel ------------------------

def _fused_forward_kernel(
        feats_ref, pw1_ref, pb1_ref, pw2_ref, pb2_ref, cls_ref,
        w_in_ref, conv_w_ref, conv_b_ref, dt_bias_ref, a_ref, d_ref,
        rms_w_ref, w_out_ref, ln_g_ref, ln_b_ref, expand_ref,
        hg_ref, hb_ref, hw_ref, hbb_ref,
        seq_ref, logit_ref, *,
        depth, lp, seq_real, dmodel, d_inner, nheads, k_conv):
    lpad = feats_ref.shape[0]                               # 16 (padded rows)

    # ---- grid-/layer-invariant masks (hoisted, built once) -----------------
    row_seq = lax.broadcasted_iota(jnp.int32, (lpad, LANE), 0)
    lane_seq = lax.broadcasted_iota(jnp.int32, (lpad, LANE), 1)
    row_xbc = lax.broadcasted_iota(jnp.int32, (lpad, CONV_SEG * LANE), 0)
    r2 = lax.broadcasted_iota(jnp.int32, (lpad, lpad), 0)
    c2 = lax.broadcasted_iota(jnp.int32, (lpad, lpad), 1)
    tril = (r2 >= c2).astype(F32)                           # causal mask
    lane_mask = (lane_seq < dmodel).astype(F32)             # real model lanes
    head_mask = (lane_seq < nheads).astype(F32)             # real head lanes
    seq_mask = (row_seq < seq_real).astype(F32)             # real seq rows
    tok_mask = (row_seq < lp).astype(F32)                   # projector rows
    cls_mask = (row_seq == lp).astype(F32)                  # CLS row (last)
    expand = expand_ref[...]                                # (128,128) 0/1 f32

    # ---- projector MLP: Linear -> exact GELU -> Linear (all rows at once) --
    h = jnp.dot(feats_ref[...].astype(BF16), pw1_ref[...],
                preferred_element_type=F32) + pb1_ref[...]
    h = _gelu_exact(h)
    tok = jnp.dot(h.astype(BF16), pw2_ref[...],
                  preferred_element_type=F32) + pb2_ref[...]
    # tokens at rows [0, lp), CLS appended at row lp, padded rows forced to 0
    x_seq = tok * tok_mask + cls_ref[...] * cls_mask        # (lpad, 128)

    # ---- Mamba2 layers ------------------------------------------------------
    for li in range(depth):
        xin = x_seq

        # in_proj (bias=False): 4x128-wide bf16 matmul; [z+dt | x | B | C]
        zxbcdt = jnp.dot(xin.astype(BF16), w_in_ref[li],
                         preferred_element_type=F32)        # (lpad, 4*128)
        zdt = zxbcdt[:, :LANE]                              # z(0:64)|dt(64:68)
        xbc = zxbcdt[:, LANE:]                              # [x | B | C]

        # depthwise causal conv1d + SiLU; shifts on XLU (roll) + row masks
        cw = conv_w_ref[li]                                 # (K, 3*128)
        acc = xbc * cw[k_conv - 1:k_conv, :]                # delay-0 tap
        for k in range(k_conv - 1):
            dly = k_conv - 1 - k
            shifted = pltpu.roll(xbc, shift=dly, axis=0)
            shifted = jnp.where(row_xbc >= dly, shifted, 0.0)
            acc = acc + shifted * cw[k:k + 1, :]
        xbc = _silu(acc + conv_b_ref[li])
        xs = xbc[:, 0 * LANE:1 * LANE]                      # real 64 lanes
        bmat = xbc[:, 1 * LANE:2 * LANE]                    # real 16 lanes
        cmat = xbc[:, 2 * LANE:3 * LANE]                    # real 16 lanes

        # dt packed in lanes [d_inner, d_inner+nheads) of segment 0:
        # half-width lane roll brings it to lanes [0, nheads); mask junk lanes.
        dt_raw = pltpu.roll(zdt, shift=LANE - d_inner, axis=1)
        dt = _softplus(dt_raw + dt_bias_ref[li]) * head_mask

        # inclusive cumsum over time via log-shift rolls (XLU/VPU, no MXU)
        s_cum = dt
        step = 1
        while step < lpad:
            s_cum = s_cum + jnp.where(
                row_seq >= step, pltpu.roll(s_cum, shift=step, axis=0), 0.0)
            step *= 2

        # ---- SSD (single-chunk quadratic form, ngroups=1):
        #   y_t = sum_{s<=t} (C_t.B_s) dt_s exp(A (S_t - S_s)) x_s + D x_t
        # TODO(synk): factorised decay exp(A S_t)*exp(-A S_s) is exact math but
        # can overflow fp32 for long sequences / large cumulative dt; fine for
        # this short single-chunk sequence (switch to segsum/chunked form
        # before scaling L).
        a = a_ref[li]                                       # (1,128), A < 0
        hcat = jnp.concatenate([dt * jnp.exp(-a * s_cum),   # -> scale_in
                                jnp.exp(a * s_cum)], axis=0)  # -> scale_out
        scales = jnp.dot(hcat, expand,
                         preferred_element_type=F32)        # one merged matmul
        scale_in = scales[:lpad]
        scale_out = scales[lpad:]

        # g[t,s] = C_t . B_s without glue transpose (contract state dims)
        g = lax.dot_general(cmat, bmat, (((1,), (1,)), ((), ())),
                            preferred_element_type=F32)     # (lpad, lpad)
        g = g * tril
        y = scale_out * jnp.dot(g, scale_in * xs, preferred_element_type=F32)
        y = y + d_ref[li] * xs                              # D skip term

        # gated RMSNorm (norm_before_gate=False): normalize after gating
        t = y * _silu(zdt)                                  # gate junk lanes hit y==0
        ms = jnp.sum(t * t, axis=-1, keepdims=True) * (1.0 / d_inner)
        yn = t * lax.rsqrt(ms + RMS_EPS) * rms_w_ref[li]

        # out_proj (bias=False) + per-layer LayerNorm + residual, rows masked
        yp = jnp.dot(yn.astype(BF16), w_out_ref[li], preferred_element_type=F32)
        mu = jnp.sum(yp, axis=-1, keepdims=True) * (1.0 / dmodel)
        xc = (yp - mu) * lane_mask
        var = jnp.sum(xc * xc, axis=-1, keepdims=True) * (1.0 / dmodel)
        lny = xc * lax.rsqrt(var + LN_EPS) * ln_g_ref[li] + ln_b_ref[li]
        x_seq = xin + lny * seq_mask

    # ---- outputs -------------------------------------------------------------
    seq_ref[...] = x_seq                                    # lane-dense store

    # classification head on the appended CLS token (row lp == last real row)
    cls_vec = jnp.sum(x_seq * cls_mask, axis=0, keepdims=True)   # (1,128)
    mu = jnp.sum(cls_vec, axis=-1, keepdims=True) * (1.0 / dmodel)
    xc = (cls_vec - mu) * lane_mask[:1, :]
    var = jnp.sum(xc * xc, axis=-1, keepdims=True) * (1.0 / dmodel)
    hvec = xc * lax.rsqrt(var + LN_EPS) * hg_ref[...] + hb_ref[...]
    logit_ref[...] = jnp.dot(hvec.astype(BF16), hw_ref[...],
                             preferred_element_type=F32) + hbb_ref[...]


# ------------------------------- forward glue --------------------------------

def forward(params, x):
    bsz, l_raw, c = x.shape
    lp = (l_raw - WINDOW) // WINDOW + 1
    seq_real = lp + 1
    lpad = _round_up(seq_real, SUB)

    # Unfold((w,1), stride=w) + 'b (c w) l -> b l (w c)'  ==  reshape on (B,L,C)
    feats = x[:, :lp * WINDOW, :].reshape(bsz, lp, WINDOW * c)
    feats = jnp.pad(feats, ((0, 0), (0, lpad - lp), (0, LANE - WINDOW * c)))

    kern = functools.partial(
        _fused_forward_kernel, depth=DEPTH, lp=lp, seq_real=seq_real,
        dmodel=DIM, d_inner=D_INNER, nheads=NHEADS, k_conv=D_CONV)

    w3 = lambda b: (0, 0, 0)
    w2 = lambda b: (0, 0)
    seq_pad, logit_pad = pl.pallas_call(
        kern,
        out_shape=(jax.ShapeDtypeStruct((bsz, lpad, LANE), F32),
                   jax.ShapeDtypeStruct((bsz, 1, LANE), F32)),
        grid=(bsz,),
        in_specs=[
            pl.BlockSpec((None, lpad, LANE), lambda b: (b, 0, 0)),    # feats
            pl.BlockSpec((LANE, LANE), w2),                           # proj W1
            pl.BlockSpec((1, LANE), w2),                              # proj b1
            pl.BlockSpec((LANE, LANE), w2),                           # proj W2
            pl.BlockSpec((1, LANE), w2),                              # proj b2
            pl.BlockSpec((1, LANE), w2),                              # cls token
            pl.BlockSpec((DEPTH, LANE, N_IN_SEG * LANE), w3),         # in_proj W
            pl.BlockSpec((DEPTH, D_CONV, CONV_SEG * LANE), w3),       # conv W
            pl.BlockSpec((DEPTH, 1, CONV_SEG * LANE), w3),            # conv b
            pl.BlockSpec((DEPTH, 1, LANE), w3),                       # dt_bias
            pl.BlockSpec((DEPTH, 1, LANE), w3),                       # A
            pl.BlockSpec((DEPTH, 1, LANE), w3),                       # D (lane-expanded)
            pl.BlockSpec((DEPTH, 1, LANE), w3),                       # rmsnorm w
            pl.BlockSpec((DEPTH, LANE, LANE), w3),                    # out_proj W
            pl.BlockSpec((DEPTH, 1, LANE), w3),                       # ln gamma
            pl.BlockSpec((DEPTH, 1, LANE), w3),                       # ln beta
            pl.BlockSpec((LANE, LANE), w2),                           # head->lane expand
            pl.BlockSpec((1, LANE), w2),                              # head ln gamma
            pl.BlockSpec((1, LANE), w2),                              # head ln beta
            pl.BlockSpec((LANE, LANE), w2),                           # head W
            pl.BlockSpec((1, LANE), w2),                              # head b
        ],
        out_specs=(pl.BlockSpec((None, lpad, LANE), lambda b: (b, 0, 0)),
                   pl.BlockSpec((None, 1, LANE), lambda b: (b, 0, 0))),
        compiler_params=pltpu.CompilerParams(
            dimension_semantics=("parallel",)),             # 2 TCs on v7x
    )(feats, params["proj_w1"], params["proj_b1"], params["proj_w2"],
      params["proj_b2"], params["cls_token"], params["w_in"],
      params["conv_w"], params["conv_b"], params["dt_bias"], params["A"],
      params["D_full"], params["rms_w"], params["w_out"], params["ln_g"],
      params["ln_b"], params["expand"], params["head_ln_g"],
      params["head_ln_b"], params["head_w"], params["head_b"])

    # nn.Dropout(0.2): eval-mode identity
    logits = logit_pad[:, 0, 0]
    seq_out = seq_pad[:, :seq_real, :DIM]
    return logits, seq_out


# -------------------------------- param init ---------------------------------

def _xavier_normal(key, fan_in, fan_out):
    std = math.sqrt(2.0 / (fan_in + fan_out))
    return std * jax.random.normal(key, (fan_in, fan_out), F32)


def _pad2(a, rows, cols):
    return jnp.pad(a, ((0, rows - a.shape[0]), (0, cols - a.shape[1])))


def init_params(key):
    d_in_proj = 2 * D_INNER + 2 * D_STATE + NHEADS                  # 164
    keys = list(jax.random.split(key, 4 + DEPTH))

    # constant head->lane expansion: expand[h, h*headdim + p] = 1 (h < nheads)
    hrow = jnp.arange(LANE)[:, None]
    lane = jnp.arange(LANE)[None, :]
    expand = ((hrow == lane // HEADDIM) & (hrow < NHEADS)
              & (lane < D_INNER)).astype(F32)

    params = {
        "proj_w1": _pad2(_xavier_normal(keys[0], IN_CH * WINDOW, MLP_HID),
                         LANE, LANE).astype(BF16),
        "proj_b1": jnp.zeros((1, LANE), F32),
        "proj_w2": _pad2(_xavier_normal(keys[1], MLP_HID, DIM),
                         LANE, LANE).astype(BF16),
        "proj_b2": jnp.zeros((1, LANE), F32),
        "cls_token": _pad2(jax.random.normal(keys[2], (1, DIM), F32), 1, LANE),
        "head_ln_g": _pad2(jnp.ones((1, DIM), F32), 1, LANE),
        "head_ln_b": jnp.zeros((1, LANE), F32),
        "head_w": _pad2(_xavier_normal(keys[3], DIM, NUM_CLASSES),
                        LANE, LANE).astype(BF16),
        "head_b": jnp.zeros((1, LANE), F32),
        "expand": expand,
    }

    a_vals = jnp.linspace(1.0, 16.0, NHEADS).astype(F32)            # A_init_range
    dt_init = jnp.exp(jnp.linspace(math.log(1e-3), math.log(1e-1),
                                   NHEADS)).astype(F32)
    dt_bias = jnp.log(jnp.expm1(dt_init))                           # softplus^-1
    d_full = jnp.zeros((1, LANE), F32).at[0, :D_INNER].set(1.0)     # D=1/head

    per_layer = []
    for li in range(DEPTH):
        k_in, k_conv, k_out = jax.random.split(keys[4 + li], 3)
        w_in = _xavier_normal(k_in, DIM, d_in_proj)                 # (32, 164)
        wz = w_in[:, :D_INNER]
        wx = w_in[:, D_INNER:2 * D_INNER]
        wb = w_in[:, 2 * D_INNER:2 * D_INNER + D_STATE]
        wc = w_in[:, 2 * D_INNER + D_STATE:2 * D_INNER + 2 * D_STATE]
        wdt = w_in[:, 2 * D_INNER + 2 * D_STATE:]
        # segment 0 packs [z | dt] so the in_proj output is 4x128 lanes wide
        seg0 = jnp.zeros((DIM, LANE), F32)
        seg0 = seg0.at[:, :D_INNER].set(wz)
        seg0 = seg0.at[:, D_INNER:D_INNER + NHEADS].set(wdt)
        w_in_pad = jnp.concatenate(
            [seg0, _pad2(wx, DIM, LANE), _pad2(wb, DIM, LANE),
             _pad2(wc, DIM, LANE)], axis=1)
        w_in_pad = jnp.pad(w_in_pad, ((0, LANE - DIM), (0, 0)))

        conv_dim = D_INNER + 2 * D_STATE                            # 96
        bound = 1.0 / math.sqrt(D_CONV)
        cw = jax.random.uniform(k_conv, (D_CONV, conv_dim), F32, -bound, bound)
        cb = jax.random.uniform(jax.random.fold_in(k_conv, 1), (1, conv_dim),
                                F32, -bound, bound)
        conv_w = jnp.concatenate(
            [_pad2(cw[:, :D_INNER], D_CONV, LANE),
             _pad2(cw[:, D_INNER:D_INNER + D_STATE], D_CONV, LANE),
             _pad2(cw[:, D_INNER + D_STATE:], D_CONV, LANE)], axis=1)
        conv_b = jnp.concatenate(
            [_pad2(cb[:, :D_INNER], 1, LANE),
             _pad2(cb[:, D_INNER:D_INNER + D_STATE], 1, LANE),
             _pad2(cb[:, D_INNER + D_STATE:], 1, LANE)], axis=1)

        per_layer.append({
            "w_in": w_in_pad.astype(BF16),
            "conv_w": conv_w,
            "conv_b": conv_b,
            "dt_bias": _pad2(dt_bias.reshape(1, NHEADS), 1, LANE),
            "A": _pad2((-a_vals).reshape(1, NHEADS), 1, LANE),      # A = -exp(A_log)
            "D_full": d_full,
            "rms_w": _pad2(jnp.ones((1, D_INNER), F32), 1, LANE),
            "w_out": _pad2(_xavier_normal(k_out, D_INNER, DIM),
                           LANE, LANE).astype(BF16),
            "ln_g": _pad2(jnp.ones((1, DIM), F32), 1, LANE),
            "ln_b": jnp.zeros((1, LANE), F32),
        })

    for name in per_layer[0]:
        params[name] = jnp.stack([lyr[name] for lyr in per_layer], axis=0)
    return params


# ----------------------------------- main ------------------------------------

if __name__ == "__main__":
    key = jax.random.PRNGKey(0)
    kx, kp = jax.random.split(key)
    x = jax.random.normal(kx, (2, 40, IN_CH), F32)                  # (B, L, C)
    params = init_params(kp)

    fwd = jax.jit(forward)
    logits, seq_out = fwd(params, x)
    jax.block_until_ready((logits, seq_out))

    assert logits.shape == (2,), logits.shape
    assert seq_out.shape == (2, 40 // WINDOW + 1, DIM), seq_out.shape
    assert bool(jnp.all(jnp.isfinite(logits))), "non-finite logits"
    assert bool(jnp.all(jnp.isfinite(seq_out))), "non-finite sequence output"
    print("KERNEL_OK")
</pallas_src>

<mosaic_0001>
module attributes {stable_mosaic.version = 11 : i64} {
  func.func @_fused_forward_kernel(%arg0: i32, %arg1: memref<1x16x128xf32, #tpu.memory_space<vmem>>, %arg2: memref<128x128xbf16, #tpu.memory_space<vmem>>, %arg3: memref<1x128xf32, #tpu.memory_space<vmem>>, %arg4: memref<128x128xbf16, #tpu.memory_space<vmem>>, %arg5: memref<1x128xf32, #tpu.memory_space<vmem>>, %arg6: memref<1x128xf32, #tpu.memory_space<vmem>>, %arg7: memref<2x128x512xbf16, #tpu.memory_space<vmem>>, %arg8: memref<2x4x384xf32, #tpu.memory_space<vmem>>, %arg9: memref<2x1x384xf32, #tpu.memory_space<vmem>>, %arg10: memref<2x1x128xf32, #tpu.memory_space<vmem>>, %arg11: memref<2x1x128xf32, #tpu.memory_space<vmem>>, %arg12: memref<2x1x128xf32, #tpu.memory_space<vmem>>, %arg13: memref<2x1x128xf32, #tpu.memory_space<vmem>>, %arg14: memref<2x128x128xbf16, #tpu.memory_space<vmem>>, %arg15: memref<2x1x128xf32, #tpu.memory_space<vmem>>, %arg16: memref<2x1x128xf32, #tpu.memory_space<vmem>>, %arg17: memref<128x128xf32, #tpu.memory_space<vmem>>, %arg18: memref<1x128xf32, #tpu.memory_space<vmem>>, %arg19: memref<1x128xf32, #tpu.memory_space<vmem>>, %arg20: memref<128x128xbf16, #tpu.memory_space<vmem>>, %arg21: memref<1x128xf32, #tpu.memory_space<vmem>>, %arg22: memref<1x16x128xf32, #tpu.memory_space<vmem>>, %arg23: memref<1x1x128xf32, #tpu.memory_space<vmem>>) attributes {dimension_semantics = [#tpu.dimension_semantics<parallel>], iteration_bounds = array<i64: 2>, scalar_prefetch = 0 : i64, scratch_operands = 0 : i64, tpu.core_type = #tpu.core_type<tc>, window_params = [{transform_indices = @transform_0, window_bounds = array<i64: 1, 16, 128>}, {pipeline_mode = #tpu.pipeline_mode<synchronous>, transform_indices = @transform_1, window_bounds = array<i64: 128, 128>}, {pipeline_mode = #tpu.pipeline_mode<synchronous>, transform_indices = @transform_2, window_bounds = array<i64: 1, 128>}, {pipeline_mode = #tpu.pipeline_mode<synchronous>, transform_indices = @transform_3, window_bounds = array<i64: 128, 128>}, {pipeline_mode = #tpu.pipeline_mode<synchronous>, transform_indices = @transform_4, window_bounds = array<i64: 1, 128>}, {pipeline_mode = #tpu.pipeline_mode<synchronous>, transform_indices = @transform_5, window_bounds = array<i64: 1, 128>}, {pipeline_mode = #tpu.pipeline_mode<synchronous>, transform_indices = @transform_6, window_bounds = array<i64: 2, 128, 512>}, {pipeline_mode = #tpu.pipeline_mode<synchronous>, transform_indices = @transform_7, window_bounds = array<i64: 2, 4, 384>}, {pipeline_mode = #tpu.pipeline_mode<synchronous>, transform_indices = @transform_8, window_bounds = array<i64: 2, 1, 384>}, {pipeline_mode = #tpu.pipeline_mode<synchronous>, transform_indices = @transform_9, window_bounds = array<i64: 2, 1, 128>}, {pipeline_mode = #tpu.pipeline_mode<synchronous>, transform_indices = @transform_10, window_bounds = array<i64: 2, 1, 128>}, {pipeline_mode = #tpu.pipeline_mode<synchronous>, transform_indices = @transform_11, window_bounds = array<i64: 2, 1, 128>}, {pipeline_mode = #tpu.pipeline_mode<synchronous>, transform_indices = @transform_12, window_bounds = array<i64: 2, 1, 128>}, {pipeline_mode = #tpu.pipeline_mode<synchronous>, transform_indices = @transform_13, window_bounds = array<i64: 2, 128, 128>}, {pipeline_mode = #tpu.pipeline_mode<synchronous>, transform_indices = @transform_14, window_bounds = array<i64: 2, 1, 128>}, {pipeline_mode = #tpu.pipeline_mode<synchronous>, transform_indices = @transform_15, window_bounds = array<i64: 2, 1, 128>}, {pipeline_mode = #tpu.pipeline_mode<synchronous>, transform_indices = @transform_16, window_bounds = array<i64: 128, 128>}, {pipeline_mode = #tpu.pipeline_mode<synchronous>, transform_indices = @transform_17, window_bounds = array<i64: 1, 128>}, {pipeline_mode = #tpu.pipeline_mode<synchronous>, transform_indices = @transform_18, window_bounds = array<i64: 1, 128>}, {pipeline_mode = #tpu.pipeline_mode<synchronous>, transform_indices = @transform_19, window_bounds = array<i64: 128, 128>}, {pipeline_mode = #tpu.pipeline_mode<synchronous>, transform_indices = @transform_20, window_bounds = array<i64: 1, 128>}, {transform_indices = @transform_21, window_bounds = array<i64: 1, 16, 128>}, {transform_indices = @transform_22, window_bounds = array<i64: 1, 1, 128>}]} {
    %0 = tpu.iota {dimensions = array<i32: 0>} : vector<16x128xi32>
    %1 = tpu.iota {dimensions = array<i32: 1>} : vector<16x128xi32>
    %2 = tpu.iota {dimensions = array<i32: 0>} : vector<16x384xi32>
    %3 = tpu.iota {dimensions = array<i32: 0>} : vector<16x16xi32>
    %4 = tpu.iota {dimensions = array<i32: 1>} : vector<16x16xi32>
    %5 = arith.cmpi sge, %3, %4 : vector<16x16xi32>
    %6 = arith.extui %5 : vector<16x16xi1> to vector<16x16xi32>
    %7 = arith.sitofp %6 : vector<16x16xi32> to vector<16x16xf32>
    %c32_i32 = arith.constant 32 : i32
    %8 = vector.broadcast %c32_i32 : i32 to vector<16x128xi32>
    %9 = arith.cmpi slt, %1, %8 : vector<16x128xi32>
    %10 = arith.extui %9 : vector<16x128xi1> to vector<16x128xi32>
    %11 = arith.sitofp %10 : vector<16x128xi32> to vector<16x128xf32>
    %c4_i32 = arith.constant 4 : i32
    %12 = vector.broadcast %c4_i32 : i32 to vector<16x128xi32>
    %13 = arith.cmpi slt, %1, %12 : vector<16x128xi32>
    %14 = arith.extui %13 : vector<16x128xi1> to vector<16x128xi32>
    %15 = arith.sitofp %14 : vector<16x128xi32> to vector<16x128xf32>
    %c9_i32 = arith.constant 9 : i32
    %16 = vector.broadcast %c9_i32 : i32 to vector<16x128xi32>
    %17 = arith.cmpi slt, %0, %16 : vector<16x128xi32>
    %18 = arith.extui %17 : vector<16x128xi1> to vector<16x128xi32>
    %19 = arith.sitofp %18 : vector<16x128xi32> to vector<16x128xf32>
    %c8_i32 = arith.constant 8 : i32
    %20 = vector.broadcast %c8_i32 : i32 to vector<16x128xi32>
    %21 = arith.cmpi slt, %0, %20 : vector<16x128xi32>
    %22 = arith.extui %21 : vector<16x128xi1> to vector<16x128xi32>
    %23 = arith.sitofp %22 : vector<16x128xi32> to vector<16x128xf32>
    %c8_i32_0 = arith.constant 8 : i32
    %24 = vector.broadcast %c8_i32_0 : i32 to vector<16x128xi32>
    %25 = arith.cmpi eq, %0, %24 : vector<16x128xi32>
    %26 = arith.extui %25 : vector<16x128xi1> to vector<16x128xi32>
    %27 = arith.sitofp %26 : vector<16x128xi32> to vector<16x128xf32>
    %c0 = arith.constant 0 : index
    %c0_1 = arith.constant 0 : index
    %28 = vector.load %arg17[%c0, %c0_1] : memref<128x128xf32, #tpu.memory_space<vmem>>, vector<128x128xf32>
    %c0_2 = arith.constant 0 : index
    %c0_3 = arith.constant 0 : index
    %c0_4 = arith.constant 0 : index
    %29 = vector.load %arg1[%c0_2, %c0_3, %c0_4] : memref<1x16x128xf32, #tpu.memory_space<vmem>>, vector<1x16x128xf32>
    %30 = vector.shape_cast %29 : vector<1x16x128xf32> to vector<16x128xf32>
    %31 = arith.truncf %30 : vector<16x128xf32> to vector<16x128xbf16>
    %c0_5 = arith.constant 0 : index
    %c0_6 = arith.constant 0 : index
    %32 = vector.load %arg2[%c0_5, %c0_6] : memref<128x128xbf16, #tpu.memory_space<vmem>>, vector<128x128xbf16>
    %cst = arith.constant dense<0.000000e+00> : vector<16x128xf32>
    %33 = tpu.matmul %31, %32, %cst {dimension_numbers = #tpu.dot_dimension_numbers<[1], [0], [0], [1], [0, 0, 1, 1], [], []>} : vector<16x128xbf16>, vector<128x128xbf16>, vector<16x128xf32> -> vector<16x128xf32>
    %c0_7 = arith.constant 0 : index
    %c0_8 = arith.constant 0 : index
    %34 = vector.load %arg3[%c0_7, %c0_8] : memref<1x128xf32, #tpu.memory_space<vmem>>, vector<1x128xf32>
    %35 = vector.broadcast %34 : vector<1x128xf32> to vector<16x128xf32>
    %36 = arith.addf %33, %35 : vector<16x128xf32>
    %cst_9 = arith.constant 5.000000e-01 : f32
    %37 = vector.broadcast %cst_9 : f32 to vector<16x128xf32>
    %38 = arith.mulf %37, %36 : vector<16x128xf32>
    %cst_10 = arith.constant 0.707106769 : f32
    %39 = vector.broadcast %cst_10 : f32 to vector<16x128xf32>
    %40 = arith.mulf %36, %39 : vector<16x128xf32>
    %cst_11 = arith.constant 0.000000e+00 : f32
    %41 = vector.broadcast %cst_11 : f32 to vector<16x128xf32>
    %42 = arith.cmpf oge, %40, %41 : vector<16x128xf32>
    %cst_12 = arith.constant 1.000000e+00 : f32
    %cst_13 = arith.constant -1.000000e+00 : f32
    %43 = vector.broadcast %cst_12 : f32 to vector<16x128xf32>
    %44 = vector.broadcast %cst_13 : f32 to vector<16x128xf32>
    %45 = arith.select %42, %43, %44 : vector<16x128xi1>, vector<16x128xf32>
    %46 = math.absf %40 : vector<16x128xf32>
    %cst_14 = arith.constant 0.327591091 : f32
    %47 = vector.broadcast %cst_14 : f32 to vector<16x128xf32>
    %48 = arith.mulf %47, %46 : vector<16x128xf32>
    %cst_15 = arith.constant 1.000000e+00 : f32
    %49 = vector.broadcast %cst_15 : f32 to vector<16x128xf32>
    %50 = arith.addf %49, %48 : vector<16x128xf32>
    %cst_16 = arith.constant 1.000000e+00 : f32
    %51 = vector.broadcast %cst_16 : f32 to vector<16x128xf32>
    %52 = arith.divf %51, %50 : vector<16x128xf32>
    %cst_17 = arith.constant 1.06140542 : f32
    %53 = vector.broadcast %cst_17 : f32 to vector<16x128xf32>
    %54 = arith.mulf %53, %52 : vector<16x128xf32>
    %cst_18 = arith.constant -1.45315206 : f32
    %55 = vector.broadcast %cst_18 : f32 to vector<16x128xf32>
    %56 = arith.addf %54, %55 : vector<16x128xf32>
    %57 = arith.mulf %56, %52 : vector<16x128xf32>
    %cst_19 = arith.constant 1.42141378 : f32
    %58 = vector.broadcast %cst_19 : f32 to vector<16x128xf32>
    %59 = arith.addf %57, %58 : vector<16x128xf32>
    %60 = arith.mulf %59, %52 : vector<16x128xf32>
    %cst_20 = arith.constant -0.284496725 : f32
    %61 = vector.broadcast %cst_20 : f32 to vector<16x128xf32>
    %62 = arith.addf %60, %61 : vector<16x128xf32>
    %63 = arith.mulf %62, %52 : vector<16x128xf32>
    %cst_21 = arith.constant 0.254829586 : f32
    %64 = vector.broadcast %cst_21 : f32 to vector<16x128xf32>
    %65 = arith.addf %63, %64 : vector<16x128xf32>
    %66 = arith.mulf %65, %52 : vector<16x128xf32>
    %cst_22 = arith.constant 0.000000e+00 : f32
    %67 = vector.broadcast %cst_22 : f32 to vector<16x128xf32>
    %68 = arith.subf %67, %46 : vector<16x128xf32>
    %69 = arith.mulf %68, %46 : vector<16x128xf32>
    %70 = math.exp %69 : vector<16x128xf32>
    %71 = arith.mulf %66, %70 : vector<16x128xf32>
    %cst_23 = arith.constant 1.000000e+00 : f32
    %72 = vector.broadcast %cst_23 : f32 to vector<16x128xf32>
    %73 = arith.subf %72, %71 : vector<16x128xf32>
    %74 = arith.mulf %45, %73 : vector<16x128xf32>
    %cst_24 = arith.constant 1.000000e+00 : f32
    %75 = vector.broadcast %cst_24 : f32 to vector<16x128xf32>
    %76 = arith.addf %75, %74 : vector<16x128xf32>
    %77 = arith.mulf %38, %76 : vector<16x128xf32>
    %78 = arith.truncf %77 : vector<16x128xf32> to vector<16x128xbf16>
    %c0_25 = arith.constant 0 : index
    %c0_26 = arith.constant 0 : index
    %79 = vector.load %arg4[%c0_25, %c0_26] : memref<128x128xbf16, #tpu.memory_space<vmem>>, vector<128x128xbf16>
    %cst_27 = arith.constant dense<0.000000e+00> : vector<16x128xf32>
    %80 = tpu.matmul %78, %79, %cst_27 {dimension_numbers = #tpu.dot_dimension_numbers<[1], [0], [0], [1], [0, 0, 1, 1], [], []>} : vector<16x128xbf16>, vector<128x128xbf16>, vector<16x128xf32> -> vector<16x128xf32>
    %c0_28 = arith.constant 0 : index
    %c0_29 = arith.constant 0 : index
    %81 = vector.load %arg5[%c0_28, %c0_29] : memref<1x128xf32, #tpu.memory_space<vmem>>, vector<1x128xf32>
    %82 = vector.broadcast %81 : vector<1x128xf32> to vector<16x128xf32>
    %83 = arith.addf %80, %82 : vector<16x128xf32>
    %84 = arith.mulf %83, %23 : vector<16x128xf32>
    %c0_30 = arith.constant 0 : index
    %c0_31 = arith.constant 0 : index
    %85 = vector.load %arg6[%c0_30, %c0_31] : memref<1x128xf32, #tpu.memory_space<vmem>>, vector<1x128xf32>
    %86 = vector.broadcast %85 : vector<1x128xf32> to vector<16x128xf32>
    %87 = arith.mulf %86, %27 : vector<16x128xf32>
    %88 = arith.addf %84, %87 : vector<16x128xf32>
    %89 = arith.truncf %88 : vector<16x128xf32> to vector<16x128xbf16>
    %c0_32 = arith.constant 0 : index
    %c0_33 = arith.constant 0 : index
    %c0_34 = arith.constant 0 : index
    %90 = vector.load %arg7[%c0_32, %c0_33, %c0_34] : memref<2x128x512xbf16, #tpu.memory_space<vmem>>, vector<1x128x512xbf16>
    %91 = vector.shape_cast %90 : vector<1x128x512xbf16> to vector<128x512xbf16>
    %cst_35 = arith.constant dense<0.000000e+00> : vector<16x512xf32>
    %92 = tpu.matmul %89, %91, %cst_35 {dimension_numbers = #tpu.dot_dimension_numbers<[1], [0], [0], [1], [0, 0, 1, 1], [], []>} : vector<16x128xbf16>, vector<128x512xbf16>, vector<16x512xf32> -> vector<16x512xf32>
    %93 = vector.extract_strided_slice %92 {offsets = [0, 0], sizes = [16, 128], strides = [1, 1]} : vector<16x512xf32> to vector<16x128xf32>
    %94 = vector.extract_strided_slice %92 {offsets = [0, 128], sizes = [16, 384], strides = [1, 1]} : vector<16x512xf32> to vector<16x384xf32>
    %c0_36 = arith.constant 0 : index
    %c0_37 = arith.constant 0 : index
    %c0_38 = arith.constant 0 : index
    %95 = vector.load %arg8[%c0_36, %c0_37, %c0_38] : memref<2x4x384xf32, #tpu.memory_space<vmem>>, vector<1x4x384xf32>
    %96 = vector.shape_cast %95 : vector<1x4x384xf32> to vector<4x384xf32>
    %97 = vector.extract_strided_slice %96 {offsets = [3, 0], sizes = [1, 384], strides = [1, 1]} : vector<4x384xf32> to vector<1x384xf32>
    %98 = vector.broadcast %97 : vector<1x384xf32> to vector<16x384xf32>
    %99 = arith.mulf %94, %98 : vector<16x384xf32>
    %c3_i32 = arith.constant 3 : i32
    %100 = tpu.dynamic_rotate %94 by %c3_i32 dim 0 : vector<16x384xf32>, i32 -> vector<16x384xf32>
    %c3_i32_39 = arith.constant 3 : i32
    %101 = vector.broadcast %c3_i32_39 : i32 to vector<16x384xi32>
    %102 = arith.cmpi sge, %2, %101 : vector<16x384xi32>
    %cst_40 = arith.constant 0.000000e+00 : f32
    %103 = vector.broadcast %cst_40 : f32 to vector<16x384xf32>
    %104 = arith.select %102, %100, %103 : vector<16x384xi1>, vector<16x384xf32>
    %105 = vector.extract_strided_slice %96 {offsets = [0, 0], sizes = [1, 384], strides = [1, 1]} : vector<4x384xf32> to vector<1x384xf32>
    %106 = vector.broadcast %105 : vector<1x384xf32> to vector<16x384xf32>
    %107 = arith.mulf %104, %106 : vector<16x384xf32>
    %108 = arith.addf %99, %107 : vector<16x384xf32>
    %c2_i32 = arith.constant 2 : i32
    %109 = tpu.dynamic_rotate %94 by %c2_i32 dim 0 : vector<16x384xf32>, i32 -> vector<16x384xf32>
    %c2_i32_41 = arith.constant 2 : i32
    %110 = vector.broadcast %c2_i32_41 : i32 to vector<16x384xi32>
    %111 = arith.cmpi sge, %2, %110 : vector<16x384xi32>
    %cst_42 = arith.constant 0.000000e+00 : f32
    %112 = vector.broadcast %cst_42 : f32 to vector<16x384xf32>
    %113 = arith.select %111, %109, %112 : vector<16x384xi1>, vector<16x384xf32>
    %114 = vector.extract_strided_slice %96 {offsets = [1, 0], sizes = [1, 384], strides = [1, 1]} : vector<4x384xf32> to vector<1x384xf32>
    %115 = vector.broadcast %114 : vector<1x384xf32> to vector<16x384xf32>
    %116 = arith.mulf %113, %115 : vector<16x384xf32>
    %117 = arith.addf %108, %116 : vector<16x384xf32>
    %c1_i32 = arith.constant 1 : i32
    %118 = tpu.dynamic_rotate %94 by %c1_i32 dim 0 : vector<16x384xf32>, i32 -> vector<16x384xf32>
    %c1_i32_43 = arith.constant 1 : i32
    %119 = vector.broadcast %c1_i32_43 : i32 to vector<16x384xi32>
    %120 = arith.cmpi sge, %2, %119 : vector<16x384xi32>
    %cst_44 = arith.constant 0.000000e+00 : f32
    %121 = vector.broadcast %cst_44 : f32 to vector<16x384xf32>
    %122 = arith.select %120, %118, %121 : vector<16x384xi1>, vector<16x384xf32>
    %123 = vector.extract_strided_slice %96 {offsets = [2, 0], sizes = [1, 384], strides = [1, 1]} : vector<4x384xf32> to vector<1x384xf32>
    %124 = vector.broadcast %123 : vector<1x384xf32> to vector<16x384xf32>
    %125 = arith.mulf %122, %124 : vector<16x384xf32>
    %126 = arith.addf %117, %125 : vector<16x384xf32>
    %c0_45 = arith.constant 0 : index
    %c0_46 = arith.constant 0 : index
    %c0_47 = arith.constant 0 : index
    %127 = vector.load %arg9[%c0_45, %c0_46, %c0_47] : memref<2x1x384xf32, #tpu.memory_space<vmem>>, vector<1x1x384xf32>
    %128 = vector.shape_cast %127 : vector<1x1x384xf32> to vector<1x384xf32>
    %129 = vector.broadcast %128 : vector<1x384xf32> to vector<16x384xf32>
    %130 = arith.addf %126, %129 : vector<16x384xf32>
    %cst_48 = arith.constant 0.000000e+00 : f32
    %131 = vector.broadcast %cst_48 : f32 to vector<16x384xf32>
    %132 = arith.subf %131, %130 : vector<16x384xf32>
    %133 = math.exp %132 : vector<16x384xf32>
    %cst_49 = arith.constant 1.000000e+00 : f32
    %134 = vector.broadcast %cst_49 : f32 to vector<16x384xf32>
    %135 = arith.addf %134, %133 : vector<16x384xf32>
    %cst_50 = arith.constant 1.000000e+00 : f32
    %136 = vector.broadcast %cst_50 : f32 to vector<16x384xf32>
    %137 = arith.divf %136, %135 : vector<16x384xf32>
    %138 = arith.mulf %130, %137 : vector<16x384xf32>
    %139 = vector.extract_strided_slice %138 {offsets = [0, 0], sizes = [16, 128], strides = [1, 1]} : vector<16x384xf32> to vector<16x128xf32>
    %140 = vector.extract_strided_slice %138 {offsets = [0, 128], sizes = [16, 128], strides = [1, 1]} : vector<16x384xf32> to vector<16x128xf32>
    %141 = vector.extract_strided_slice %138 {offsets = [0, 256], sizes = [16, 128], strides = [1, 1]} : vector<16x384xf32> to vector<16x128xf32>
    %c64_i32 = arith.constant 64 : i32
    %142 = tpu.dynamic_rotate %93 by %c64_i32 dim 1 : vector<16x128xf32>, i32 -> vector<16x128xf32>
    %c0_51 = arith.constant 0 : index
    %c0_52 = arith.constant 0 : index
    %c0_53 = arith.constant 0 : index
    %143 = vector.load %arg10[%c0_51, %c0_52, %c0_53] : memref<2x1x128xf32, #tpu.memory_space<vmem>>, vector<1x1x128xf32>
    %144 = vector.shape_cast %143 : vector<1x1x128xf32> to vector<1x128xf32>
    %145 = vector.broadcast %144 : vector<1x128xf32> to vector<16x128xf32>
    %146 = arith.addf %142, %145 : vector<16x128xf32>
    %cst_54 = arith.constant 0.000000e+00 : f32
    %147 = vector.broadcast %cst_54 : f32 to vector<16x128xf32>
    %148 = arith.maximumf %146, %147 : vector<16x128xf32>
    %149 = math.absf %146 : vector<16x128xf32>
    %cst_55 = arith.constant 0.000000e+00 : f32
    %150 = vector.broadcast %cst_55 : f32 to vector<16x128xf32>
    %151 = arith.subf %150, %149 : vector<16x128xf32>
    %152 = math.exp %151 : vector<16x128xf32>
    %cst_56 = arith.constant 1.000000e+00 : f32
    %153 = vector.broadcast %cst_56 : f32 to vector<16x128xf32>
    %154 = arith.addf %153, %152 : vector<16x128xf32>
    %155 = math.log %154 : vector<16x128xf32>
    %156 = arith.addf %148, %155 : vector<16x128xf32>
    %157 = arith.mulf %156, %15 : vector<16x128xf32>
    %c1_i32_57 = arith.constant 1 : i32
    %158 = vector.broadcast %c1_i32_57 : i32 to vector<16x128xi32>
    %159 = arith.cmpi sge, %0, %158 : vector<16x128xi32>
    %c1_i32_58 = arith.constant 1 : i32
    %160 = tpu.dynamic_rotate %157 by %c1_i32_58 dim 0 : vector<16x128xf32>, i32 -> vector<16x128xf32>
    %cst_59 = arith.constant 0.000000e+00 : f32
    %161 = vector.broadcast %cst_59 : f32 to vector<16x128xf32>
    %162 = arith.select %159, %160, %161 : vector<16x128xi1>, vector<16x128xf32>
    %163 = arith.addf %157, %162 : vector<16x128xf32>
    %c2_i32_60 = arith.constant 2 : i32
    %164 = vector.broadcast %c2_i32_60 : i32 to vector<16x128xi32>
    %165 = arith.cmpi sge, %0, %164 : vector<16x128xi32>
    %c2_i32_61 = arith.constant 2 : i32
    %166 = tpu.dynamic_rotate %163 by %c2_i32_61 dim 0 : vector<16x128xf32>, i32 -> vector<16x128xf32>
    %cst_62 = arith.constant 0.000000e+00 : f32
    %167 = vector.broadcast %cst_62 : f32 to vector<16x128xf32>
    %168 = arith.select %165, %166, %167 : vector<16x128xi1>, vector<16x128xf32>
    %169 = arith.addf %163, %168 : vector<16x128xf32>
    %c4_i32_63 = arith.constant 4 : i32
    %170 = vector.broadcast %c4_i32_63 : i32 to vector<16x128xi32>
    %171 = arith.cmpi sge, %0, %170 : vector<16x128xi32>
    %c4_i32_64 = arith.constant 4 : i32
    %172 = tpu.dynamic_rotate %169 by %c4_i32_64 dim 0 : vector<16x128xf32>, i32 -> vector<16x128xf32>
    %cst_65 = arith.constant 0.000000e+00 : f32
    %173 = vector.broadcast %cst_65 : f32 to vector<16x128xf32>
    %174 = arith.select %171, %172, %173 : vector<16x128xi1>, vector<16x128xf32>
    %175 = arith.addf %169, %174 : vector<16x128xf32>
    %c8_i32_66 = arith.constant 8 : i32
    %176 = vector.broadcast %c8_i32_66 : i32 to vector<16x128xi32>
    %177 = arith.cmpi sge, %0, %176 : vector<16x128xi32>
    %c8_i32_67 = arith.constant 8 : i32
    %178 = tpu.dynamic_rotate %175 by %c8_i32_67 dim 0 : vector<16x128xf32>, i32 -> vector<16x128xf32>
    %cst_68 = arith.constant 0.000000e+00 : f32
    %179 = vector.broadcast %cst_68 : f32 to vector<16x128xf32>
    %180 = arith.select %177, %178, %179 : vector<16x128xi1>, vector<16x128xf32>
    %181 = arith.addf %175, %180 : vector<16x128xf32>
    %c0_69 = arith.constant 0 : index
    %c0_70 = arith.constant 0 : index
    %c0_71 = arith.constant 0 : index
    %182 = vector.load %arg11[%c0_69, %c0_70, %c0_71] : memref<2x1x128xf32, #tpu.memory_space<vmem>>, vector<1x1x128xf32>
    %183 = vector.shape_cast %182 : vector<1x1x128xf32> to vector<1x128xf32>
    %cst_72 = arith.constant 0.000000e+00 : f32
    %184 = vector.broadcast %cst_72 : f32 to vector<1x128xf32>
    %185 = arith.subf %184, %183 : vector<1x128xf32>
    %186 = vector.broadcast %185 : vector<1x128xf32> to vector<16x128xf32>
    %187 = arith.mulf %186, %181 : vector<16x128xf32>
    %188 = math.exp %187 : vector<16x128xf32>
    %189 = arith.mulf %157, %188 : vector<16x128xf32>
    %190 = vector.broadcast %183 : vector<1x128xf32> to vector<16x128xf32>
    %191 = arith.mulf %190, %181 : vector<16x128xf32>
    %192 = math.exp %191 : vector<16x128xf32>
    %193 = tpu.concatenate %189, %192 in 0 : vector<16x128xf32>, vector<16x128xf32> -> vector<32x128xf32>
    %cst_73 = arith.constant dense<0.000000e+00> : vector<32x128xf32>
    %194 = tpu.matmul %193, %28, %cst_73 {dimension_numbers = #tpu.dot_dimension_numbers<[1], [0], [0], [1], [0, 0, 1, 1], [], []>} : vector<32x128xf32>, vector<128x128xf32>, vector<32x128xf32> -> vector<32x128xf32>
    %195 = vector.extract_strided_slice %194 {offsets = [0, 0], sizes = [16, 128], strides = [1, 1]} : vector<32x128xf32> to vector<16x128xf32>
    %196 = vector.extract_strided_slice %194 {offsets = [16, 0], sizes = [16, 128], strides = [1, 1]} : vector<32x128xf32> to vector<16x128xf32>
    %cst_74 = arith.constant dense<0.000000e+00> : vector<16x16xf32>
    %197 = tpu.matmul %141, %140, %cst_74 {dimension_numbers = #tpu.dot_dimension_numbers<[1], [1], [0], [0], [0, 0, 1, 0], [], []>} : vector<16x128xf32>, vector<16x128xf32>, vector<16x16xf32> -> vector<16x16xf32>
    %198 = arith.mulf %197, %7 : vector<16x16xf32>
    %199 = arith.mulf %195, %139 : vector<16x128xf32>
    %cst_75 = arith.constant dense<0.000000e+00> : vector<16x128xf32>
    %200 = tpu.matmul %198, %199, %cst_75 {dimension_numbers = #tpu.dot_dimension_numbers<[1], [0], [0], [1], [0, 0, 1, 1], [], []>} : vector<16x16xf32>, vector<16x128xf32>, vector<16x128xf32> -> vector<16x128xf32>
    %201 = arith.mulf %196, %200 : vector<16x128xf32>
    %c0_76 = arith.constant 0 : index
    %c0_77 = arith.constant 0 : index
    %c0_78 = arith.constant 0 : index
    %202 = vector.load %arg12[%c0_76, %c0_77, %c0_78] : memref<2x1x128xf32, #tpu.memory_space<vmem>>, vector<1x1x128xf32>
    %203 = vector.shape_cast %202 : vector<1x1x128xf32> to vector<1x128xf32>
    %204 = vector.broadcast %203 : vector<1x128xf32> to vector<16x128xf32>
    %205 = arith.mulf %204, %139 : vector<16x128xf32>
    %206 = arith.addf %201, %205 : vector<16x128xf32>
    %cst_79 = arith.constant 0.000000e+00 : f32
    %207 = vector.broadcast %cst_79 : f32 to vector<16x128xf32>
    %208 = arith.subf %207, %93 : vector<16x128xf32>
    %209 = math.exp %208 : vector<16x128xf32>
    %cst_80 = arith.constant 1.000000e+00 : f32
    %210 = vector.broadcast %cst_80 : f32 to vector<16x128xf32>
    %211 = arith.addf %210, %209 : vector<16x128xf32>
    %cst_81 = arith.constant 1.000000e+00 : f32
    %212 = vector.broadcast %cst_81 : f32 to vector<16x128xf32>
    %213 = arith.divf %212, %211 : vector<16x128xf32>
    %214 = arith.mulf %93, %213 : vector<16x128xf32>
    %215 = arith.mulf %206, %214 : vector<16x128xf32>
    %216 = arith.mulf %215, %215 : vector<16x128xf32>
    %cst_82 = arith.constant dense<0.000000e+00> : vector<16xf32>
    %217 = vector.multi_reduction <add>, %216, %cst_82 [1] : vector<16x128xf32> to vector<16xf32>
    %218 = vector.shape_cast %217 : vector<16xf32> to vector<16x1xf32>
    %cst_83 = arith.constant 1.562500e-02 : f32
    %219 = vector.broadcast %cst_83 : f32 to vector<16x1xf32>
    %220 = arith.mulf %218, %219 : vector<16x1xf32>
    %cst_84 = arith.constant 9.99999974E-6 : f32
    %221 = vector.broadcast %cst_84 : f32 to vector<16x1xf32>
    %222 = arith.addf %220, %221 : vector<16x1xf32>
    %223 = math.rsqrt %222 : vector<16x1xf32>
    %224 = vector.broadcast %223 : vector<16x1xf32> to vector<16x128xf32>
    %225 = arith.mulf %215, %224 : vector<16x128xf32>
    %c0_85 = arith.constant 0 : index
    %c0_86 = arith.constant 0 : index
    %c0_87 = arith.constant 0 : index
    %226 = vector.load %arg13[%c0_85, %c0_86, %c0_87] : memref<2x1x128xf32, #tpu.memory_space<vmem>>, vector<1x1x128xf32>
    %227 = vector.shape_cast %226 : vector<1x1x128xf32> to vector<1x128xf32>
    %228 = vector.broadcast %227 : vector<1x128xf32> to vector<16x128xf32>
    %229 = arith.mulf %225, %228 : vector<16x128xf32>
    %230 = arith.truncf %229 : vector<16x128xf32> to vector<16x128xbf16>
    %c0_88 = arith.constant 0 : index
    %c0_89 = arith.constant 0 : index
    %c0_90 = arith.constant 0 : index
    %231 = vector.load %arg14[%c0_88, %c0_89, %c0_90] : memref<2x128x128xbf16, #tpu.memory_space<vmem>>, vector<1x128x128xbf16>
    %232 = vector.shape_cast %231 : vector<1x128x128xbf16> to vector<128x128xbf16>
    %cst_91 = arith.constant dense<0.000000e+00> : vector<16x128xf32>
    %233 = tpu.matmul %230, %232, %cst_91 {dimension_numbers = #tpu.dot_dimension_numbers<[1], [0], [0], [1], [0, 0, 1, 1], [], []>} : vector<16x128xbf16>, vector<128x128xbf16>, vector<16x128xf32> -> vector<16x128xf32>
    %cst_92 = arith.constant dense<0.000000e+00> : vector<16xf32>
    %234 = vector.multi_reduction <add>, %233, %cst_92 [1] : vector<16x128xf32> to vector<16xf32>
    %235 = vector.shape_cast %234 : vector<16xf32> to vector<16x1xf32>
    %cst_93 = arith.constant 3.125000e-02 : f32
    %236 = vector.broadcast %cst_93 : f32 to vector<16x1xf32>
    %237 = arith.mulf %235, %236 : vector<16x1xf32>
    %238 = vector.broadcast %237 : vector<16x1xf32> to vector<16x128xf32>
    %239 = arith.subf %233, %238 : vector<16x128xf32>
    %240 = arith.mulf %239, %11 : vector<16x128xf32>
    %241 = arith.mulf %240, %240 : vector<16x128xf32>
    %cst_94 = arith.constant dense<0.000000e+00> : vector<16xf32>
    %242 = vector.multi_reduction <add>, %241, %cst_94 [1] : vector<16x128xf32> to vector<16xf32>
    %243 = vector.shape_cast %242 : vector<16xf32> to vector<16x1xf32>
    %cst_95 = arith.constant 3.125000e-02 : f32
    %244 = vector.broadcast %cst_95 : f32 to vector<16x1xf32>
    %245 = arith.mulf %243, %244 : vector<16x1xf32>
    %cst_96 = arith.constant 9.99999974E-6 : f32
    %246 = vector.broadcast %cst_96 : f32 to vector<16x1xf32>
    %247 = arith.addf %245, %246 : vector<16x1xf32>
    %248 = math.rsqrt %247 : vector<16x1xf32>
    %249 = vector.broadcast %248 : vector<16x1xf32> to vector<16x128xf32>
    %250 = arith.mulf %240, %249 : vector<16x128xf32>
    %c0_97 = arith.constant 0 : index
    %c0_98 = arith.constant 0 : index
    %c0_99 = arith.constant 0 : index
    %251 = vector.load %arg15[%c0_97, %c0_98, %c0_99] : memref<2x1x128xf32, #tpu.memory_space<vmem>>, vector<1x1x128xf32>
    %252 = vector.shape_cast %251 : vector<1x1x128xf32> to vector<1x128xf32>
    %253 = vector.broadcast %252 : vector<1x128xf32> to vector<16x128xf32>
    %254 = arith.mulf %250, %253 : vector<16x128xf32>
    %c0_100 = arith.constant 0 : index
    %c0_101 = arith.constant 0 : index
    %c0_102 = arith.constant 0 : index
    %255 = vector.load %arg16[%c0_100, %c0_101, %c0_102] : memref<2x1x128xf32, #tpu.memory_space<vmem>>, vector<1x1x128xf32>
    %256 = vector.shape_cast %255 : vector<1x1x128xf32> to vector<1x128xf32>
    %257 = vector.broadcast %256 : vector<1x128xf32> to vector<16x128xf32>
    %258 = arith.addf %254, %257 : vector<16x128xf32>
    %259 = arith.mulf %258, %19 : vector<16x128xf32>
    %260 = arith.addf %88, %259 : vector<16x128xf32>
    %261 = arith.truncf %260 : vector<16x128xf32> to vector<16x128xbf16>
    %c1 = arith.constant 1 : index
    %c0_103 = arith.constant 0 : index
    %c0_104 = arith.constant 0 : index
    %262 = vector.load %arg7[%c1, %c0_103, %c0_104] : memref<2x128x512xbf16, #tpu.memory_space<vmem>>, vector<1x128x512xbf16>
    %263 = vector.shape_cast %262 : vector<1x128x512xbf16> to vector<128x512xbf16>
    %cst_105 = arith.constant dense<0.000000e+00> : vector<16x512xf32>
    %264 = tpu.matmul %261, %263, %cst_105 {dimension_numbers = #tpu.dot_dimension_numbers<[1], [0], [0], [1], [0, 0, 1, 1], [], []>} : vector<16x128xbf16>, vector<128x512xbf16>, vector<16x512xf32> -> vector<16x512xf32>
    %265 = vector.extract_strided_slice %264 {offsets = [0, 0], sizes = [16, 128], strides = [1, 1]} : vector<16x512xf32> to vector<16x128xf32>
    %266 = vector.extract_strided_slice %264 {offsets = [0, 128], sizes = [16, 384], strides = [1, 1]} : vector<16x512xf32> to vector<16x384xf32>
    %c1_106 = arith.constant 1 : index
    %c0_107 = arith.constant 0 : index
    %c0_108 = arith.constant 0 : index
    %267 = vector.load %arg8[%c1_106, %c0_107, %c0_108] : memref<2x4x384xf32, #tpu.memory_space<vmem>>, vector<1x4x384xf32>
    %268 = vector.shape_cast %267 : vector<1x4x384xf32> to vector<4x384xf32>
    %269 = vector.extract_strided_slice %268 {offsets = [3, 0], sizes = [1, 384], strides = [1, 1]} : vector<4x384xf32> to vector<1x384xf32>
    %270 = vector.broadcast %269 : vector<1x384xf32> to vector<16x384xf32>
    %271 = arith.mulf %266, %270 : vector<16x384xf32>
    %c3_i32_109 = arith.constant 3 : i32
    %272 = tpu.dynamic_rotate %266 by %c3_i32_109 dim 0 : vector<16x384xf32>, i32 -> vector<16x384xf32>
    %c3_i32_110 = arith.constant 3 : i32
    %273 = vector.broadcast %c3_i32_110 : i32 to vector<16x384xi32>
    %274 = arith.cmpi sge, %2, %273 : vector<16x384xi32>
    %cst_111 = arith.constant 0.000000e+00 : f32
    %275 = vector.broadcast %cst_111 : f32 to vector<16x384xf32>
    %276 = arith.select %274, %272, %275 : vector<16x384xi1>, vector<16x384xf32>
    %277 = vector.extract_strided_slice %268 {offsets = [0, 0], sizes = [1, 384], strides = [1, 1]} : vector<4x384xf32> to vector<1x384xf32>
    %278 = vector.broadcast %277 : vector<1x384xf32> to vector<16x384xf32>
    %279 = arith.mulf %276, %278 : vector<16x384xf32>
    %280 = arith.addf %271, %279 : vector<16x384xf32>
    %c2_i32_112 = arith.constant 2 : i32
    %281 = tpu.dynamic_rotate %266 by %c2_i32_112 dim 0 : vector<16x384xf32>, i32 -> vector<16x384xf32>
    %c2_i32_113 = arith.constant 2 : i32
    %282 = vector.broadcast %c2_i32_113 : i32 to vector<16x384xi32>
    %283 = arith.cmpi sge, %2, %282 : vector<16x384xi32>
    %cst_114 = arith.constant 0.000000e+00 : f32
    %284 = vector.broadcast %cst_114 : f32 to vector<16x384xf32>
    %285 = arith.select %283, %281, %284 : vector<16x384xi1>, vector<16x384xf32>
    %286 = vector.extract_strided_slice %268 {offsets = [1, 0], sizes = [1, 384], strides = [1, 1]} : vector<4x384xf32> to vector<1x384xf32>
    %287 = vector.broadcast %286 : vector<1x384xf32> to vector<16x384xf32>
    %288 = arith.mulf %285, %287 : vector<16x384xf32>
    %289 = arith.addf %280, %288 : vector<16x384xf32>
    %c1_i32_115 = arith.constant 1 : i32
    %290 = tpu.dynamic_rotate %266 by %c1_i32_115 dim 0 : vector<16x384xf32>, i32 -> vector<16x384xf32>
    %c1_i32_116 = arith.constant 1 : i32
    %291 = vector.broadcast %c1_i32_116 : i32 to vector<16x384xi32>
    %292 = arith.cmpi sge, %2, %291 : vector<16x384xi32>
    %cst_117 = arith.constant 0.000000e+00 : f32
    %293 = vector.broadcast %cst_117 : f32 to vector<16x384xf32>
    %294 = arith.select %292, %290, %293 : vector<16x384xi1>, vector<16x384xf32>
    %295 = vector.extract_strided_slice %268 {offsets = [2, 0], sizes = [1, 384], strides = [1, 1]} : vector<4x384xf32> to vector<1x384xf32>
    %296 = vector.broadcast %295 : vector<1x384xf32> to vector<16x384xf32>
    %297 = arith.mulf %294, %296 : vector<16x384xf32>
    %298 = arith.addf %289, %297 : vector<16x384xf32>
    %c1_118 = arith.constant 1 : index
    %c0_119 = arith.constant 0 : index
    %c0_120 = arith.constant 0 : index
    %299 = vector.load %arg9[%c1_118, %c0_119, %c0_120] : memref<2x1x384xf32, #tpu.memory_space<vmem>>, vector<1x1x384xf32>
    %300 = vector.shape_cast %299 : vector<1x1x384xf32> to vector<1x384xf32>
    %301 = vector.broadcast %300 : vector<1x384xf32> to vector<16x384xf32>
    %302 = arith.addf %298, %301 : vector<16x384xf32>
    %cst_121 = arith.constant 0.000000e+00 : f32
    %303 = vector.broadcast %cst_121 : f32 to vector<16x384xf32>
    %304 = arith.subf %303, %302 : vector<16x384xf32>
    %305 = math.exp %304 : vector<16x384xf32>
    %cst_122 = arith.constant 1.000000e+00 : f32
    %306 = vector.broadcast %cst_122 : f32 to vector<16x384xf32>
    %307 = arith.addf %306, %305 : vector<16x384xf32>
    %cst_123 = arith.constant 1.000000e+00 : f32
    %308 = vector.broadcast %cst_123 : f32 to vector<16x384xf32>
    %309 = arith.divf %308, %307 : vector<16x384xf32>
    %310 = arith.mulf %302, %309 : vector<16x384xf32>
    %311 = vector.extract_strided_slice %310 {offsets = [0, 0], sizes = [16, 128], strides = [1, 1]} : vector<16x384xf32> to vector<16x128xf32>
    %312 = vector.extract_strided_slice %310 {offsets = [0, 128], sizes = [16, 128], strides = [1, 1]} : vector<16x384xf32> to vector<16x128xf32>
    %313 = vector.extract_strided_slice %310 {offsets = [0, 256], sizes = [16, 128], strides = [1, 1]} : vector<16x384xf32> to vector<16x128xf32>
    %c64_i32_124 = arith.constant 64 : i32
    %314 = tpu.dynamic_rotate %265 by %c64_i32_124 dim 1 : vector<16x128xf32>, i32 -> vector<16x128xf32>
    %c1_125 = arith.constant 1 : index
    %c0_126 = arith.constant 0 : index
    %c0_127 = arith.constant 0 : index
    %315 = vector.load %arg10[%c1_125, %c0_126, %c0_127] : memref<2x1x128xf32, #tpu.memory_space<vmem>>, vector<1x1x128xf32>
    %316 = vector.shape_cast %315 : vector<1x1x128xf32> to vector<1x128xf32>
    %317 = vector.broadcast %316 : vector<1x128xf32> to vector<16x128xf32>
    %318 = arith.addf %314, %317 : vector<16x128xf32>
    %cst_128 = arith.constant 0.000000e+00 : f32
    %319 = vector.broadcast %cst_128 : f32 to vector<16x128xf32>
    %320 = arith.maximumf %318, %319 : vector<16x128xf32>
    %321 = math.absf %318 : vector<16x128xf32>
    %cst_129 = arith.constant 0.000000e+00 : f32
    %322 = vector.broadcast %cst_129 : f32 to vector<16x128xf32>
    %323 = arith.subf %322, %321 : vector<16x128xf32>
    %324 = math.exp %323 : vector<16x128xf32>
    %cst_130 = arith.constant 1.000000e+00 : f32
    %325 = vector.broadcast %cst_130 : f32 to vector<16x128xf32>
    %326 = arith.addf %325, %324 : vector<16x128xf32>
    %327 = math.log %326 : vector<16x128xf32>
    %328 = arith.addf %320, %327 : vector<16x128xf32>
    %329 = arith.mulf %328, %15 : vector<16x128xf32>
    %c1_i32_131 = arith.constant 1 : i32
    %330 = vector.broadcast %c1_i32_131 : i32 to vector<16x128xi32>
    %331 = arith.cmpi sge, %0, %330 : vector<16x128xi32>
    %c1_i32_132 = arith.constant 1 : i32
    %332 = tpu.dynamic_rotate %329 by %c1_i32_132 dim 0 : vector<16x128xf32>, i32 -> vector<16x128xf32>
    %cst_133 = arith.constant 0.000000e+00 : f32
    %333 = vector.broadcast %cst_133 : f32 to vector<16x128xf32>
    %334 = arith.select %331, %332, %333 : vector<16x128xi1>, vector<16x128xf32>
    %335 = arith.addf %329, %334 : vector<16x128xf32>
    %c2_i32_134 = arith.constant 2 : i32
    %336 = vector.broadcast %c2_i32_134 : i32 to vector<16x128xi32>
    %337 = arith.cmpi sge, %0, %336 : vector<16x128xi32>
    %c2_i32_135 = arith.constant 2 : i32
    %338 = tpu.dynamic_rotate %335 by %c2_i32_135 dim 0 : vector<16x128xf32>, i32 -> vector<16x128xf32>
    %cst_136 = arith.constant 0.000000e+00 : f32
    %339 = vector.broadcast %cst_136 : f32 to vector<16x128xf32>
    %340 = arith.select %337, %338, %339 : vector<16x128xi1>, vector<16x128xf32>
    %341 = arith.addf %335, %340 : vector<16x128xf32>
    %c4_i32_137 = arith.constant 4 : i32
    %342 = vector.broadcast %c4_i32_137 : i32 to vector<16x128xi32>
    %343 = arith.cmpi sge, %0, %342 : vector<16x128xi32>
    %c4_i32_138 = arith.constant 4 : i32
    %344 = tpu.dynamic_rotate %341 by %c4_i32_138 dim 0 : vector<16x128xf32>, i32 -> vector<16x128xf32>
    %cst_139 = arith.constant 0.000000e+00 : f32
    %345 = vector.broadcast %cst_139 : f32 to vector<16x128xf32>
    %346 = arith.select %343, %344, %345 : vector<16x128xi1>, vector<16x128xf32>
    %347 = arith.addf %341, %346 : vector<16x128xf32>
    %c8_i32_140 = arith.constant 8 : i32
    %348 = vector.broadcast %c8_i32_140 : i32 to vector<16x128xi32>
    %349 = arith.cmpi sge, %0, %348 : vector<16x128xi32>
    %c8_i32_141 = arith.constant 8 : i32
    %350 = tpu.dynamic_rotate %347 by %c8_i32_141 dim 0 : vector<16x128xf32>, i32 -> vector<16x128xf32>
    %cst_142 = arith.constant 0.000000e+00 : f32
    %351 = vector.broadcast %cst_142 : f32 to vector<16x128xf32>
    %352 = arith.select %349, %350, %351 : vector<16x128xi1>, vector<16x128xf32>
    %353 = arith.addf %347, %352 : vector<16x128xf32>
    %c1_143 = arith.constant 1 : index
    %c0_144 = arith.constant 0 : index
    %c0_145 = arith.constant 0 : index
    %354 = vector.load %arg11[%c1_143, %c0_144, %c0_145] : memref<2x1x128xf32, #tpu.memory_space<vmem>>, vector<1x1x128xf32>
    %355 = vector.shape_cast %354 : vector<1x1x128xf32> to vector<1x128xf32>
    %cst_146 = arith.constant 0.000000e+00 : f32
    %356 = vector.broadcast %cst_146 : f32 to vector<1x128xf32>
    %357 = arith.subf %356, %355 : vector<1x128xf32>
    %358 = vector.broadcast %357 : vector<1x128xf32> to vector<16x128xf32>
    %359 = arith.mulf %358, %353 : vector<16x128xf32>
    %360 = math.exp %359 : vector<16x128xf32>
    %361 = arith.mulf %329, %360 : vector<16x128xf32>
    %362 = vector.broadcast %355 : vector<1x128xf32> to vector<16x128xf32>
    %363 = arith.mulf %362, %353 : vector<16x128xf32>
    %364 = math.exp %363 : vector<16x128xf32>
    %365 = tpu.concatenate %361, %364 in 0 : vector<16x128xf32>, vector<16x128xf32> -> vector<32x128xf32>
    %cst_147 = arith.constant dense<0.000000e+00> : vector<32x128xf32>
    %366 = tpu.matmul %365, %28, %cst_147 {dimension_numbers = #tpu.dot_dimension_numbers<[1], [0], [0], [1], [0, 0, 1, 1], [], []>} : vector<32x128xf32>, vector<128x128xf32>, vector<32x128xf32> -> vector<32x128xf32>
    %367 = vector.extract_strided_slice %366 {offsets = [0, 0], sizes = [16, 128], strides = [1, 1]} : vector<32x128xf32> to vector<16x128xf32>
    %368 = vector.extract_strided_slice %366 {offsets = [16, 0], sizes = [16, 128], strides = [1, 1]} : vector<32x128xf32> to vector<16x128xf32>
    %cst_148 = arith.constant dense<0.000000e+00> : vector<16x16xf32>
    %369 = tpu.matmul %313, %312, %cst_148 {dimension_numbers = #tpu.dot_dimension_numbers<[1], [1], [0], [0], [0, 0, 1, 0], [], []>} : vector<16x128xf32>, vector<16x128xf32>, vector<16x16xf32> -> vector<16x16xf32>
    %370 = arith.mulf %369, %7 : vector<16x16xf32>
    %371 = arith.mulf %367, %311 : vector<16x128xf32>
    %cst_149 = arith.constant dense<0.000000e+00> : vector<16x128xf32>
    %372 = tpu.matmul %370, %371, %cst_149 {dimension_numbers = #tpu.dot_dimension_numbers<[1], [0], [0], [1], [0, 0, 1, 1], [], []>} : vector<16x16xf32>, vector<16x128xf32>, vector<16x128xf32> -> vector<16x128xf32>
    %373 = arith.mulf %368, %372 : vector<16x128xf32>
    %c1_150 = arith.constant 1 : index
    %c0_151 = arith.constant 0 : index
    %c0_152 = arith.constant 0 : index
    %374 = vector.load %arg12[%c1_150, %c0_151, %c0_152] : memref<2x1x128xf32, #tpu.memory_space<vmem>>, vector<1x1x128xf32>
    %375 = vector.shape_cast %374 : vector<1x1x128xf32> to vector<1x128xf32>
    %376 = vector.broadcast %375 : vector<1x128xf32> to vector<16x128xf32>
    %377 = arith.mulf %376, %311 : vector<16x128xf32>
    %378 = arith.addf %373, %377 : vector<16x128xf32>
    %cst_153 = arith.constant 0.000000e+00 : f32
    %379 = vector.broadcast %cst_153 : f32 to vector<16x128xf32>
    %380 = arith.subf %379, %265 : vector<16x128xf32>
    %381 = math.exp %380 : vector<16x128xf32>
    %cst_154 = arith.constant 1.000000e+00 : f32
    %382 = vector.broadcast %cst_154 : f32 to vector<16x128xf32>
    %383 = arith.addf %382, %381 : vector<16x128xf32>
    %cst_155 = arith.constant 1.000000e+00 : f32
    %384 = vector.broadcast %cst_155 : f32 to vector<16x128xf32>
    %385 = arith.divf %384, %383 : vector<16x128xf32>
    %386 = arith.mulf %265, %385 : vector<16x128xf32>
    %387 = arith.mulf %378, %386 : vector<16x128xf32>
    %388 = arith.mulf %387, %387 : vector<16x128xf32>
    %cst_156 = arith.constant dense<0.000000e+00> : vector<16xf32>
    %389 = vector.multi_reduction <add>, %388, %cst_156 [1] : vector<16x128xf32> to vector<16xf32>
    %390 = vector.shape_cast %389 : vector<16xf32> to vector<16x1xf32>
    %cst_157 = arith.constant 1.562500e-02 : f32
    %391 = vector.broadcast %cst_157 : f32 to vector<16x1xf32>
    %392 = arith.mulf %390, %391 : vector<16x1xf32>
    %cst_158 = arith.constant 9.99999974E-6 : f32
    %393 = vector.broadcast %cst_158 : f32 to vector<16x1xf32>
    %394 = arith.addf %392, %393 : vector<16x1xf32>
    %395 = math.rsqrt %394 : vector<16x1xf32>
    %396 = vector.broadcast %395 : vector<16x1xf32> to vector<16x128xf32>
    %397 = arith.mulf %387, %396 : vector<16x128xf32>
    %c1_159 = arith.constant 1 : index
    %c0_160 = arith.constant 0 : index
    %c0_161 = arith.constant 0 : index
    %398 = vector.load %arg13[%c1_159, %c0_160, %c0_161] : memref<2x1x128xf32, #tpu.memory_space<vmem>>, vector<1x1x128xf32>
    %399 = vector.shape_cast %398 : vector<1x1x128xf32> to vector<1x128xf32>
    %400 = vector.broadcast %399 : vector<1x128xf32> to vector<16x128xf32>
    %401 = arith.mulf %397, %400 : vector<16x128xf32>
    %402 = arith.truncf %401 : vector<16x128xf32> to vector<16x128xbf16>
    %c1_162 = arith.constant 1 : index
    %c0_163 = arith.constant 0 : index
    %c0_164 = arith.constant 0 : index
    %403 = vector.load %arg14[%c1_162, %c0_163, %c0_164] : memref<2x128x128xbf16, #tpu.memory_space<vmem>>, vector<1x128x128xbf16>
    %404 = vector.shape_cast %403 : vector<1x128x128xbf16> to vector<128x128xbf16>
    %cst_165 = arith.constant dense<0.000000e+00> : vector<16x128xf32>
    %405 = tpu.matmul %402, %404, %cst_165 {dimension_numbers = #tpu.dot_dimension_numbers<[1], [0], [0], [1], [0, 0, 1, 1], [], []>} : vector<16x128xbf16>, vector<128x128xbf16>, vector<16x128xf32> -> vector<16x128xf32>
    %cst_166 = arith.constant dense<0.000000e+00> : vector<16xf32>
    %406 = vector.multi_reduction <add>, %405, %cst_166 [1] : vector<16x128xf32> to vector<16xf32>
    %407 = vector.shape_cast %406 : vector<16xf32> to vector<16x1xf32>
    %cst_167 = arith.constant 3.125000e-02 : f32
    %408 = vector.broadcast %cst_167 : f32 to vector<16x1xf32>
    %409 = arith.mulf %407, %408 : vector<16x1xf32>
    %410 = vector.broadcast %409 : vector<16x1xf32> to vector<16x128xf32>
    %411 = arith.subf %405, %410 : vector<16x128xf32>
    %412 = arith.mulf %411, %11 : vector<16x128xf32>
    %413 = arith.mulf %412, %412 : vector<16x128xf32>
    %cst_168 = arith.constant dense<0.000000e+00> : vector<16xf32>
    %414 = vector.multi_reduction <add>, %413, %cst_168 [1] : vector<16x128xf32> to vector<16xf32>
    %415 = vector.shape_cast %414 : vector<16xf32> to vector<16x1xf32>
    %cst_169 = arith.constant 3.125000e-02 : f32
    %416 = vector.broadcast %cst_169 : f32 to vector<16x1xf32>
    %417 = arith.mulf %415, %416 : vector<16x1xf32>
    %cst_170 = arith.constant 9.99999974E-6 : f32
    %418 = vector.broadcast %cst_170 : f32 to vector<16x1xf32>
    %419 = arith.addf %417, %418 : vector<16x1xf32>
    %420 = math.rsqrt %419 : vector<16x1xf32>
    %421 = vector.broadcast %420 : vector<16x1xf32> to vector<16x128xf32>
    %422 = arith.mulf %412, %421 : vector<16x128xf32>
    %c1_171 = arith.constant 1 : index
    %c0_172 = arith.constant 0 : index
    %c0_173 = arith.constant 0 : index
    %423 = vector.load %arg15[%c1_171, %c0_172, %c0_173] : memref<2x1x128xf32, #tpu.memory_space<vmem>>, vector<1x1x128xf32>
    %424 = vector.shape_cast %423 : vector<1x1x128xf32> to vector<1x128xf32>
    %425 = vector.broadcast %424 : vector<1x128xf32> to vector<16x128xf32>
    %426 = arith.mulf %422, %425 : vector<16x128xf32>
    %c1_174 = arith.constant 1 : index
    %c0_175 = arith.constant 0 : index
    %c0_176 = arith.constant 0 : index
    %427 = vector.load %arg16[%c1_174, %c0_175, %c0_176] : memref<2x1x128xf32, #tpu.memory_space<vmem>>, vector<1x1x128xf32>
    %428 = vector.shape_cast %427 : vector<1x1x128xf32> to vector<1x128xf32>
    %429 = vector.broadcast %428 : vector<1x128xf32> to vector<16x128xf32>
    %430 = arith.addf %426, %429 : vector<16x128xf32>
    %431 = arith.mulf %430, %19 : vector<16x128xf32>
    %432 = arith.addf %260, %431 : vector<16x128xf32>
    %c0_177 = arith.constant 0 : index
    %c0_178 = arith.constant 0 : index
    %c0_179 = arith.constant 0 : index
    %433 = vector.load %arg22[%c0_177, %c0_178, %c0_179] : memref<1x16x128xf32, #tpu.memory_space<vmem>>, vector<1x16x128xf32>
    %434 = vector.shape_cast %433 : vector<1x16x128xf32> to vector<16x128xf32>
    %435 = vector.shape_cast %432 : vector<16x128xf32> to vector<1x16x128xf32>
    tpu.vector_store %arg22[%c0_177, %c0_178, %c0_179], %435 {strides = array<i32>} : memref<1x16x128xf32, #tpu.memory_space<vmem>>, vector<1x16x128xf32>,
    %436 = arith.mulf %432, %27 : vector<16x128xf32>
    %cst_180 = arith.constant dense<0.000000e+00> : vector<128xf32>
    %437 = vector.multi_reduction <add>, %436, %cst_180 [0] : vector<16x128xf32> to vector<128xf32>
    %438 = vector.shape_cast %437 : vector<128xf32> to vector<1x128xf32>
    %cst_181 = arith.constant dense<0.000000e+00> : vector<1xf32>
    %439 = vector.multi_reduction <add>, %438, %cst_181 [1] : vector<1x128xf32> to vector<1xf32>
    %440 = vector.shape_cast %439 : vector<1xf32> to vector<1x1xf32>
    %cst_182 = arith.constant 3.125000e-02 : f32
    %441 = vector.broadcast %cst_182 : f32 to vector<1x1xf32>
    %442 = arith.mulf %440, %441 : vector<1x1xf32>
    %443 = vector.broadcast %442 : vector<1x1xf32> to vector<1x128xf32>
    %444 = arith.subf %438, %443 : vector<1x128xf32>
    %445 = vector.extract_strided_slice %11 {offsets = [0, 0], sizes = [1, 128], strides = [1, 1]} : vector<16x128xf32> to vector<1x128xf32>
    %446 = arith.mulf %444, %445 : vector<1x128xf32>
    %447 = arith.mulf %446, %446 : vector<1x128xf32>
    %cst_183 = arith.constant dense<0.000000e+00> : vector<1xf32>
    %448 = vector.multi_reduction <add>, %447, %cst_183 [1] : vector<1x128xf32> to vector<1xf32>
    %449 = vector.shape_cast %448 : vector<1xf32> to vector<1x1xf32>
    %cst_184 = arith.constant 3.125000e-02 : f32
    %450 = vector.broadcast %cst_184 : f32 to vector<1x1xf32>
    %451 = arith.mulf %449, %450 : vector<1x1xf32>
    %cst_185 = arith.constant 9.99999974E-6 : f32
    %452 = vector.broadcast %cst_185 : f32 to vector<1x1xf32>
    %453 = arith.addf %451, %452 : vector<1x1xf32>
    %454 = math.rsqrt %453 : vector<1x1xf32>
    %455 = vector.broadcast %454 : vector<1x1xf32> to vector<1x128xf32>
    %456 = arith.mulf %446, %455 : vector<1x128xf32>
    %c0_186 = arith.constant 0 : index
    %c0_187 = arith.constant 0 : index
    %457 = vector.load %arg18[%c0_186, %c0_187] : memref<1x128xf32, #tpu.memory_space<vmem>>, vector<1x128xf32>
    %458 = arith.mulf %456, %457 : vector<1x128xf32>
    %c0_188 = arith.constant 0 : index
    %c0_189 = arith.constant 0 : index
    %459 = vector.load %arg19[%c0_188, %c0_189] : memref<1x128xf32, #tpu.memory_space<vmem>>, vector<1x128xf32>
    %460 = arith.addf %458, %459 : vector<1x128xf32>
    %461 = arith.truncf %460 : vector<1x128xf32> to vector<1x128xbf16>
    %c0_190 = arith.constant 0 : index
    %c0_191 = arith.constant 0 : index
    %462 = vector.load %arg20[%c0_190, %c0_191] : memref<128x128xbf16, #tpu.memory_space<vmem>>, vector<128x128xbf16>
    %cst_192 = arith.constant dense<0.000000e+00> : vector<1x128xf32>
    %463 = tpu.matmul %461, %462, %cst_192 {dimension_numbers = #tpu.dot_dimension_numbers<[1], [0], [0], [1], [0, 0, 1, 1], [], []>} : vector<1x128xbf16>, vector<128x128xbf16>, vector<1x128xf32> -> vector<1x128xf32>
    %c0_193 = arith.constant 0 : index
    %c0_194 = arith.constant 0 : index
    %464 = vector.load %arg21[%c0_193, %c0_194] : memref<1x128xf32, #tpu.memory_space<vmem>>, vector<1x128xf32>
    %465 = arith.addf %463, %464 : vector<1x128xf32>
    %c0_195 = arith.constant 0 : index
    %c0_196 = arith.constant 0 : index
    %c0_197 = arith.constant 0 : index
    %466 = vector.load %arg23[%c0_195, %c0_196, %c0_197] : memref<1x1x128xf32, #tpu.memory_space<vmem>>, vector<1x1x128xf32>
    %467 = vector.shape_cast %466 : vector<1x1x128xf32> to vector<1x128xf32>
    %468 = vector.shape_cast %465 : vector<1x128xf32> to vector<1x1x128xf32>
    tpu.vector_store %arg23[%c0_195, %c0_196, %c0_197], %468 {strides = array<i32>} : memref<1x1x128xf32, #tpu.memory_space<vmem>>, vector<1x1x128xf32>,
    return
  }
  func.func @transform_0(%arg0: i32) -> (i32, i32, i32) {
    %c0_i32 = arith.constant 0 : i32
    %c0_i32_0 = arith.constant 0 : i32
    %c0_i32_1 = arith.constant 0 : i32
    return %arg0, %c0_i32, %c0_i32_0 : i32, i32, i32
  }
  func.func @transform_1(%arg0: i32) -> (i32, i32) {
    %c0_i32 = arith.constant 0 : i32
    %c0_i32_0 = arith.constant 0 : i32
    %c0_i32_1 = arith.constant 0 : i32
    return %c0_i32, %c0_i32_0 : i32, i32
  }
  func.func @transform_2(%arg0: i32) -> (i32, i32) {
    %c0_i32 = arith.constant 0 : i32
    %c0_i32_0 = arith.constant 0 : i32
    %c0_i32_1 = arith.constant 0 : i32
    return %c0_i32, %c0_i32_0 : i32, i32
  }
  func.func @transform_3(%arg0: i32) -> (i32, i32) {
    %c0_i32 = arith.constant 0 : i32
    %c0_i32_0 = arith.constant 0 : i32
    %c0_i32_1 = arith.constant 0 : i32
    return %c0_i32, %c0_i32_0 : i32, i32
  }
  func.func @transform_4(%arg0: i32) -> (i32, i32) {
    %c0_i32 = arith.constant 0 : i32
    %c0_i32_0 = arith.constant 0 : i32
    %c0_i32_1 = arith.constant 0 : i32
    return %c0_i32, %c0_i32_0 : i32, i32
  }
  func.func @transform_5(%arg0: i32) -> (i32, i32) {
    %c0_i32 = arith.constant 0 : i32
    %c0_i32_0 = arith.constant 0 : i32
    %c0_i32_1 = arith.constant 0 : i32
    return %c0_i32, %c0_i32_0 : i32, i32
  }
  func.func @transform_6(%arg0: i32) -> (i32, i32, i32) {
    %c0_i32 = arith.constant 0 : i32
    %c0_i32_0 = arith.constant 0 : i32
    %c0_i32_1 = arith.constant 0 : i32
    %c0_i32_2 = arith.constant 0 : i32
    return %c0_i32, %c0_i32_0, %c0_i32_1 : i32, i32, i32
  }
  func.func @transform_7(%arg0: i32) -> (i32, i32, i32) {
    %c0_i32 = arith.constant 0 : i32
    %c0_i32_0 = arith.constant 0 : i32
    %c0_i32_1 = arith.constant 0 : i32
    %c0_i32_2 = arith.constant 0 : i32
    return %c0_i32, %c0_i32_0, %c0_i32_1 : i32, i32, i32
  }
  func.func @transform_8(%arg0: i32) -> (i32, i32, i32) {
    %c0_i32 = arith.constant 0 : i32
    %c0_i32_0 = arith.constant 0 : i32
    %c0_i32_1 = arith.constant 0 : i32
    %c0_i32_2 = arith.constant 0 : i32
    return %c0_i32, %c0_i32_0, %c0_i32_1 : i32, i32, i32
  }
  func.func @transform_9(%arg0: i32) -> (i32, i32, i32) {
    %c0_i32 = arith.constant 0 : i32
    %c0_i32_0 = arith.constant 0 : i32
    %c0_i32_1 = arith.constant 0 : i32
    %c0_i32_2 = arith.constant 0 : i32
    return %c0_i32, %c0_i32_0, %c0_i32_1 : i32, i32, i32
  }
  func.func @transform_10(%arg0: i32) -> (i32, i32, i32) {
    %c0_i32 = arith.constant 0 : i32
    %c0_i32_0 = arith.constant 0 : i32
    %c0_i32_1 = arith.constant 0 : i32
    %c0_i32_2 = arith.constant 0 : i32
    return %c0_i32, %c0_i32_0, %c0_i32_1 : i32, i32, i32
  }
  func.func @transform_11(%arg0: i32) -> (i32, i32, i32) {
    %c0_i32 = arith.constant 0 : i32
    %c0_i32_0 = arith.constant 0 : i32
    %c0_i32_1 = arith.constant 0 : i32
    %c0_i32_2 = arith.constant 0 : i32
    return %c0_i32, %c0_i32_0, %c0_i32_1 : i32, i32, i32
  }
  func.func @transform_12(%arg0: i32) -> (i32, i32, i32) {
    %c0_i32 = arith.constant 0 : i32
    %c0_i32_0 = arith.constant 0 : i32
    %c0_i32_1 = arith.constant 0 : i32
    %c0_i32_2 = arith.constant 0 : i32
    return %c0_i32, %c0_i32_0, %c0_i32_1 : i32, i32, i32
  }
  func.func @transform_13(%arg0: i32) -> (i32, i32, i32) {
    %c0_i32 = arith.constant 0 : i32
    %c0_i32_0 = arith.constant 0 : i32
    %c0_i32_1 = arith.constant 0 : i32
    %c0_i32_2 = arith.constant 0 : i32
    return %c0_i32, %c0_i32_0, %c0_i32_1 : i32, i32, i32
  }
  func.func @transform_14(%arg0: i32) -> (i32, i32, i32) {
    %c0_i32 = arith.constant 0 : i32
    %c0_i32_0 = arith.constant 0 : i32
    %c0_i32_1 = arith.constant 0 : i32
    %c0_i32_2 = arith.constant 0 : i32
    return %c0_i32, %c0_i32_0, %c0_i32_1 : i32, i32, i32
  }
  func.func @transform_15(%arg0: i32) -> (i32, i32, i32) {
    %c0_i32 = arith.constant 0 : i32
    %c0_i32_0 = arith.constant 0 : i32
    %c0_i32_1 = arith.constant 0 : i32
    %c0_i32_2 = arith.constant 0 : i32
    return %c0_i32, %c0_i32_0, %c0_i32_1 : i32, i32, i32
  }
  func.func @transform_16(%arg0: i32) -> (i32, i32) {
    %c0_i32 = arith.constant 0 : i32
    %c0_i32_0 = arith.constant 0 : i32
    %c0_i32_1 = arith.constant 0 : i32
    return %c0_i32, %c0_i32_0 : i32, i32
  }
  func.func @transform_17(%arg0: i32) -> (i32, i32) {
    %c0_i32 = arith.constant 0 : i32
    %c0_i32_0 = arith.constant 0 : i32
    %c0_i32_1 = arith.constant 0 : i32
    return %c0_i32, %c0_i32_0 : i32, i32
  }
  func.func @transform_18(%arg0: i32) -> (i32, i32) {
    %c0_i32 = arith.constant 0 : i32
    %c0_i32_0 = arith.constant 0 : i32
    %c0_i32_1 = arith.constant 0 : i32
    return %c0_i32, %c0_i32_0 : i32, i32
  }
  func.func @transform_19(%arg0: i32) -> (i32, i32) {
    %c0_i32 = arith.constant 0 : i32
    %c0_i32_0 = arith.constant 0 : i32
    %c0_i32_1 = arith.constant 0 : i32
    return %c0_i32, %c0_i32_0 : i32, i32
  }
  func.func @transform_20(%arg0: i32) -> (i32, i32) {
    %c0_i32 = arith.constant 0 : i32
    %c0_i32_0 = arith.constant 0 : i32
    %c0_i32_1 = arith.constant 0 : i32
    return %c0_i32, %c0_i32_0 : i32, i32
  }
  func.func @transform_21(%arg0: i32) -> (i32, i32, i32) {
    %c0_i32 = arith.constant 0 : i32
    %c0_i32_0 = arith.constant 0 : i32
    %c0_i32_1 = arith.constant 0 : i32
    return %arg0, %c0_i32, %c0_i32_0 : i32, i32, i32
  }
  func.func @transform_22(%arg0: i32) -> (i32, i32, i32) {
    %c0_i32 = arith.constant 0 : i32
    %c0_i32_0 = arith.constant 0 : i32
    %c0_i32_1 = arith.constant 0 : i32
    return %arg0, %c0_i32, %c0_i32_0 : i32, i32, i32
  }
}

</mosaic_0001>

<llo_original>
// kernel: forward.1
$region0: #{forward.1}
  #allocation0 [shape = 'u32[]', space=smem, size = 0x4, offset = 0x4, fixed_abs, tag = 'smem constant byte address 0x4 - core index']
  #allocation1 [shape = 'u32[72,128]{1,0:T(1,128)}', space=vmem, size = 0x9000, scoped, tag = 'internal scratch']
  %s0 = inlined_call_operand.vmem [shape: f32[2,16,128], index: 0, kind: input, shape index: {}]
  %s1 = inlined_call_operand.vmem [shape: bf16[128,128], index: 1, kind: input, shape index: {}]
  %s2 = inlined_call_operand.vmem [shape: f32[1,128], index: 2, kind: input, shape index: {}]
  %s3 = inlined_call_operand.hbm [shape: bf16[128,128], index: 3, kind: input, shape index: {}]
  %s4 = inlined_call_operand.vmem [shape: f32[1,128], index: 4, kind: input, shape index: {}]
  %s5 = inlined_call_operand.hbm [shape: f32[1,128], index: 5, kind: input, shape index: {}]
  %s6 = inlined_call_operand.hbm [shape: bf16[2,128,512], index: 6, kind: input, shape index: {}]
  %s7 = inlined_call_operand.vmem [shape: f32[2,4,384], index: 7, kind: input, shape index: {}]
  %s8 = inlined_call_operand.vmem [shape: f32[2,1,384], index: 8, kind: input, shape index: {}]
  %s9 = inlined_call_operand.vmem [shape: f32[2,1,128], index: 9, kind: input, shape index: {}]
  %s10 = inlined_call_operand.vmem [shape: f32[2,1,128], index: 10, kind: input, shape index: {}]
  %s11 = inlined_call_operand.vmem [shape: f32[2,1,128], index: 11, kind: input, shape index: {}]
  %s12 = inlined_call_operand.vmem [shape: f32[2,1,128], index: 12, kind: input, shape index: {}]
  %s13 = inlined_call_operand.vmem [shape: bf16[2,128,128], index: 13, kind: input, shape index: {}]
  %s14 = inlined_call_operand.vmem [shape: f32[2,1,128], index: 14, kind: input, shape index: {}]
  %s15 = inlined_call_operand.vmem [shape: f32[2,1,128], index: 15, kind: input, shape index: {}]
  %s16 = inlined_call_operand.hbm [shape: f32[128,128], index: 16, kind: input, shape index: {}]
  %s17 = inlined_call_operand.hbm [shape: f32[1,128], index: 17, kind: input, shape index: {}]
  %s18 = inlined_call_operand.hbm [shape: f32[1,128], index: 18, kind: input, shape index: {}]
  %s19 = inlined_call_operand.hbm [shape: bf16[128,128], index: 19, kind: input, shape index: {}]
  %s20 = inlined_call_operand.hbm [shape: f32[1,128], index: 20, kind: input, shape index: {}]
  %s21 = inlined_call_operand.vmem [shape: f32[2,16,128], index: 21, kind: output, shape index: {0}]
  %s22 = inlined_call_operand.vmem [shape: f32[2,1,128], index: 22, kind: output, shape index: {1}]
  %23 = xla_tuple %s21, %s22
  %s24 = sld [smem:[#allocation0]]
  $region157: #{forward.1} parent=0
    _
  %s26 = ssub.s32 1, %s24
  %s27 = scalar_select 0, %s26, %s24
  $region1: #{forward.1} parent=0
    #allocation2 [shape = 'u8[32768]{0}', space=vmem, size = 0x8000, scoped, tag = 'input window, operand 3, single buffered']
    #allocation3 [shape = 's32[2]{0}', space=sflag, size = 0x8, scoped, tag = 'scoped memory for forward.1']
    #allocation4 [shape = 'u8[512]{0}', space=vmem, size = 0x400, scoped, tag = 'input window, operand 5, single buffered']
    #allocation5 [shape = 's32[1]{0}', space=sflag, size = 0x4, scoped, tag = 'scoped memory for forward.1']
    #allocation6 [shape = 'u8[262144]{0}', space=vmem, size = 0x40000, scoped, tag = 'input window, operand 6, single buffered']
    #allocation7 [shape = 'u8[65536]{0}', space=vmem, size = 0x10000, scoped, tag = 'input window, operand 16, single buffered']
    #allocation8 [shape = 's32[1]{0}', space=sflag, size = 0x4, scoped, tag = 'scoped memory for forward.1']
    #allocation9 [shape = 'u8[512]{0}', space=vmem, size = 0x400, scoped, tag = 'input window, operand 17, single buffered']
    #allocation10 [shape = 'u8[512]{0}', space=vmem, size = 0x400, scoped, tag = 'input window, operand 18, single buffered']
    #allocation11 [shape = 's32[1]{0}', space=sflag, size = 0x4, scoped, tag = 'scoped memory for forward.1']
    #allocation12 [shape = 'u8[32768]{0}', space=vmem, size = 0x8000, scoped, tag = 'input window, operand 19, single buffered']
    #allocation13 [shape = 'u8[512]{0}', space=vmem, size = 0x400, scoped, tag = 'input window, operand 20, single buffered']
    #allocation14 [shape = 's32[1]{0}', space=sflag, size = 0x4, scoped, tag = 'scoped memory for forward.1']
    %28 = vsyncpa [#allocation3], 0
    %29 = vsyncpa [#allocation5], 0
    %30 = vsyncpa [#allocation8], 0
    %31 = vsyncpa [#allocation11], 0
    %32 = vsyncpa [#allocation14], 0
    loop: start=0, step=1, limit=4
    $region2: #{forward.1} parent=1 // loop_pre_header
      _
    $region3: #{forward.1} parent=1 // loop_header
      %s34 = sphi 0, %s38
      %p35 = scmp.ge.s32.totalorder %s34, 4
      %s44 = sphi 0, %s46
      %s47 = sphi 0, %s44
      %s48 = sphi 0, %s47
      %s64 = sphi 0, %s48
      %s68 = sphi 0, %s68
      %s70 = sphi 0, %s68
      %s71 = sphi 0, %s70
      %s85 = sphi 0, %s71
      %s89 = sphi 0, %s89
      %s91 = sphi 0, %s89
      %s92 = sphi 0, %s91
      %s106 = sphi 0, %s92
      %s110 = sphi 0, %s110
      %s112 = sphi 0, %s110
      %s113 = sphi 0, %s112
      %s127 = sphi 0, %s113
      %s131 = sphi 0, %s131
      %s133 = sphi 0, %s131
      %s134 = sphi 0, %s133
      %s148 = sphi 0, %s134
      %s152 = sphi 0, %s152
      %s154 = sphi 0, %s152
      %s155 = sphi 0, %s154
      %s169 = sphi 0, %s155
      %s173 = sphi 0, %s173
      %s175 = sphi 0, %s173
      %s176 = sphi 0, %s175
      %s190 = sphi 0, %s176
      %s194 = sphi 0, %s194
      %s196 = sphi 0, %s194
      %s197 = sphi 0, %s196
      %s211 = sphi 0, %s197
      %s215 = sphi 0, %s215
      %s217 = sphi 0, %s215
      %s218 = sphi 0, %s217
      %s232 = sphi 0, %s218
      %s236 = sphi 0, %s236
      %s238 = sphi 0, %s236
      %s239 = sphi 0, %s238
      %s253 = sphi 0, %s239
      %s257 = sphi 0, %s257
      %s259 = sphi 0, %s257
      %s260 = sphi 0, %s259
      %s274 = sphi 0, %s260
      %s278 = sphi 0, %s278
      %s280 = sphi 0, %s278
      %s281 = sphi 0, %s280
      %s295 = sphi 0, %s281
      %s299 = sphi 0, %s299
      %s301 = sphi 0, %s299
      %s302 = sphi 0, %s301
      %s316 = sphi 0, %s302
      %s320 = sphi 0, %s320
      %s322 = sphi 0, %s320
      %s323 = sphi 0, %s322
      %s337 = sphi 0, %s323
      %s341 = sphi 0, %s341
      %s343 = sphi 0, %s341
      %s344 = sphi 0, %s343
      %s358 = sphi 0, %s344
      %s362 = sphi 0, %s362
      %s364 = sphi 0, %s362
      %s365 = sphi 0, %s364
      %s379 = sphi 0, %s365
      %s383 = sphi 0, %s383
      %s385 = sphi 0, %s383
      %s386 = sphi 0, %s385
      %s400 = sphi 0, %s386
      %s404 = sphi 0, %s404
      %s406 = sphi 0, %s404
      %s407 = sphi 0, %s406
      %s421 = sphi 0, %s407
      %s425 = sphi 0, %s425
      %s427 = sphi 0, %s425
      %s428 = sphi 0, %s427
      %s442 = sphi 0, %s428
      %s446 = sphi 0, %s446
      %s448 = sphi 0, %s446
      %s449 = sphi 0, %s448
      %s463 = sphi 0, %s449
      %s467 = sphi 0, %s467
      %s469 = sphi 0, %s467
      %s470 = sphi 0, %s469
      %s484 = sphi 0, %s470
      %s490 = sphi 0, %s492
      %s493 = sphi 0, %s490
      %s494 = sphi 0, %s493
      %s510 = sphi 0, %s494
      %s516 = sphi 0, %s518
      %s519 = sphi 0, %s516
      %s520 = sphi 0, %s519
      %s536 = sphi 0, %s520
    $region4: #{forward.1} parent=1 // loop_header_branch
      %37 = sbr.rel (%p35) target = $region8
    $region5: #{forward.1} parent=1 // loop_body
      %s39 = ssub.s32 %s34, 1
      %s40 = ssub.s32 %s34, 2
      %s41 = sadd.s32 %s34, 1
      %s42 = ssub.s32 %s34, %s41
      %p43 = scmp.eq.s32.totalorder %s42, 0
      %s45 = sadd.s32 %s44, 1
      %s46 = scalar_select %p43, %s44, %s45
      %p49 = pneg %p43
      %p50 = scmp.eq.s32.totalorder %s34, 1
      %p51 = por %p49, %p50
      %p52 = scmp.ne.s32.totalorder %s44, %s47
      %p53 = scmp.eq.s32.totalorder %s34, 0
      %p54 = por %p52, %p53
      %p55 = scmp.ne.s32.totalorder %s44, %s47
      %p56 = scmp.eq.s32.totalorder %s39, 1
      %p57 = por %p55, %p56
      %p58 = scmp.ne.s32.totalorder %s47, %s48
      %p59 = scmp.eq.s32.totalorder %s39, 0
      %p60 = por %p58, %p59
      %p61 = scmp.ne.s32.totalorder %s47, %s48
      %p62 = scmp.eq.s32.totalorder %s40, 1
      %p63 = por %p61, %p62
      %p65 = scmp.ne.s32.totalorder %s48, %s64
      %p66 = scmp.eq.s32.totalorder %s40, 0
      %p67 = por %p65, %p66
      %s69 = sadd.s32 %s68, 1
      %p72 = scmp.eq.s32.totalorder %s34, 1
      %p73 = scmp.ne.s32.totalorder %s68, %s70
      %p74 = scmp.eq.s32.totalorder %s34, 0
      %p75 = por %p73, %p74
      %p76 = scmp.ne.s32.totalorder %s68, %s70
      %p77 = scmp.eq.s32.totalorder %s39, 1
      %p78 = por %p76, %p77
      %p79 = scmp.ne.s32.totalorder %s70, %s71
      %p80 = scmp.eq.s32.totalorder %s39, 0
      %p81 = por %p79, %p80
      %p82 = scmp.ne.s32.totalorder %s70, %s71
      %p83 = scmp.eq.s32.totalorder %s40, 1
      %p84 = por %p82, %p83
      %p86 = scmp.ne.s32.totalorder %s71, %s85
      %p87 = scmp.eq.s32.totalorder %s40, 0
      %p88 = por %p86, %p87
      %s90 = sadd.s32 %s89, 1
      %p93 = scmp.eq.s32.totalorder %s34, 1
      %p94 = scmp.ne.s32.totalorder %s89, %s91
      %p95 = scmp.eq.s32.totalorder %s34, 0
      %p96 = por %p94, %p95
      %p97 = scmp.ne.s32.totalorder %s89, %s91
      %p98 = scmp.eq.s32.totalorder %s39, 1
      %p99 = por %p97, %p98
      %p100 = scmp.ne.s32.totalorder %s91, %s92
      %p101 = scmp.eq.s32.totalorder %s39, 0
      %p102 = por %p100, %p101
      %p103 = scmp.ne.s32.totalorder %s91, %s92
      %p104 = scmp.eq.s32.totalorder %s40, 1
      %p105 = por %p103, %p104
      %p107 = scmp.ne.s32.totalorder %s92, %s106
      %p108 = scmp.eq.s32.totalorder %s40, 0
      %p109 = por %p107, %p108
      %s111 = sadd.s32 %s110, 1
      %p114 = scmp.eq.s32.totalorder %s34, 1
      %p115 = scmp.ne.s32.totalorder %s110, %s112
      %p116 = scmp.eq.s32.totalorder %s34, 0
      %p117 = por %p115, %p116
      %p118 = scmp.ne.s32.totalorder %s110, %s112
      %p119 = scmp.eq.s32.totalorder %s39, 1
      %p120 = por %p118, %p119
      %p121 = scmp.ne.s32.totalorder %s112, %s113
      %p122 = scmp.eq.s32.totalorder %s39, 0
      %p123 = por %p121, %p122
      %p124 = scmp.ne.s32.totalorder %s112, %s113
      %p125 = scmp.eq.s32.totalorder %s40, 1
      %p126 = por %p124, %p125
      %p128 = scmp.ne.s32.totalorder %s113, %s127
      %p129 = scmp.eq.s32.totalorder %s40, 0
      %p130 = por %p128, %p129
      %s132 = sadd.s32 %s131, 1
      %p135 = scmp.eq.s32.totalorder %s34, 1
      %p136 = scmp.ne.s32.totalorder %s131, %s133
      %p137 = scmp.eq.s32.totalorder %s34, 0
      %p138 = por %p136, %p137
      %p139 = scmp.ne.s32.totalorder %s131, %s133
      %p140 = scmp.eq.s32.totalorder %s39, 1
      %p141 = por %p139, %p140
      %p142 = scmp.ne.s32.totalorder %s133, %s134
      %p143 = scmp.eq.s32.totalorder %s39, 0
      %p144 = por %p142, %p143
      %p145 = scmp.ne.s32.totalorder %s133, %s134
      %p146 = scmp.eq.s32.totalorder %s40, 1
      %p147 = por %p145, %p146
      %p149 = scmp.ne.s32.totalorder %s134, %s148
      %p150 = scmp.eq.s32.totalorder %s40, 0
      %p151 = por %p149, %p150
      %s153 = sadd.s32 %s152, 1
      %p156 = scmp.eq.s32.totalorder %s34, 1
      %p157 = scmp.ne.s32.totalorder %s152, %s154
      %p158 = scmp.eq.s32.totalorder %s34, 0
      %p159 = por %p157, %p158
      %p160 = scmp.ne.s32.totalorder %s152, %s154
      %p161 = scmp.eq.s32.totalorder %s39, 1
      %p162 = por %p160, %p161
      %p163 = scmp.ne.s32.totalorder %s154, %s155
      %p164 = scmp.eq.s32.totalorder %s39, 0
      %p165 = por %p163, %p164
      %p166 = scmp.ne.s32.totalorder %s154, %s155
      %p167 = scmp.eq.s32.totalorder %s40, 1
      %p168 = por %p166, %p167
      %p170 = scmp.ne.s32.totalorder %s155, %s169
      %p171 = scmp.eq.s32.totalorder %s40, 0
      %p172 = por %p170, %p171
      %s174 = sadd.s32 %s173, 1
      %p177 = scmp.eq.s32.totalorder %s34, 1
      %p178 = scmp.ne.s32.totalorder %s173, %s175
      %p179 = scmp.eq.s32.totalorder %s34, 0
      %p180 = por %p178, %p179
      %p181 = scmp.ne.s32.totalorder %s173, %s175
      %p182 = scmp.eq.s32.totalorder %s39, 1
      %p183 = por %p181, %p182
      %p184 = scmp.ne.s32.totalorder %s175, %s176
      %p185 = scmp.eq.s32.totalorder %s39, 0
      %p186 = por %p184, %p185
      %p187 = scmp.ne.s32.totalorder %s175, %s176
      %p188 = scmp.eq.s32.totalorder %s40, 1
      %p189 = por %p187, %p188
      %p191 = scmp.ne.s32.totalorder %s176, %s190
      %p192 = scmp.eq.s32.totalorder %s40, 0
      %p193 = por %p191, %p192
      %s195 = sadd.s32 %s194, 1
      %p198 = scmp.eq.s32.totalorder %s34, 1
      %p199 = scmp.ne.s32.totalorder %s194, %s196
      %p200 = scmp.eq.s32.totalorder %s34, 0
      %p201 = por %p199, %p200
      %p202 = scmp.ne.s32.totalorder %s194, %s196
      %p203 = scmp.eq.s32.totalorder %s39, 1
      %p204 = por %p202, %p203
      %p205 = scmp.ne.s32.totalorder %s196, %s197
      %p206 = scmp.eq.s32.totalorder %s39, 0
      %p207 = por %p205, %p206
      %p208 = scmp.ne.s32.totalorder %s196, %s197
      %p209 = scmp.eq.s32.totalorder %s40, 1
      %p210 = por %p208, %p209
      %p212 = scmp.ne.s32.totalorder %s197, %s211
      %p213 = scmp.eq.s32.totalorder %s40, 0
      %p214 = por %p212, %p213
      %s216 = sadd.s32 %s215, 1
      %p219 = scmp.eq.s32.totalorder %s34, 1
      %p220 = scmp.ne.s32.totalorder %s215, %s217
      %p221 = scmp.eq.s32.totalorder %s34, 0
      %p222 = por %p220, %p221
      %p223 = scmp.ne.s32.totalorder %s215, %s217
      %p224 = scmp.eq.s32.totalorder %s39, 1
      %p225 = por %p223, %p224
      %p226 = scmp.ne.s32.totalorder %s217, %s218
      %p227 = scmp.eq.s32.totalorder %s39, 0
      %p228 = por %p226, %p227
      %p229 = scmp.ne.s32.totalorder %s217, %s218
      %p230 = scmp.eq.s32.totalorder %s40, 1
      %p231 = por %p229, %p230
      %p233 = scmp.ne.s32.totalorder %s218, %s232
      %p234 = scmp.eq.s32.totalorder %s40, 0
      %p235 = por %p233, %p234
      %s237 = sadd.s32 %s236, 1
      %p240 = scmp.eq.s32.totalorder %s34, 1
      %p241 = scmp.ne.s32.totalorder %s236, %s238
      %p242 = scmp.eq.s32.totalorder %s34, 0
      %p243 = por %p241, %p242
      %p244 = scmp.ne.s32.totalorder %s236, %s238
      %p245 = scmp.eq.s32.totalorder %s39, 1
      %p246 = por %p244, %p245
      %p247 = scmp.ne.s32.totalorder %s238, %s239
      %p248 = scmp.eq.s32.totalorder %s39, 0
      %p249 = por %p247, %p248
      %p250 = scmp.ne.s32.totalorder %s238, %s239
      %p251 = scmp.eq.s32.totalorder %s40, 1
      %p252 = por %p250, %p251
      %p254 = scmp.ne.s32.totalorder %s239, %s253
      %p255 = scmp.eq.s32.totalorder %s40, 0
      %p256 = por %p254, %p255
      %s258 = sadd.s32 %s257, 1
      %p261 = scmp.eq.s32.totalorder %s34, 1
      %p262 = scmp.ne.s32.totalorder %s257, %s259
      %p263 = scmp.eq.s32.totalorder %s34, 0
      %p264 = por %p262, %p263
      %p265 = scmp.ne.s32.totalorder %s257, %s259
      %p266 = scmp.eq.s32.totalorder %s39, 1
      %p267 = por %p265, %p266
      %p268 = scmp.ne.s32.totalorder %s259, %s260
      %p269 = scmp.eq.s32.totalorder %s39, 0
      %p270 = por %p268, %p269
      %p271 = scmp.ne.s32.totalorder %s259, %s260
      %p272 = scmp.eq.s32.totalorder %s40, 1
      %p273 = por %p271, %p272
      %p275 = scmp.ne.s32.totalorder %s260, %s274
      %p276 = scmp.eq.s32.totalorder %s40, 0
      %p277 = por %p275, %p276
      %s279 = sadd.s32 %s278, 1
      %p282 = scmp.eq.s32.totalorder %s34, 1
      %p283 = scmp.ne.s32.totalorder %s278, %s280
      %p284 = scmp.eq.s32.totalorder %s34, 0
      %p285 = por %p283, %p284
      %p286 = scmp.ne.s32.totalorder %s278, %s280
      %p287 = scmp.eq.s32.totalorder %s39, 1
      %p288 = por %p286, %p287
      %p289 = scmp.ne.s32.totalorder %s280, %s281
      %p290 = scmp.eq.s32.totalorder %s39, 0
      %p291 = por %p289, %p290
      %p292 = scmp.ne.s32.totalorder %s280, %s281
      %p293 = scmp.eq.s32.totalorder %s40, 1
      %p294 = por %p292, %p293
      %p296 = scmp.ne.s32.totalorder %s281, %s295
      %p297 = scmp.eq.s32.totalorder %s40, 0
      %p298 = por %p296, %p297
      %s300 = sadd.s32 %s299, 1
      %p303 = scmp.eq.s32.totalorder %s34, 1
      %p304 = scmp.ne.s32.totalorder %s299, %s301
      %p305 = scmp.eq.s32.totalorder %s34, 0
      %p306 = por %p304, %p305
      %p307 = scmp.ne.s32.totalorder %s299, %s301
      %p308 = scmp.eq.s32.totalorder %s39, 1
      %p309 = por %p307, %p308
      %p310 = scmp.ne.s32.totalorder %s301, %s302
      %p311 = scmp.eq.s32.totalorder %s39, 0
      %p312 = por %p310, %p311
      %p313 = scmp.ne.s32.totalorder %s301, %s302
      %p314 = scmp.eq.s32.totalorder %s40, 1
      %p315 = por %p313, %p314
      %p317 = scmp.ne.s32.totalorder %s302, %s316
      %p318 = scmp.eq.s32.totalorder %s40, 0
      %p319 = por %p317, %p318
      %s321 = sadd.s32 %s320, 1
      %p324 = scmp.eq.s32.totalorder %s34, 1
      %p325 = scmp.ne.s32.totalorder %s320, %s322
      %p326 = scmp.eq.s32.totalorder %s34, 0
      %p327 = por %p325, %p326
      %p328 = scmp.ne.s32.totalorder %s320, %s322
      %p329 = scmp.eq.s32.totalorder %s39, 1
      %p330 = por %p328, %p329
      %p331 = scmp.ne.s32.totalorder %s322, %s323
      %p332 = scmp.eq.s32.totalorder %s39, 0
      %p333 = por %p331, %p332
      %p334 = scmp.ne.s32.totalorder %s322, %s323
      %p335 = scmp.eq.s32.totalorder %s40, 1
      %p336 = por %p334, %p335
      %p338 = scmp.ne.s32.totalorder %s323, %s337
      %p339 = scmp.eq.s32.totalorder %s40, 0
      %p340 = por %p338, %p339
      %s342 = sadd.s32 %s341, 1
      %p345 = scmp.eq.s32.totalorder %s34, 1
      %p346 = scmp.ne.s32.totalorder %s341, %s343
      %p347 = scmp.eq.s32.totalorder %s34, 0
      %p348 = por %p346, %p347
      %p349 = scmp.ne.s32.totalorder %s341, %s343
      %p350 = scmp.eq.s32.totalorder %s39, 1
      %p351 = por %p349, %p350
      %p352 = scmp.ne.s32.totalorder %s343, %s344
      %p353 = scmp.eq.s32.totalorder %s39, 0
      %p354 = por %p352, %p353
      %p355 = scmp.ne.s32.totalorder %s343, %s344
      %p356 = scmp.eq.s32.totalorder %s40, 1
      %p357 = por %p355, %p356
      %p359 = scmp.ne.s32.totalorder %s344, %s358
      %p360 = scmp.eq.s32.totalorder %s40, 0
      %p361 = por %p359, %p360
      %s363 = sadd.s32 %s362, 1
      %p366 = scmp.eq.s32.totalorder %s34, 1
      %p367 = scmp.ne.s32.totalorder %s362, %s364
      %p368 = scmp.eq.s32.totalorder %s34, 0
      %p369 = por %p367, %p368
      %p370 = scmp.ne.s32.totalorder %s362, %s364
      %p371 = scmp.eq.s32.totalorder %s39, 1
      %p372 = por %p370, %p371
      %p373 = scmp.ne.s32.totalorder %s364, %s365
      %p374 = scmp.eq.s32.totalorder %s39, 0
      %p375 = por %p373, %p374
      %p376 = scmp.ne.s32.totalorder %s364, %s365
      %p377 = scmp.eq.s32.totalorder %s40, 1
      %p378 = por %p376, %p377
      %p380 = scmp.ne.s32.totalorder %s365, %s379
      %p381 = scmp.eq.s32.totalorder %s40, 0
      %p382 = por %p380, %p381
      %s384 = sadd.s32 %s383, 1
      %p387 = scmp.eq.s32.totalorder %s34, 1
      %p388 = scmp.ne.s32.totalorder %s383, %s385
      %p389 = scmp.eq.s32.totalorder %s34, 0
      %p390 = por %p388, %p389
      %p391 = scmp.ne.s32.totalorder %s383, %s385
      %p392 = scmp.eq.s32.totalorder %s39, 1
      %p393 = por %p391, %p392
      %p394 = scmp.ne.s32.totalorder %s385, %s386
      %p395 = scmp.eq.s32.totalorder %s39, 0
      %p396 = por %p394, %p395
      %p397 = scmp.ne.s32.totalorder %s385, %s386
      %p398 = scmp.eq.s32.totalorder %s40, 1
      %p399 = por %p397, %p398
      %p401 = scmp.ne.s32.totalorder %s386, %s400
      %p402 = scmp.eq.s32.totalorder %s40, 0
      %p403 = por %p401, %p402
      %s405 = sadd.s32 %s404, 1
      %p408 = scmp.eq.s32.totalorder %s34, 1
      %p409 = scmp.ne.s32.totalorder %s404, %s406
      %p410 = scmp.eq.s32.totalorder %s34, 0
      %p411 = por %p409, %p410
      %p412 = scmp.ne.s32.totalorder %s404, %s406
      %p413 = scmp.eq.s32.totalorder %s39, 1
      %p414 = por %p412, %p413
      %p415 = scmp.ne.s32.totalorder %s406, %s407
      %p416 = scmp.eq.s32.totalorder %s39, 0
      %p417 = por %p415, %p416
      %p418 = scmp.ne.s32.totalorder %s406, %s407
      %p419 = scmp.eq.s32.totalorder %s40, 1
      %p420 = por %p418, %p419
      %p422 = scmp.ne.s32.totalorder %s407, %s421
      %p423 = scmp.eq.s32.totalorder %s40, 0
      %p424 = por %p422, %p423
      %s426 = sadd.s32 %s425, 1
      %p429 = scmp.eq.s32.totalorder %s34, 1
      %p430 = scmp.ne.s32.totalorder %s425, %s427
      %p431 = scmp.eq.s32.totalorder %s34, 0
      %p432 = por %p430, %p431
      %p433 = scmp.ne.s32.totalorder %s425, %s427
      %p434 = scmp.eq.s32.totalorder %s39, 1
      %p435 = por %p433, %p434
      %p436 = scmp.ne.s32.totalorder %s427, %s428
      %p437 = scmp.eq.s32.totalorder %s39, 0
      %p438 = por %p436, %p437
      %p439 = scmp.ne.s32.totalorder %s427, %s428
      %p440 = scmp.eq.s32.totalorder %s40, 1
      %p441 = por %p439, %p440
      %p443 = scmp.ne.s32.totalorder %s428, %s442
      %p444 = scmp.eq.s32.totalorder %s40, 0
      %p445 = por %p443, %p444
      %s447 = sadd.s32 %s446, 1
      %p450 = scmp.eq.s32.totalorder %s34, 1
      %p451 = scmp.ne.s32.totalorder %s446, %s448
      %p452 = scmp.eq.s32.totalorder %s34, 0
      %p453 = por %p451, %p452
      %p454 = scmp.ne.s32.totalorder %s446, %s448
      %p455 = scmp.eq.s32.totalorder %s39, 1
      %p456 = por %p454, %p455
      %p457 = scmp.ne.s32.totalorder %s448, %s449
      %p458 = scmp.eq.s32.totalorder %s39, 0
      %p459 = por %p457, %p458
      %p460 = scmp.ne.s32.totalorder %s448, %s449
      %p461 = scmp.eq.s32.totalorder %s40, 1
      %p462 = por %p460, %p461
      %p464 = scmp.ne.s32.totalorder %s449, %s463
      %p465 = scmp.eq.s32.totalorder %s40, 0
      %p466 = por %p464, %p465
      %s468 = sadd.s32 %s467, 1
      %p471 = scmp.eq.s32.totalorder %s34, 1
      %p472 = scmp.ne.s32.totalorder %s467, %s469
      %p473 = scmp.eq.s32.totalorder %s34, 0
      %p474 = por %p472, %p473
      %p475 = scmp.ne.s32.totalorder %s467, %s469
      %p476 = scmp.eq.s32.totalorder %s39, 1
      %p477 = por %p475, %p476
      %p478 = scmp.ne.s32.totalorder %s469, %s470
      %p479 = scmp.eq.s32.totalorder %s39, 0
      %p480 = por %p478, %p479
      %p481 = scmp.ne.s32.totalorder %s469, %s470
      %p482 = scmp.eq.s32.totalorder %s40, 1
      %p483 = por %p481, %p482
      %p485 = scmp.ne.s32.totalorder %s470, %s484
      %p486 = scmp.eq.s32.totalorder %s40, 0
      %p487 = por %p485, %p486
      %s488 = ssub.s32 %s34, %s41
      %p489 = scmp.eq.s32.totalorder %s488, 0
      %s491 = sadd.s32 %s490, 1
      %s492 = scalar_select %p489, %s490, %s491
      %p495 = pneg %p489
      %p496 = scmp.eq.s32.totalorder %s34, 1
      %p497 = por %p495, %p496
      %p498 = scmp.ne.s32.totalorder %s490, %s493
      %p499 = scmp.eq.s32.totalorder %s34, 0
      %p500 = por %p498, %p499
      %p501 = scmp.ne.s32.totalorder %s490, %s493
      %p502 = scmp.eq.s32.totalorder %s39, 1
      %p503 = por %p501, %p502
      %p504 = scmp.ne.s32.totalorder %s493, %s494
      %p505 = scmp.eq.s32.totalorder %s39, 0
      %p506 = por %p504, %p505
      %p507 = scmp.ne.s32.totalorder %s493, %s494
      %p508 = scmp.eq.s32.totalorder %s40, 1
      %p509 = por %p507, %p508
      %p511 = scmp.ne.s32.totalorder %s494, %s510
      %p512 = scmp.eq.s32.totalorder %s40, 0
      %p513 = por %p511, %p512
      %s514 = ssub.s32 %s34, %s41
      %p515 = scmp.eq.s32.totalorder %s514, 0
      %s517 = sadd.s32 %s516, 1
      %s518 = scalar_select %p515, %s516, %s517
      %p521 = pneg %p515
      %p522 = scmp.eq.s32.totalorder %s34, 1
      %p523 = por %p521, %p522
      %p524 = scmp.ne.s32.totalorder %s516, %s519
      %p525 = scmp.eq.s32.totalorder %s34, 0
      %p526 = por %p524, %p525
      %p527 = scmp.ne.s32.totalorder %s516, %s519
      %p528 = scmp.eq.s32.totalorder %s39, 1
      %p529 = por %p527, %p528
      %p530 = scmp.ne.s32.totalorder %s519, %s520
      %p531 = scmp.eq.s32.totalorder %s39, 0
      %p532 = por %p530, %p531
      %p533 = scmp.ne.s32.totalorder %s519, %s520
      %p534 = scmp.eq.s32.totalorder %s40, 1
      %p535 = por %p533, %p534
      %p537 = scmp.ne.s32.totalorder %s520, %s536
      %p538 = scmp.eq.s32.totalorder %s40, 0
      %p539 = por %p537, %p538
      %p540 = scmp.le.s32.totalorder 1, %s34
      %p541 = scmp.lt.s32.totalorder %s34, 3
      %p542 = pnand %p540, %p541
      %p543 = pneg %p542
      // Predicated region
      $region9: #{forward.1} parent=5 // pred_check
        _
      $region10: #{forward.1} parent=5 // pred_check_branch
        %545 = sbr.rel (%p542) target = $region12
      $region11: #{forward.1} parent=5 // pred_region
        %s546 = ssub.s32 %s34, 1
        // Predicated region
        $region13: #{forward.1} parent=11 // pred_check
          %p547 = pneg %p81
        $region14: #{forward.1} parent=11 // pred_check_branch
          %549 = sbr.rel (%p547) target = $region16
        $region15: #{forward.1} parent=11 // pred_region
          _
        $region16: #{forward.1} parent=11 // pred_fallthru
          _
        // Predicated region
        $region17: #{forward.1} parent=11 // pred_check
          %p550 = pneg %p102
        $region18: #{forward.1} parent=11 // pred_check_branch
          %552 = sbr.rel (%p550) target = $region20
        $region19: #{forward.1} parent=11 // pred_region
          _
        $region20: #{forward.1} parent=11 // pred_fallthru
          _
        // Predicated region
        $region21: #{forward.1} parent=11 // pred_check
          %p553 = pneg %p123
        $region22: #{forward.1} parent=11 // pred_check_branch
          %555 = sbr.rel (%p553) target = $region24
        $region23: #{forward.1} parent=11 // pred_region
          %557 = vsyncadd [#allocation3], 0
          %s558 = sshll.u32 %s3, 4
          %s559 = int_to_ptr.hbm [resolvable:$true] %s558
          %s560 = sshll.u32 [#allocation2], 4
          %s561 = int_to_ptr.vmem [resolvable:$true] %s560
          %566 = dma.hbm_to_vmem [thread:$0]  %s559, 1024, %s561, [#allocation3], 64, 64, 4
        $region24: #{forward.1} parent=11 // pred_fallthru
          _
        // Predicated region
        $region25: #{forward.1} parent=11 // pred_check
          %p567 = pneg %p144
        $region26: #{forward.1} parent=11 // pred_check_branch
          %569 = sbr.rel (%p567) target = $region28
        $region27: #{forward.1} parent=11 // pred_region
          _
        $region28: #{forward.1} parent=11 // pred_fallthru
          _
        // Predicated region
        $region29: #{forward.1} parent=11 // pred_check
          %p570 = pneg %p165
        $region30: #{forward.1} parent=11 // pred_check_branch
          %572 = sbr.rel (%p570) target = $region32
        $region31: #{forward.1} parent=11 // pred_region
          %574 = vsyncadd [#allocation5], 0
          %s576 = sshll.u32 %s5, 4
          %s577 = int_to_ptr.hbm [resolvable:$true] %s576
          %s578 = sshll.u32 [#allocation4], 4
          %s579 = int_to_ptr.vmem [resolvable:$true] %s578
          %581 = dma.hbm_to_vmem [thread:$0]  %s577, 16, %s579, [#allocation5]
        $region32: #{forward.1} parent=11 // pred_fallthru
          _
        // Predicated region
        $region33: #{forward.1} parent=11 // pred_check
          %p582 = pneg %p186
        $region34: #{forward.1} parent=11 // pred_check_branch
          %584 = sbr.rel (%p582) target = $region36
        $region35: #{forward.1} parent=11 // pred_region
          %586 = vsyncadd [#allocation5], 0
          %s587 = sshll.u32 %s6, 4
          %s588 = int_to_ptr.hbm [resolvable:$true] %s587
          %s589 = sshll.u32 [#allocation6], 4
          %s590 = int_to_ptr.vmem [resolvable:$true] %s589
          %595 = dma.hbm_to_vmem [thread:$0]  %s588, 8192, %s590, [#allocation5], 256, 256, 16
        $region36: #{forward.1} parent=11 // pred_fallthru
          _
        // Predicated region
        $region37: #{forward.1} parent=11 // pred_check
          %p596 = pneg %p207
        $region38: #{forward.1} parent=11 // pred_check_branch
          %598 = sbr.rel (%p596) target = $region40
        $region39: #{forward.1} parent=11 // pred_region
          _
        $region40: #{forward.1} parent=11 // pred_fallthru
          _
        // Predicated region
        $region41: #{forward.1} parent=11 // pred_check
          %p599 = pneg %p228
        $region42: #{forward.1} parent=11 // pred_check_branch
          %601 = sbr.rel (%p599) target = $region44
        $region43: #{forward.1} parent=11 // pred_region
          _
        $region44: #{forward.1} parent=11 // pred_fallthru
          _
        // Predicated region
        $region45: #{forward.1} parent=11 // pred_check
          %p602 = pneg %p249
        $region46: #{forward.1} parent=11 // pred_check_branch
          %604 = sbr.rel (%p602) target = $region48
        $region47: #{forward.1} parent=11 // pred_region
          _
        $region48: #{forward.1} parent=11 // pred_fallthru
          _
        // Predicated region
        $region49: #{forward.1} parent=11 // pred_check
          %p605 = pneg %p270
        $region50: #{forward.1} parent=11 // pred_check_branch
          %607 = sbr.rel (%p605) target = $region52
        $region51: #{forward.1} parent=11 // pred_region
          _
        $region52: #{forward.1} parent=11 // pred_fallthru
          _
        // Predicated region
        $region53: #{forward.1} parent=11 // pred_check
          %p608 = pneg %p291
        $region54: #{forward.1} parent=11 // pred_check_branch
          %610 = sbr.rel (%p608) target = $region56
        $region55: #{forward.1} parent=11 // pred_region
          _
        $region56: #{forward.1} parent=11 // pred_fallthru
          _
        // Predicated region
        $region57: #{forward.1} parent=11 // pred_check
          %p611 = pneg %p312
        $region58: #{forward.1} parent=11 // pred_check_branch
          %613 = sbr.rel (%p611) target = $region60
        $region59: #{forward.1} parent=11 // pred_region
          _
        $region60: #{forward.1} parent=11 // pred_fallthru
          _
        // Predicated region
        $region61: #{forward.1} parent=11 // pred_check
          %p614 = pneg %p333
        $region62: #{forward.1} parent=11 // pred_check_branch
          %616 = sbr.rel (%p614) target = $region64
        $region63: #{forward.1} parent=11 // pred_region
          _
        $region64: #{forward.1} parent=11 // pred_fallthru
          _
        // Predicated region
        $region65: #{forward.1} parent=11 // pred_check
          %p617 = pneg %p354
        $region66: #{forward.1} parent=11 // pred_check_branch
          %619 = sbr.rel (%p617) target = $region68
        $region67: #{forward.1} parent=11 // pred_region
          _
        $region68: #{forward.1} parent=11 // pred_fallthru
          _
        // Predicated region
        $region69: #{forward.1} parent=11 // pred_check
          %p620 = pneg %p375
        $region70: #{forward.1} parent=11 // pred_check_branch
          %622 = sbr.rel (%p620) target = $region72
        $region71: #{forward.1} parent=11 // pred_region
          _
        $region72: #{forward.1} parent=11 // pred_fallthru
          _
        // Predicated region
        $region73: #{forward.1} parent=11 // pred_check
          %p623 = pneg %p396
        $region74: #{forward.1} parent=11 // pred_check_branch
          %625 = sbr.rel (%p623) target = $region76
        $region75: #{forward.1} parent=11 // pred_region
          %627 = vsyncadd [#allocation8], 0
          %s628 = sshll.u32 %s16, 4
          %s629 = int_to_ptr.hbm [resolvable:$true] %s628
          %s630 = sshll.u32 [#allocation7], 4
          %s631 = int_to_ptr.vmem [resolvable:$true] %s630
          %636 = dma.hbm_to_vmem [thread:$0]  %s629, 2048, %s631, [#allocation8], 128, 128, 8
        $region76: #{forward.1} parent=11 // pred_fallthru
          _
        // Predicated region
        $region77: #{forward.1} parent=11 // pred_check
          %p637 = pneg %p417
        $region78: #{forward.1} parent=11 // pred_check_branch
          %639 = sbr.rel (%p637) target = $region80
        $region79: #{forward.1} parent=11 // pred_region
          %641 = vsyncadd [#allocation8], 0
          %s643 = sshll.u32 %s17, 4
          %s644 = int_to_ptr.hbm [resolvable:$true] %s643
          %s645 = sshll.u32 [#allocation9], 4
          %s646 = int_to_ptr.vmem [resolvable:$true] %s645
          %648 = dma.hbm_to_vmem [thread:$0]  %s644, 16, %s646, [#allocation8]
        $region80: #{forward.1} parent=11 // pred_fallthru
          _
        // Predicated region
        $region81: #{forward.1} parent=11 // pred_check
          %p649 = pneg %p438
        $region82: #{forward.1} parent=11 // pred_check_branch
          %651 = sbr.rel (%p649) target = $region84
        $region83: #{forward.1} parent=11 // pred_region
          %653 = vsyncadd [#allocation11], 0
          %s655 = sshll.u32 %s18, 4
          %s656 = int_to_ptr.hbm [resolvable:$true] %s655
          %s657 = sshll.u32 [#allocation10], 4
          %s658 = int_to_ptr.vmem [resolvable:$true] %s657
          %660 = dma.hbm_to_vmem [thread:$0]  %s656, 16, %s658, [#allocation11]
        $region84: #{forward.1} parent=11 // pred_fallthru
          _
        // Predicated region
        $region85: #{forward.1} parent=11 // pred_check
          %p661 = pneg %p459
        $region86: #{forward.1} parent=11 // pred_check_branch
          %663 = sbr.rel (%p661) target = $region88
        $region87: #{forward.1} parent=11 // pred_region
          %665 = vsyncadd [#allocation11], 0
          %s666 = sshll.u32 %s19, 4
          %s667 = int_to_ptr.hbm [resolvable:$true] %s666
          %s668 = sshll.u32 [#allocation12], 4
          %s669 = int_to_ptr.vmem [resolvable:$true] %s668
          %674 = dma.hbm_to_vmem [thread:$0]  %s667, 1024, %s669, [#allocation11], 64, 64, 4
        $region88: #{forward.1} parent=11 // pred_fallthru
          _
        // Predicated region
        $region89: #{forward.1} parent=11 // pred_check
          %p675 = pneg %p480
        $region90: #{forward.1} parent=11 // pred_check_branch
          %677 = sbr.rel (%p675) target = $region92
        $region91: #{forward.1} parent=11 // pred_region
          %679 = vsyncadd [#allocation14], 0
          %s681 = sshll.u32 %s20, 4
          %s682 = int_to_ptr.hbm [resolvable:$true] %s681
          %s683 = sshll.u32 [#allocation13], 4
          %s684 = int_to_ptr.vmem [resolvable:$true] %s683
          %686 = dma.hbm_to_vmem [thread:$0]  %s682, 16, %s684, [#allocation14]
        $region92: #{forward.1} parent=11 // pred_fallthru
          _
      $region12: #{forward.1} parent=5 // pred_fallthru
        _
      %p687 = scmp.lt.s32.totalorder %s34, 2
      // Predicated region
      $region93: #{forward.1} parent=5 // pred_check
        %p688 = pneg %p687
      $region94: #{forward.1} parent=5 // pred_check_branch
        %690 = sbr.rel (%p688) target = $region96
      $region95: #{forward.1} parent=5 // pred_region
        // Predicated region
        $region97: #{forward.1} parent=95 // pred_check
          %p691 = pneg %p54
        $region98: #{forward.1} parent=95 // pred_check_branch
          %693 = sbr.rel (%p691) target = $region100
        $region99: #{forward.1} parent=95 // pred_region
          %p694 = scmp.lt.s32.totalorder %s34, 1
          %s695 = scalar_select %p694, %s34, 1
          %s696 = smul.addr %s695, 2
          %s697 = smul.addr %s696, 8
          %s698 = scalar_lea.vmem %s0, %s697
        $region100: #{forward.1} parent=95 // pred_fallthru
          _
      $region96: #{forward.1} parent=5 // pred_fallthru
        _
      %p699 = scmp.le.s32.totalorder 1, %s34
      %p700 = scmp.lt.s32.totalorder %s34, 3
      %p701 = pnand %p699, %p700
      %p702 = pneg %p701
      // Predicated region
      $region101: #{forward.1} parent=5 // pred_check
        _
      $region102: #{forward.1} parent=5 // pred_check_branch
        %704 = sbr.rel (%p701) target = $region104
      $region103: #{forward.1} parent=5 // pred_region
        %s705 = ssub.s32 %s34, 1
        // Predicated region
        $region105: #{forward.1} parent=103 // pred_check
          %p706 = pneg %p123
        $region106: #{forward.1} parent=103 // pred_check_branch
          %708 = sbr.rel (%p706) target = $region108
        $region107: #{forward.1} parent=103 // pred_region
          %710 = dma.done [#allocation3], 1024
        $region108: #{forward.1} parent=103 // pred_fallthru
          _
        // Predicated region
        $region109: #{forward.1} parent=103 // pred_check
          %p711 = pneg %p165
        $region110: #{forward.1} parent=103 // pred_check_branch
          %713 = sbr.rel (%p711) target = $region112
        $region111: #{forward.1} parent=103 // pred_region
          %715 = dma.done [#allocation5], 16
        $region112: #{forward.1} parent=103 // pred_fallthru
          _
        // Predicated region
        $region113: #{forward.1} parent=103 // pred_check
          %p716 = pneg %p186
        $region114: #{forward.1} parent=103 // pred_check_branch
          %718 = sbr.rel (%p716) target = $region116
        $region115: #{forward.1} parent=103 // pred_region
          %720 = dma.done [#allocation5], 8192
        $region116: #{forward.1} parent=103 // pred_fallthru
          _
        // Predicated region
        $region117: #{forward.1} parent=103 // pred_check
          %p721 = pneg %p396
        $region118: #{forward.1} parent=103 // pred_check_branch
          %723 = sbr.rel (%p721) target = $region120
        $region119: #{forward.1} parent=103 // pred_region
          %725 = dma.done [#allocation8], 2048
        $region120: #{forward.1} parent=103 // pred_fallthru
          _
        // Predicated region
        $region121: #{forward.1} parent=103 // pred_check
          %p726 = pneg %p417
        $region122: #{forward.1} parent=103 // pred_check_branch
          %728 = sbr.rel (%p726) target = $region124
        $region123: #{forward.1} parent=103 // pred_region
          %730 = dma.done [#allocation8], 16
        $region124: #{forward.1} parent=103 // pred_fallthru
          _
        // Predicated region
        $region125: #{forward.1} parent=103 // pred_check
          %p731 = pneg %p438
        $region126: #{forward.1} parent=103 // pred_check_branch
          %733 = sbr.rel (%p731) target = $region128
        $region127: #{forward.1} parent=103 // pred_region
          %735 = dma.done [#allocation11], 16
        $region128: #{forward.1} parent=103 // pred_fallthru
          _
        // Predicated region
        $region129: #{forward.1} parent=103 // pred_check
          %p736 = pneg %p459
        $region130: #{forward.1} parent=103 // pred_check_branch
          %738 = sbr.rel (%p736) target = $region132
        $region131: #{forward.1} parent=103 // pred_region
          %740 = dma.done [#allocation11], 1024
        $region132: #{forward.1} parent=103 // pred_fallthru
          _
        // Predicated region
        $region133: #{forward.1} parent=103 // pred_check
          %p741 = pneg %p480
        $region134: #{forward.1} parent=103 // pred_check_branch
          %743 = sbr.rel (%p741) target = $region136
        $region135: #{forward.1} parent=103 // pred_region
          %745 = dma.done [#allocation14], 16
        $region136: #{forward.1} parent=103 // pred_fallthru
          _
        %p746 = scmp.lt.s32.totalorder %s39, 1
        %s747 = scalar_select %p746, %s39, 1
        %s748 = smul.addr %s747, 2
        %s749 = smul.addr %s748, 8
        %s750 = scalar_lea.vmem %s0, %s749
        %p751 = pneg %p60
        %p752 = pneg %p57
        %p753 = pneg %p81
        %p754 = pneg %p78
        %p755 = pneg %p102
        %p756 = pneg %p99
        %p757 = pneg %p123
        %p758 = pneg %p120
        %p759 = pneg %p144
        %p760 = pneg %p141
        %p761 = pneg %p165
        %p762 = pneg %p162
        %p763 = pneg %p186
        %p764 = pneg %p183
        %p765 = pneg %p207
        %p766 = pneg %p204
        %p767 = pneg %p228
        %p768 = pneg %p225
        %p769 = pneg %p249
        %p770 = pneg %p246
        %p771 = pneg %p270
        %p772 = pneg %p267
        %p773 = pneg %p291
        %p774 = pneg %p288
        %p775 = pneg %p312
        %p776 = pneg %p309
        %p777 = pneg %p333
        %p778 = pneg %p330
        %p779 = pneg %p354
        %p780 = pneg %p351
        %p781 = pneg %p375
        %p782 = pneg %p372
        %p783 = pneg %p396
        %p784 = pneg %p393
        %p785 = pneg %p417
        %p786 = pneg %p414
        %p787 = pneg %p438
        %p788 = pneg %p435
        %p789 = pneg %p459
        %p790 = pneg %p456
        %p791 = pneg %p480
        %p792 = pneg %p477
        %p793 = pneg %p506
        %p794 = pneg %p503
        %p795 = scmp.lt.s32.totalorder %s39, 1
        %s796 = scalar_select %p795, %s39, 1
        %s797 = smul.addr %s796, 2
        %s798 = smul.addr %s797, 8
        %s799 = scalar_lea.vmem %s21, %s798
        %p800 = pneg %p532
        %p801 = pneg %p529
        %p802 = scmp.lt.s32.totalorder %s39, 1
        %s803 = scalar_select %p802, %s39, 1
        %s804 = scalar_lea.vmem %s22, %s803
        %p805 = scmp.lt.s32.totalorder %s39, 1
        %s806 = scalar_select %p805, %s39, 1
        %s807 = smul.addr %s806, 2
        %s808 = smul.addr %s807, 8
        %s809 = scalar_lea.vmem %s0, %s808
        %p810 = scmp.lt.s32.totalorder %s39, 1
        %s811 = scalar_select %p810, %s39, 1
        %s812 = smul.addr %s811, 2
        %s813 = smul.addr %s812, 8
        %s814 = scalar_lea.vmem %s21, %s813
        %p815 = scmp.lt.s32.totalorder %s39, 1
        %s816 = scalar_select %p815, %s39, 1
        %s817 = scalar_lea.vmem %s22, %s816
        %v818 = vlaneseq
        %v819 = vshrl.u32 %v818, 7
        %v820 = vadd.s32 %v819, 8
        %v821 = vlaneseq
        %v822 = vand.u32 %v821, 127
        %vm823 = vcmp.ge.s32.totalorder %v819, %v822
        %vm824 = vcmp.ge.s32.totalorder %v820, %v822
        %v825 = vsel %vm823, 1, 0
        %v826 = vsel %vm824, 1, 0
        %v827 = vcvt.s32.f32 %v825
        %v828 = vcvt.s32.f32 %v826
        %vm829 = vcmp.lt.s32.totalorder %v822, 32
        %v830 = vsel %vm829, 1, 0
        %v831 = vcvt.s32.f32 %v830
        %vm832 = vcmp.lt.s32.totalorder %v822, 4
        %v833 = vsel %vm832, 1, 0
        %v834 = vcvt.s32.f32 %v833
        %vm835 = vcmp.lt.s32.totalorder %v819, 9
        %vm836 = vcmp.lt.s32.totalorder %v820, 9
        %v837 = vsel %vm835, 1, 0
        %v838 = vsel %vm836, 1, 0
        %v839 = vcvt.s32.f32 %v837
        %v840 = vcvt.s32.f32 %v838
        %vm841 = vcmp.lt.s32.totalorder %v819, 8
        %vm842 = vcmp.lt.s32.totalorder %v820, 8
        %v843 = vsel %vm841, 1, 0
        %v844 = vsel %vm842, 1, 0
        %v845 = vcvt.s32.f32 %v843
        %v846 = vcvt.s32.f32 %v844
        %vm847 = vcmp.eq.s32.totalorder %v819, 8
        %vm848 = vcmp.eq.s32.totalorder %v820, 8
        %v849 = vsel %vm847, 1, 0
        %v850 = vsel %vm848, 1, 0
        %v851 = vcvt.s32.f32 %v849
        %v852 = vcvt.s32.f32 %v850
        %v853 = vld [vmem:[#allocation7] sm:$0xff]
        %v854 = vld [vmem:[#allocation7 + $0x8] sm:$0xff]
        %v855 = vld [vmem:[#allocation7 + $0x10] sm:$0xff]
        %v856 = vld [vmem:[#allocation7 + $0x18] sm:$0xff]
        %v857 = vld [vmem:[#allocation7 + $0x20] sm:$0xff]
        %v858 = vld [vmem:[#allocation7 + $0x28] sm:$0xff]
        %v859 = vld [vmem:[#allocation7 + $0x30] sm:$0xff]
        %v860 = vld [vmem:[#allocation7 + $0x38] sm:$0xff]
        %v861 = vld [vmem:[#allocation7 + $0x40] sm:$0xff]
        %v862 = vld [vmem:[#allocation7 + $0x48] sm:$0xff]
        %v863 = vld [vmem:[#allocation7 + $0x50] sm:$0xff]
        %v864 = vld [vmem:[#allocation7 + $0x58] sm:$0xff]
        %v865 = vld [vmem:[#allocation7 + $0x60] sm:$0xff]
        %v866 = vld [vmem:[#allocation7 + $0x68] sm:$0xff]
        %v867 = vld [vmem:[#allocation7 + $0x70] sm:$0xff]
        %v868 = vld [vmem:[#allocation7 + $0x78] sm:$0xff]
        %v869 = vld [vmem:[%s809] sm:$0xff]
        %v870 = vld [vmem:[%s809 + $0x8] sm:$0xff]
        %v871 = vpack.c.bf16 %v870, %v869
        %v872 = vld [vmem:[%s1] sm:$0xf]
        %v873 = vld [vmem:[%s1 + $0x4] sm:$0xf]
        %v874 = vld [vmem:[%s1 + $0x8] sm:$0xf]
        %v875 = vld [vmem:[%s1 + $0xc] sm:$0xf]
        %v876 = vld [vmem:[%s1 + $0x10] sm:$0xf]
        %v877 = vld [vmem:[%s1 + $0x14] sm:$0xf]
        %v878 = vld [vmem:[%s1 + $0x18] sm:$0xf]
        %v879 = vld [vmem:[%s1 + $0x1c] sm:$0xf]
        %v880 = vld [vmem:[%s1 + $0x20] sm:$0xf]
        %v881 = vld [vmem:[%s1 + $0x24] sm:$0xf]
        %v882 = vld [vmem:[%s1 + $0x28] sm:$0xf]
        %v883 = vld [vmem:[%s1 + $0x2c] sm:$0xf]
        %v884 = vld [vmem:[%s1 + $0x30] sm:$0xf]
        %v885 = vld [vmem:[%s1 + $0x34] sm:$0xf]
        %v886 = vld [vmem:[%s1 + $0x38] sm:$0xf]
        %v887 = vld [vmem:[%s1 + $0x3c] sm:$0xf]
        %v888 = vld [vmem:[%s2] sm:$0x1]
        %v890 = vperm.slane %v888, 0
        %v908 = vunpack.c.l.b16 %v872
        %v909 = vunpack.c.l.b16 %v873
        %v910 = vunpack.c.l.b16 %v874
        %v911 = vunpack.c.l.b16 %v875
        %v912 = vunpack.c.l.b16 %v876
        %v913 = vunpack.c.l.b16 %v877
        %v914 = vunpack.c.l.b16 %v878
        %v915 = vunpack.c.l.b16 %v879
        %v916 = vunpack.c.l.b16 %v880
        %v917 = vunpack.c.l.b16 %v881
        %v918 = vunpack.c.l.b16 %v882
        %v919 = vunpack.c.l.b16 %v883
        %v920 = vunpack.c.l.b16 %v884
        %v921 = vunpack.c.l.b16 %v885
        %v922 = vunpack.c.l.b16 %v886
        %v923 = vunpack.c.l.b16 %v887
        %v924 = vpack.c.b16 %v909, %v908
        %v925 = vpack.c.b16 %v911, %v910
        %v926 = vpack.c.b16 %v913, %v912
        %v927 = vpack.c.b16 %v915, %v914
        %v928 = vpack.c.b16 %v917, %v916
        %v929 = vpack.c.b16 %v919, %v918
        %v930 = vpack.c.b16 %v921, %v920
        %v931 = vpack.c.b16 %v923, %v922
        %940 = vmatpush.bf16.msra.mxu0 %v931
        %941 = vmatpush.bf16.msra.mxu0 %v930
        %942 = vmatpush.bf16.msra.mxu0 %v929
        %943 = vmatpush.bf16.msra.mxu0 %v928
        %944 = vmatpush.bf16.msra.mxu0 %v927
        %945 = vmatpush.bf16.msra.mxu0 %v926
        %946 = vmatpush.bf16.msra.mxu0 %v925
        %947 = vmatpush.bf16.msra.mxu0 %v924
        %948 = vmatmul.bf16.gmra.mxu0 %v871
        %v949 = vpop.f32.mrf.mxu0
        %v950 = vadd.f32 %v890, %v949
        %v951 = vpop.f32.mrf.mxu0
        %v952 = vadd.f32 %v890, %v951
        %953 = vdwg.mxu0
        %v954 = vmul.f32 %v950, 0.5
        %v955 = vmul.f32 %v952, 0.5
        %v956 = vmul.f32 %v950, 0.70710677
        %v957 = vmul.f32 %v952, 0.70710677
        %vm958 = vcmp.ge.f32.partialorder %v956, 0.0
        %vm959 = vcmp.ge.f32.partialorder %v957, 0.0
        %v960 = vsel %vm958, 1.0, -1.0
        %v961 = vsel %vm959, 1.0, -1.0
        %v962 = vand.u32 2147483647, %v956
        %v963 = vand.u32 2147483647, %v957
        %v964 = vmul.f32 %v962, 0.3275911
        %v965 = vmul.f32 %v963, 0.3275911
        %v966 = vadd.f32 %v964, 1.0
        %v967 = vadd.f32 %v965, 1.0
        %v968 = vrcp.pop %v966
        %v969 = vmul.f32 %v966, %v968
        %v970 = vsub.f32 1.0, %v969
        %v971 = vmul.f32 %v968, %v970
        %v972 = vadd.f32 %v968, %v971
        %vm973 = vweird.f32 %v966
        %vm974 = vweird.f32 %v968
        %vm975 = vmor %vm973, %vm974
        %v976 = vsel %vm975, %v968, %v972
        %v977 = vand.u32 2147483647, %v966
        %vm978 = vcmp.eq.f32.partialorder %v977, 8.507059e+37
        %v979 = vand.u32 %v966, 2147483648
        %v980 = vor.u32 1.1754944e-38, %v979
        %v981 = vsel %vm978, %v980, %v976
        %v982 = vmul.f32 1.0, %v981
        %v983 = vrcp.pop %v967
        %v984 = vmul.f32 %v967, %v983
        %v985 = vsub.f32 1.0, %v984
        %v986 = vmul.f32 %v983, %v985
        %v987 = vadd.f32 %v983, %v986
        %vm988 = vweird.f32 %v967
        %vm989 = vweird.f32 %v983
        %vm990 = vmor %vm988, %vm989
        %v991 = vsel %vm990, %v983, %v987
        %v992 = vand.u32 2147483647, %v967
        %vm993 = vcmp.eq.f32.partialorder %v992, 8.507059e+37
        %v994 = vand.u32 %v967, 2147483648
        %v995 = vor.u32 1.1754944e-38, %v994
        %v996 = vsel %vm993, %v995, %v991
        %v997 = vmul.f32 1.0, %v996
        %v998 = vmul.f32 %v982, 1.0614054
        %v999 = vmul.f32 %v997, 1.0614054
        %v1000 = vadd.f32 %v998, -1.4531521
        %v1001 = vadd.f32 %v999, -1.4531521
        %v1002 = vmul.f32 %v1000, %v982
        %v1003 = vmul.f32 %v1001, %v997
        %v1004 = vadd.f32 %v1002, 1.4214138
        %v1005 = vadd.f32 %v1003, 1.4214138
        %v1006 = vmul.f32 %v1004, %v982
        %v1007 = vmul.f32 %v1005, %v997
        %v1008 = vadd.f32 %v1006, -0.28449672
        %v1009 = vadd.f32 %v1007, -0.28449672
        %v1010 = vmul.f32 %v1008, %v982
        %v1011 = vmul.f32 %v1009, %v997
        %v1012 = vadd.f32 %v1010, 0.2548296
        %v1013 = vadd.f32 %v1011, 0.2548296
        %v1014 = vmul.f32 %v1012, %v982
        %v1015 = vmul.f32 %v1013, %v997
        %v1016 = vsub.f32 0.0, %v962
        %v1017 = vsub.f32 0.0, %v963
        %v1018 = vmul.f32 %v1016, %v962
        %v1019 = vmul.f32 %v1017, %v963
        %v1020 = vmul.f32 %v1018, 1.442695
        %v1021 = vpow.pop %v1020
        %v1022 = vmul.f32 %v1019, 1.442695
        %v1023 = vpow.pop %v1022
        %v1024 = vmul.f32 %v1014, %v1021
        %v1025 = vmul.f32 %v1015, %v1023
        %v1026 = vsub.f32 1.0, %v1024
        %v1027 = vsub.f32 1.0, %v1025
        %v1028 = vmul.f32 %v960, %v1026
        %v1029 = vmul.f32 %v961, %v1027
        %v1030 = vadd.f32 %v1028, 1.0
        %v1031 = vadd.f32 %v1029, 1.0
        %v1032 = vmul.f32 %v954, %v1030
        %v1033 = vmul.f32 %v955, %v1031
        %v1034 = vpack.c.bf16 %v1033, %v1032
        %v1035 = vld [vmem:[#allocation2] sm:$0xf]
        %v1036 = vld [vmem:[#allocation2 + $0x4] sm:$0xf]
        %v1037 = vld [vmem:[#allocation2 + $0x8] sm:$0xf]
        %v1038 = vld [vmem:[#allocation2 + $0xc] sm:$0xf]
        %v1039 = vld [vmem:[#allocation2 + $0x10] sm:$0xf]
        %v1040 = vld [vmem:[#allocation2 + $0x14] sm:$0xf]
        %v1041 = vld [vmem:[#allocation2 + $0x18] sm:$0xf]
        %v1042 = vld [vmem:[#allocation2 + $0x1c] sm:$0xf]
        %v1043 = vld [vmem:[#allocation2 + $0x20] sm:$0xf]
        %v1044 = vld [vmem:[#allocation2 + $0x24] sm:$0xf]
        %v1045 = vld [vmem:[#allocation2 + $0x28] sm:$0xf]
        %v1046 = vld [vmem:[#allocation2 + $0x2c] sm:$0xf]
        %v1047 = vld [vmem:[#allocation2 + $0x30] sm:$0xf]
        %v1048 = vld [vmem:[#allocation2 + $0x34] sm:$0xf]
        %v1049 = vld [vmem:[#allocation2 + $0x38] sm:$0xf]
        %v1050 = vld [vmem:[#allocation2 + $0x3c] sm:$0xf]
        %v1051 = vld [vmem:[%s4] sm:$0x1]
        %v1053 = vperm.slane %v1051, 0
        %v1071 = vunpack.c.l.b16 %v1035
        %v1072 = vunpack.c.l.b16 %v1036
        %v1073 = vunpack.c.l.b16 %v1037
        %v1074 = vunpack.c.l.b16 %v1038
        %v1075 = vunpack.c.l.b16 %v1039
        %v1076 = vunpack.c.l.b16 %v1040
        %v1077 = vunpack.c.l.b16 %v1041
        %v1078 = vunpack.c.l.b16 %v1042
        %v1079 = vunpack.c.l.b16 %v1043
        %v1080 = vunpack.c.l.b16 %v1044
        %v1081 = vunpack.c.l.b16 %v1045
        %v1082 = vunpack.c.l.b16 %v1046
        %v1083 = vunpack.c.l.b16 %v1047
        %v1084 = vunpack.c.l.b16 %v1048
        %v1085 = vunpack.c.l.b16 %v1049
        %v1086 = vunpack.c.l.b16 %v1050
        %v1087 = vpack.c.b16 %v1072, %v1071
        %v1088 = vpack.c.b16 %v1074, %v1073
        %v1089 = vpack.c.b16 %v1076, %v1075
        %v1090 = vpack.c.b16 %v1078, %v1077
        %v1091 = vpack.c.b16 %v1080, %v1079
        %v1092 = vpack.c.b16 %v1082, %v1081
        %v1093 = vpack.c.b16 %v1084, %v1083
        %v1094 = vpack.c.b16 %v1086, %v1085
        %1103 = vmatpush.bf16.msra.mxu0 %v1094
        %1104 = vmatpush.bf16.msra.mxu0 %v1093
        %1105 = vmatpush.bf16.msra.mxu0 %v1092
        %1106 = vmatpush.bf16.msra.mxu0 %v1091
        %1107 = vmatpush.bf16.msra.mxu0 %v1090
        %1108 = vmatpush.bf16.msra.mxu0 %v1089
        %1109 = vmatpush.bf16.msra.mxu0 %v1088
        %1110 = vmatpush.bf16.msra.mxu0 %v1087
        %1111 = vmatmul.bf16.gmra.mxu0 %v1034
        %v1112 = vpop.f32.mrf.mxu0
        %v1113 = vadd.f32 %v1053, %v1112
        %v1114 = vpop.f32.mrf.mxu0
        %v1115 = vadd.f32 %v1053, %v1114
        %1116 = vdwg.mxu0
        %v1117 = vmul.f32 %v1113, %v845
        %v1118 = vmul.f32 %v1115, %v846
        %v1119 = vld [vmem:[#allocation4] sm:$0x1]
        %v1121 = vperm.slane %v1119, 0
        %v1123 = vmul.f32 %v1121, %v851
        %v1124 = vmul.f32 %v1121, %v852
        %v1125 = vadd.f32 %v1117, %v1123
        %v1126 = vadd.f32 %v1118, %v1124
        %v1127 = vpack.c.bf16 %v1126, %v1125
        %v1128 = vld [vmem:[#allocation6] sm:$0xff]
        %v1129 = vld [vmem:[#allocation6 + $0x8] sm:$0xff]
        %v1130 = vld [vmem:[#allocation6 + $0x10] sm:$0xff]
        %v1131 = vld [vmem:[#allocation6 + $0x18] sm:$0xff]
        %v1132 = vld [vmem:[#allocation6 + $0x20] sm:$0xff]
        %v1133 = vld [vmem:[#allocation6 + $0x28] sm:$0xff]
        %v1134 = vld [vmem:[#allocation6 + $0x30] sm:$0xff]
        %v1135 = vld [vmem:[#allocation6 + $0x38] sm:$0xff]
        %v1136 = vld [vmem:[#allocation6 + $0x40] sm:$0xff]
        %v1137 = vld [vmem:[#allocation6 + $0x48] sm:$0xff]
        %v1138 = vld [vmem:[#allocation6 + $0x50] sm:$0xff]
        %v1139 = vld [vmem:[#allocation6 + $0x58] sm:$0xff]
        %v1140 = vld [vmem:[#allocation6 + $0x60] sm:$0xff]
        %v1141 = vld [vmem:[#allocation6 + $0x68] sm:$0xff]
        %v1142 = vld [vmem:[#allocation6 + $0x70] sm:$0xff]
        %v1143 = vld [vmem:[#allocation6 + $0x78] sm:$0xff]
        %v1144 = vld [vmem:[#allocation6 + $0x80] sm:$0xff]
        %v1145 = vld [vmem:[#allocation6 + $0x88] sm:$0xff]
        %v1146 = vld [vmem:[#allocation6 + $0x90] sm:$0xff]
        %v1147 = vld [vmem:[#allocation6 + $0x98] sm:$0xff]
        %v1148 = vld [vmem:[#allocation6 + $0xa0] sm:$0xff]
        %v1149 = vld [vmem:[#allocation6 + $0xa8] sm:$0xff]
        %v1150 = vld [vmem:[#allocation6 + $0xb0] sm:$0xff]
        %v1151 = vld [vmem:[#allocation6 + $0xb8] sm:$0xff]
        %v1152 = vld [vmem:[#allocation6 + $0xc0] sm:$0xff]
        %v1153 = vld [vmem:[#allocation6 + $0xc8] sm:$0xff]
        %v1154 = vld [vmem:[#allocation6 + $0xd0] sm:$0xff]
        %v1155 = vld [vmem:[#allocation6 + $0xd8] sm:$0xff]
        %v1156 = vld [vmem:[#allocation6 + $0xe0] sm:$0xff]
        %v1157 = vld [vmem:[#allocation6 + $0xe8] sm:$0xff]
        %v1158 = vld [vmem:[#allocation6 + $0xf0] sm:$0xff]
        %v1159 = vld [vmem:[#allocation6 + $0xf8] sm:$0xff]
        %v1192 = vunpack.c.l.b16 %v1128
        %v1193 = vunpack.c.h.b16 %v1128
        %v1194 = vunpack.c.l.b16 %v1129
        %v1195 = vunpack.c.h.b16 %v1129
        %v1196 = vunpack.c.l.b16 %v1130
        %v1197 = vunpack.c.h.b16 %v1130
        %v1198 = vunpack.c.l.b16 %v1131
        %v1199 = vunpack.c.h.b16 %v1131
        %v1200 = vunpack.c.l.b16 %v1132
        %v1201 = vunpack.c.h.b16 %v1132
        %v1202 = vunpack.c.l.b16 %v1133
        %v1203 = vunpack.c.h.b16 %v1133
        %v1204 = vunpack.c.l.b16 %v1134
        %v1205 = vunpack.c.h.b16 %v1134
        %v1206 = vunpack.c.l.b16 %v1135
        %v1207 = vunpack.c.h.b16 %v1135
        %v1208 = vunpack.c.l.b16 %v1136
        %v1209 = vunpack.c.h.b16 %v1136
        %v1210 = vunpack.c.l.b16 %v1137
        %v1211 = vunpack.c.h.b16 %v1137
        %v1212 = vunpack.c.l.b16 %v1138
        %v1213 = vunpack.c.h.b16 %v1138
        %v1214 = vunpack.c.l.b16 %v1139
        %v1215 = vunpack.c.h.b16 %v1139
        %v1216 = vunpack.c.l.b16 %v1140
        %v1217 = vunpack.c.h.b16 %v1140
        %v1218 = vunpack.c.l.b16 %v1141
        %v1219 = vunpack.c.h.b16 %v1141
        %v1220 = vunpack.c.l.b16 %v1142
        %v1221 = vunpack.c.h.b16 %v1142
        %v1222 = vunpack.c.l.b16 %v1143
        %v1223 = vunpack.c.h.b16 %v1143
        %v1224 = vunpack.c.l.b16 %v1144
        %v1225 = vunpack.c.h.b16 %v1144
        %v1226 = vunpack.c.l.b16 %v1145
        %v1227 = vunpack.c.h.b16 %v1145
        %v1228 = vunpack.c.l.b16 %v1146
        %v1229 = vunpack.c.h.b16 %v1146
        %v1230 = vunpack.c.l.b16 %v1147
        %v1231 = vunpack.c.h.b16 %v1147
        %v1232 = vunpack.c.l.b16 %v1148
        %v1233 = vunpack.c.h.b16 %v1148
        %v1234 = vunpack.c.l.b16 %v1149
        %v1235 = vunpack.c.h.b16 %v1149
        %v1236 = vunpack.c.l.b16 %v1150
        %v1237 = vunpack.c.h.b16 %v1150
        %v1238 = vunpack.c.l.b16 %v1151
        %v1239 = vunpack.c.h.b16 %v1151
        %v1240 = vunpack.c.l.b16 %v1152
        %v1241 = vunpack.c.h.b16 %v1152
        %v1242 = vunpack.c.l.b16 %v1153
        %v1243 = vunpack.c.h.b16 %v1153
        %v1244 = vunpack.c.l.b16 %v1154
        %v1245 = vunpack.c.h.b16 %v1154
        %v1246 = vunpack.c.l.b16 %v1155
        %v1247 = vunpack.c.h.b16 %v1155
        %v1248 = vunpack.c.l.b16 %v1156
        %v1249 = vunpack.c.h.b16 %v1156
        %v1250 = vunpack.c.l.b16 %v1157
        %v1251 = vunpack.c.h.b16 %v1157
        %v1252 = vunpack.c.l.b16 %v1158
        %v1253 = vunpack.c.h.b16 %v1158
        %v1254 = vunpack.c.l.b16 %v1159
        %v1255 = vunpack.c.h.b16 %v1159
        %v1256 = vpack.c.b16 %v1196, %v1192
        %v1257 = vpack.c.b16 %v1197, %v1193
        %v1258 = vpack.c.b16 %v1198, %v1194
        %v1259 = vpack.c.b16 %v1199, %v1195
        %v1260 = vpack.c.b16 %v1204, %v1200
        %v1261 = vpack.c.b16 %v1205, %v1201
        %v1262 = vpack.c.b16 %v1206, %v1202
        %v1263 = vpack.c.b16 %v1207, %v1203
        %v1264 = vpack.c.b16 %v1212, %v1208
        %v1265 = vpack.c.b16 %v1213, %v1209
        %v1266 = vpack.c.b16 %v1214, %v1210
        %v1267 = vpack.c.b16 %v1215, %v1211
        %v1268 = vpack.c.b16 %v1220, %v1216
        %v1269 = vpack.c.b16 %v1221, %v1217
        %v1270 = vpack.c.b16 %v1222, %v1218
        %v1271 = vpack.c.b16 %v1223, %v1219
        %v1272 = vpack.c.b16 %v1228, %v1224
        %v1273 = vpack.c.b16 %v1229, %v1225
        %v1274 = vpack.c.b16 %v1230, %v1226
        %v1275 = vpack.c.b16 %v1231, %v1227
        %v1276 = vpack.c.b16 %v1236, %v1232
        %v1277 = vpack.c.b16 %v1237, %v1233
        %v1278 = vpack.c.b16 %v1238, %v1234
        %v1279 = vpack.c.b16 %v1239, %v1235
        %v1280 = vpack.c.b16 %v1244, %v1240
        %v1281 = vpack.c.b16 %v1245, %v1241
        %v1282 = vpack.c.b16 %v1246, %v1242
        %v1283 = vpack.c.b16 %v1247, %v1243
        %v1284 = vpack.c.b16 %v1252, %v1248
        %v1285 = vpack.c.b16 %v1253, %v1249
        %v1286 = vpack.c.b16 %v1254, %v1250
        %v1287 = vpack.c.b16 %v1255, %v1251
        %1320 = vmatpush.bf16.msra.mxu0 %v1284
        %1321 = vmatpush.bf16.msra.mxu0 %v1280
        %1322 = vmatpush.bf16.msra.mxu0 %v1276
        %1323 = vmatpush.bf16.msra.mxu0 %v1272
        %1324 = vmatpush.bf16.msra.mxu0 %v1268
        %1325 = vmatpush.bf16.msra.mxu0 %v1264
        %1326 = vmatpush.bf16.msra.mxu0 %v1260
        %1327 = vmatpush.bf16.msra.mxu0 %v1256
        %1328 = vmatmul.bf16.gmra.mxu0 %v1127
        %v1329 = vpop.f32.mrf.mxu0
        %v1330 = vadd.f32 0.0, %v1329
        %v1331 = vpop.f32.mrf.mxu0
        %v1332 = vadd.f32 0.0, %v1331
        %1333 = vdwg.mxu0
        %1334 = vmatpush.bf16.msra.mxu0 %v1285
        %1335 = vmatpush.bf16.msra.mxu0 %v1281
        %1336 = vmatpush.bf16.msra.mxu0 %v1277
        %1337 = vmatpush.bf16.msra.mxu0 %v1273
        %1338 = vmatpush.bf16.msra.mxu0 %v1269
        %1339 = vmatpush.bf16.msra.mxu0 %v1265
        %1340 = vmatpush.bf16.msra.mxu0 %v1261
        %1341 = vmatpush.bf16.msra.mxu0 %v1257
        %1342 = vmatmul.bf16.gmra.mxu0 %v1127
        %v1343 = vpop.f32.mrf.mxu0
        %v1344 = vadd.f32 0.0, %v1343
        %v1345 = vpop.f32.mrf.mxu0
        %v1346 = vadd.f32 0.0, %v1345
        %1347 = vdwg.mxu0
        %1348 = vmatpush.bf16.msra.mxu0 %v1286
        %1349 = vmatpush.bf16.msra.mxu0 %v1282
        %1350 = vmatpush.bf16.msra.mxu0 %v1278
        %1351 = vmatpush.bf16.msra.mxu0 %v1274
        %1352 = vmatpush.bf16.msra.mxu0 %v1270
        %1353 = vmatpush.bf16.msra.mxu0 %v1266
        %1354 = vmatpush.bf16.msra.mxu0 %v1262
        %1355 = vmatpush.bf16.msra.mxu0 %v1258
        %1356 = vmatmul.bf16.gmra.mxu0 %v1127
        %v1357 = vpop.f32.mrf.mxu0
        %v1358 = vadd.f32 0.0, %v1357
        %v1359 = vpop.f32.mrf.mxu0
        %v1360 = vadd.f32 0.0, %v1359
        %1361 = vdwg.mxu0
        %1362 = vmatpush.bf16.msra.mxu0 %v1287
        %1363 = vmatpush.bf16.msra.mxu0 %v1283
        %1364 = vmatpush.bf16.msra.mxu0 %v1279
        %1365 = vmatpush.bf16.msra.mxu0 %v1275
        %1366 = vmatpush.bf16.msra.mxu0 %v1271
        %1367 = vmatpush.bf16.msra.mxu0 %v1267
        %1368 = vmatpush.bf16.msra.mxu0 %v1263
        %1369 = vmatpush.bf16.msra.mxu0 %v1259
        %1370 = vmatmul.bf16.gmra.mxu0 %v1127
        %v1371 = vpop.f32.mrf.mxu0
        %v1372 = vadd.f32 0.0, %v1371
        %v1373 = vpop.f32.mrf.mxu0
        %v1374 = vadd.f32 0.0, %v1373
        %1375 = vdwg.mxu0
        %v1376 = vld [vmem:[%s7] sm:$0xff]
        %v1377 = vld [vmem:[%s7 + $0x8] sm:$0xf]
        %v1380 = vperm.slane %v1376, 3
        %v1381 = vperm.slane %v1376, 7
        %v1382 = vperm.slane %v1377, 3
        %v1386 = vperm.slane %v1380, 3
        %v1387 = vperm.slane %v1381, 3
        %v1388 = vperm.slane %v1382, 3
        %v1389 = vmul.f32 %v1344, %v1386
        %v1390 = vmul.f32 %v1358, %v1387
        %v1391 = vmul.f32 %v1372, %v1388
        %v1392 = vmul.f32 %v1346, %v1386
        %v1393 = vmul.f32 %v1360, %v1387
        %v1394 = vmul.f32 %v1374, %v1388
        %v1395 = vrot.slane %v1344, 5
        %v1396 = vrot.slane %v1358, 5
        %v1397 = vrot.slane %v1372, 5
        %v1398 = vrot.slane %v1346, 5
        %v1399 = vrot.slane %v1360, 5
        %v1400 = vrot.slane %v1374, 5
        %vm1401 = vcmp.lt.s32.totalorder %v819, 3
        %v1402 = vsel %vm1401, %v1395, %v1398
        %v1403 = vsel %vm1401, %v1396, %v1399
        %v1404 = vsel %vm1401, %v1397, %v1400
        %v1405 = vsel %vm1401, %v1398, %v1395
        %v1406 = vsel %vm1401, %v1399, %v1396
        %v1407 = vsel %vm1401, %v1400, %v1397
        %vm1408 = vcmp.ge.s32.totalorder %v819, 3
        %vm1409 = vcmp.ge.s32.totalorder %v820, 3
        %v1410 = vsel %vm1408, %v1405, 0.0
        %v1411 = vsel %vm1408, %v1406, 0.0
        %v1412 = vsel %vm1408, %v1407, 0.0
        %v1413 = vsel %vm1409, %v1402, 0.0
        %v1414 = vsel %vm1409, %v1403, 0.0
        %v1415 = vsel %vm1409, %v1404, 0.0
        %v1416 = vperm.slane %v1376, 0
        %v1417 = vperm.slane %v1376, 4
        %v1418 = vperm.slane %v1377, 0
        %v1422 = vperm.slane %v1416, 0
        %v1423 = vperm.slane %v1417, 0
        %v1424 = vperm.slane %v1418, 0
        %v1425 = vmul.f32 %v1410, %v1422
        %v1426 = vmul.f32 %v1411, %v1423
        %v1427 = vmul.f32 %v1412, %v1424
        %v1428 = vmul.f32 %v1413, %v1422
        %v1429 = vmul.f32 %v1414, %v1423
        %v1430 = vmul.f32 %v1415, %v1424
        %v1431 = vadd.f32 %v1389, %v1425
        %v1432 = vadd.f32 %v1390, %v1426
        %v1433 = vadd.f32 %v1391, %v1427
        %v1434 = vadd.f32 %v1392, %v1428
        %v1435 = vadd.f32 %v1393, %v1429
        %v1436 = vadd.f32 %v1394, %v1430
        %v1437 = vrot.slane %v1344, 6
        %v1438 = vrot.slane %v1358, 6
        %v1439 = vrot.slane %v1372, 6
        %v1440 = vrot.slane %v1346, 6
        %v1441 = vrot.slane %v1360, 6
        %v1442 = vrot.slane %v1374, 6
        %vm1443 = vcmp.lt.s32.totalorder %v819, 2
        %v1444 = vsel %vm1443, %v1437, %v1440
        %v1445 = vsel %vm1443, %v1438, %v1441
        %v1446 = vsel %vm1443, %v1439, %v1442
        %v1447 = vsel %vm1443, %v1440, %v1437
        %v1448 = vsel %vm1443, %v1441, %v1438
        %v1449 = vsel %vm1443, %v1442, %v1439
        %vm1450 = vcmp.ge.s32.totalorder %v819, 2
        %vm1451 = vcmp.ge.s32.totalorder %v820, 2
        %v1452 = vsel %vm1450, %v1447, 0.0
        %v1453 = vsel %vm1450, %v1448, 0.0
        %v1454 = vsel %vm1450, %v1449, 0.0
        %v1455 = vsel %vm1451, %v1444, 0.0
        %v1456 = vsel %vm1451, %v1445, 0.0
        %v1457 = vsel %vm1451, %v1446, 0.0
        %v1458 = vperm.slane %v1376, 1
        %v1459 = vperm.slane %v1376, 5
        %v1460 = vperm.slane %v1377, 1
        %v1464 = vperm.slane %v1458, 1
        %v1465 = vperm.slane %v1459, 1
        %v1466 = vperm.slane %v1460, 1
        %v1467 = vmul.f32 %v1452, %v1464
        %v1468 = vmul.f32 %v1453, %v1465
        %v1469 = vmul.f32 %v1454, %v1466
        %v1470 = vmul.f32 %v1455, %v1464
        %v1471 = vmul.f32 %v1456, %v1465
        %v1472 = vmul.f32 %v1457, %v1466
        %v1473 = vadd.f32 %v1431, %v1467
        %v1474 = vadd.f32 %v1432, %v1468
        %v1475 = vadd.f32 %v1433, %v1469
        %v1476 = vadd.f32 %v1434, %v1470
        %v1477 = vadd.f32 %v1435, %v1471
        %v1478 = vadd.f32 %v1436, %v1472
        %v1479 = vrot.slane %v1344, 7
        %v1480 = vrot.slane %v1358, 7
        %v1481 = vrot.slane %v1372, 7
        %v1482 = vrot.slane %v1346, 7
        %v1483 = vrot.slane %v1360, 7
        %v1484 = vrot.slane %v1374, 7
        %vm1485 = vcmp.lt.s32.totalorder %v819, 1
        %v1486 = vsel %vm1485, %v1479, %v1482
        %v1487 = vsel %vm1485, %v1480, %v1483
        %v1488 = vsel %vm1485, %v1481, %v1484
        %v1489 = vsel %vm1485, %v1482, %v1479
        %v1490 = vsel %vm1485, %v1483, %v1480
        %v1491 = vsel %vm1485, %v1484, %v1481
        %vm1492 = vcmp.ge.s32.totalorder %v819, 1
        %vm1493 = vcmp.ge.s32.totalorder %v820, 1
        %v1494 = vsel %vm1492, %v1489, 0.0
        %v1495 = vsel %vm1492, %v1490, 0.0
        %v1496 = vsel %vm1492, %v1491, 0.0
        %v1497 = vsel %vm1493, %v1486, 0.0
        %v1498 = vsel %vm1493, %v1487, 0.0
        %v1499 = vsel %vm1493, %v1488, 0.0
        %v1500 = vperm.slane %v1376, 2
        %v1501 = vperm.slane %v1376, 6
        %v1502 = vperm.slane %v1377, 2
        %v1506 = vperm.slane %v1500, 2
        %v1507 = vperm.slane %v1501, 2
        %v1508 = vperm.slane %v1502, 2
        %v1509 = vmul.f32 %v1494, %v1506
        %v1510 = vmul.f32 %v1495, %v1507
        %v1511 = vmul.f32 %v1496, %v1508
        %v1512 = vmul.f32 %v1497, %v1506
        %v1513 = vmul.f32 %v1498, %v1507
        %v1514 = vmul.f32 %v1499, %v1508
        %v1515 = vadd.f32 %v1473, %v1509
        %v1516 = vadd.f32 %v1474, %v1510
        %v1517 = vadd.f32 %v1475, %v1511
        %v1518 = vadd.f32 %v1476, %v1512
        %v1519 = vadd.f32 %v1477, %v1513
        %v1520 = vadd.f32 %v1478, %v1514
        %v1521 = vld [vmem:[%s8] sm:$0x7]
        %v1523 = vperm.slane %v1521, 0
        %v1524 = vperm.slane %v1521, 1
        %v1525 = vperm.slane %v1521, 2
        %v1529 = vadd.f32 %v1515, %v1523
        %v1530 = vadd.f32 %v1516, %v1524
        %v1531 = vadd.f32 %v1517, %v1525
        %v1532 = vadd.f32 %v1518, %v1523
        %v1533 = vadd.f32 %v1519, %v1524
        %v1534 = vadd.f32 %v1520, %v1525
        %v1535 = vsub.f32 0.0, %v1529
        %v1536 = vsub.f32 0.0, %v1530
        %v1537 = vsub.f32 0.0, %v1531
        %v1538 = vsub.f32 0.0, %v1532
        %v1539 = vsub.f32 0.0, %v1533
        %v1540 = vsub.f32 0.0, %v1534
        %v1541 = vmul.f32 %v1535, 1.442695
        %v1542 = vpow.pop %v1541
        %v1543 = vmul.f32 %v1536, 1.442695
        %v1544 = vpow.pop %v1543
        %v1545 = vmul.f32 %v1537, 1.442695
        %v1546 = vpow.pop %v1545
        %v1547 = vmul.f32 %v1538, 1.442695
        %v1548 = vpow.pop %v1547
        %v1549 = vmul.f32 %v1539, 1.442695
        %v1550 = vpow.pop %v1549
        %v1551 = vmul.f32 %v1540, 1.442695
        %v1552 = vpow.pop %v1551
        %v1553 = vadd.f32 %v1542, 1.0
        %v1554 = vadd.f32 %v1544, 1.0
        %v1555 = vadd.f32 %v1546, 1.0
        %v1556 = vadd.f32 %v1548, 1.0
        %v1557 = vadd.f32 %v1550, 1.0
        %v1558 = vadd.f32 %v1552, 1.0
        %v1559 = vrcp.pop %v1553
        %v1560 = vmul.f32 %v1553, %v1559
        %v1561 = vsub.f32 1.0, %v1560
        %v1562 = vmul.f32 %v1559, %v1561
        %v1563 = vadd.f32 %v1559, %v1562
        %vm1564 = vweird.f32 %v1553
        %vm1565 = vweird.f32 %v1559
        %vm1566 = vmor %vm1564, %vm1565
        %v1567 = vsel %vm1566, %v1559, %v1563
        %v1568 = vand.u32 2147483647, %v1553
        %vm1569 = vcmp.eq.f32.partialorder %v1568, 8.507059e+37
        %v1570 = vand.u32 %v1553, 2147483648
        %v1571 = vor.u32 1.1754944e-38, %v1570
        %v1572 = vsel %vm1569, %v1571, %v1567
        %v1573 = vmul.f32 1.0, %v1572
        %v1574 = vrcp.pop %v1554
        %v1575 = vmul.f32 %v1554, %v1574
        %v1576 = vsub.f32 1.0, %v1575
        %v1577 = vmul.f32 %v1574, %v1576
        %v1578 = vadd.f32 %v1574, %v1577
        %vm1579 = vweird.f32 %v1554
        %vm1580 = vweird.f32 %v1574
        %vm1581 = vmor %vm1579, %vm1580
        %v1582 = vsel %vm1581, %v1574, %v1578
        %v1583 = vand.u32 2147483647, %v1554
        %vm1584 = vcmp.eq.f32.partialorder %v1583, 8.507059e+37
        %v1585 = vand.u32 %v1554, 2147483648
        %v1586 = vor.u32 1.1754944e-38, %v1585
        %v1587 = vsel %vm1584, %v1586, %v1582
        %v1588 = vmul.f32 1.0, %v1587
        %v1589 = vrcp.pop %v1555
        %v1590 = vmul.f32 %v1555, %v1589
        %v1591 = vsub.f32 1.0, %v1590
        %v1592 = vmul.f32 %v1589, %v1591
        %v1593 = vadd.f32 %v1589, %v1592
        %vm1594 = vweird.f32 %v1555
        %vm1595 = vweird.f32 %v1589
        %vm1596 = vmor %vm1594, %vm1595
        %v1597 = vsel %vm1596, %v1589, %v1593
        %v1598 = vand.u32 2147483647, %v1555
        %vm1599 = vcmp.eq.f32.partialorder %v1598, 8.507059e+37
        %v1600 = vand.u32 %v1555, 2147483648
        %v1601 = vor.u32 1.1754944e-38, %v1600
        %v1602 = vsel %vm1599, %v1601, %v1597
        %v1603 = vmul.f32 1.0, %v1602
        %v1604 = vrcp.pop %v1556
        %v1605 = vmul.f32 %v1556, %v1604
        %v1606 = vsub.f32 1.0, %v1605
        %v1607 = vmul.f32 %v1604, %v1606
        %v1608 = vadd.f32 %v1604, %v1607
        %vm1609 = vweird.f32 %v1556
        %vm1610 = vweird.f32 %v1604
        %vm1611 = vmor %vm1609, %vm1610
        %v1612 = vsel %vm1611, %v1604, %v1608
        %v1613 = vand.u32 2147483647, %v1556
        %vm1614 = vcmp.eq.f32.partialorder %v1613, 8.507059e+37
        %v1615 = vand.u32 %v1556, 2147483648
        %v1616 = vor.u32 1.1754944e-38, %v1615
        %v1617 = vsel %vm1614, %v1616, %v1612
        %v1618 = vmul.f32 1.0, %v1617
        %v1619 = vrcp.pop %v1557
        %v1620 = vmul.f32 %v1557, %v1619
        %v1621 = vsub.f32 1.0, %v1620
        %v1622 = vmul.f32 %v1619, %v1621
        %v1623 = vadd.f32 %v1619, %v1622
        %vm1624 = vweird.f32 %v1557
        %vm1625 = vweird.f32 %v1619
        %vm1626 = vmor %vm1624, %vm1625
        %v1627 = vsel %vm1626, %v1619, %v1623
        %v1628 = vand.u32 2147483647, %v1557
        %vm1629 = vcmp.eq.f32.partialorder %v1628, 8.507059e+37
        %v1630 = vand.u32 %v1557, 2147483648
        %v1631 = vor.u32 1.1754944e-38, %v1630
        %v1632 = vsel %vm1629, %v1631, %v1627
        %v1633 = vmul.f32 1.0, %v1632
        %v1634 = vrcp.pop %v1558
        %v1635 = vmul.f32 %v1558, %v1634
        %v1636 = vsub.f32 1.0, %v1635
        %v1637 = vmul.f32 %v1634, %v1636
        %v1638 = vadd.f32 %v1634, %v1637
        %vm1639 = vweird.f32 %v1558
        %vm1640 = vweird.f32 %v1634
        %vm1641 = vmor %vm1639, %vm1640
        %v1642 = vsel %vm1641, %v1634, %v1638
        %v1643 = vand.u32 2147483647, %v1558
        %vm1644 = vcmp.eq.f32.partialorder %v1643, 8.507059e+37
        %v1645 = vand.u32 %v1558, 2147483648
        %v1646 = vor.u32 1.1754944e-38, %v1645
        %v1647 = vsel %vm1644, %v1646, %v1642
        %v1648 = vmul.f32 1.0, %v1647
        %v1649 = vmul.f32 %v1529, %v1573
        %v1650 = vmul.f32 %v1530, %v1588
        %v1651 = vmul.f32 %v1531, %v1603
        %v1652 = vmul.f32 %v1532, %v1618
        %v1653 = vmul.f32 %v1533, %v1633
        %v1654 = vmul.f32 %v1534, %v1648
        %1655 = vrot.lane.b32.xlu0 %v1330, 64
        %v1656 = vpop.permute.xlu0 %1655
        %1657 = vrot.lane.b32.xlu0 %v1332, 64
        %v1658 = vpop.permute.xlu0 %1657
        %v1659 = vld [vmem:[%s9] sm:$0x1]
        %v1661 = vperm.slane %v1659, 0
        %v1663 = vadd.f32 %v1656, %v1661
        %v1664 = vadd.f32 %v1658, %v1661
        %v1665 = vmax.f32 %v1663, 0.0
        %v1666 = vmax.f32 %v1664, 0.0
        %v1667 = vand.u32 2147483647, %v1663
        %v1668 = vand.u32 2147483647, %v1664
        %v1669 = vsub.f32 0.0, %v1667
        %v1670 = vsub.f32 0.0, %v1668
        %v1671 = vmul.f32 %v1669, 1.442695
        %v1672 = vpow.pop %v1671
        %v1673 = vmul.f32 %v1670, 1.442695
        %v1674 = vpow.pop %v1673
        %v1675 = vadd.f32 %v1672, 1.0
        %v1676 = vadd.f32 %v1674, 1.0
        %v1677 = vlog2.pop %v1675
        %v1678 = vmul.f32 %v1677, 0.6931472
        %v1679 = vlog2.pop %v1676
        %v1680 = vmul.f32 %v1679, 0.6931472
        %v1681 = vadd.f32 %v1665, %v1678
        %v1682 = vadd.f32 %v1666, %v1680
        %v1683 = vmul.f32 %v1681, %v834
        %v1684 = vmul.f32 %v1682, %v834
        %v1685 = vrot.slane %v1683, 7
        %v1686 = vrot.slane %v1684, 7
        %v1687 = vsel %vm1485, %v1685, %v1686
        %v1688 = vsel %vm1485, %v1686, %v1685
        %v1689 = vsel %vm1492, %v1688, 0.0
        %v1690 = vsel %vm1493, %v1687, 0.0
        %v1691 = vadd.f32 %v1683, %v1689
        %v1692 = vadd.f32 %v1684, %v1690
        %v1693 = vrot.slane %v1691, 6
        %v1694 = vrot.slane %v1692, 6
        %v1695 = vsel %vm1443, %v1693, %v1694
        %v1696 = vsel %vm1443, %v1694, %v1693
        %v1697 = vsel %vm1450, %v1696, 0.0
        %v1698 = vsel %vm1451, %v1695, 0.0
        %v1699 = vadd.f32 %v1691, %v1697
        %v1700 = vadd.f32 %v1692, %v1698
        %vm1701 = vcmp.ge.s32.totalorder %v819, 4
        %vm1702 = vcmp.ge.s32.totalorder %v820, 4
        %v1703 = vrot.slane %v1699, 4
        %v1704 = vrot.slane %v1700, 4
        %vm1705 = vcmp.lt.s32.totalorder %v819, 4
        %v1706 = vsel %vm1705, %v1703, %v1704
        %v1707 = vsel %vm1705, %v1704, %v1703
        %v1708 = vsel %vm1701, %v1707, 0.0
        %v1709 = vsel %vm1702, %v1706, 0.0
        %v1710 = vadd.f32 %v1699, %v1708
        %v1711 = vadd.f32 %v1700, %v1709
        %vm1712 = vcmp.ge.s32.totalorder %v819, 8
        %vm1713 = vcmp.ge.s32.totalorder %v820, 8
        %v1714 = vsel %vm1712, %v1711, 0.0
        %v1715 = vsel %vm1713, %v1710, 0.0
        %v1716 = vadd.f32 %v1710, %v1714
        %v1717 = vadd.f32 %v1711, %v1715
        %v1718 = vld [vmem:[%s10] sm:$0x1]
        %v1719 = vsub.f32 0.0, %v1718
        %v1721 = vperm.slane %v1719, 0
        %v1723 = vmul.f32 %v1721, %v1716
        %v1724 = vmul.f32 %v1721, %v1717
        %v1725 = vmul.f32 %v1723, 1.442695
        %v1726 = vpow.pop %v1725
        %v1727 = vmul.f32 %v1724, 1.442695
        %v1728 = vpow.pop %v1727
        %v1729 = vmul.f32 %v1683, %v1726
        %v1730 = vmul.f32 %v1684, %v1728
        %v1732 = vperm.slane %v1718, 0
        %v1734 = vmul.f32 %v1732, %v1716
        %v1735 = vmul.f32 %v1732, %v1717
        %v1736 = vmul.f32 %v1734, 1.442695
        %v1737 = vpow.pop %v1736
        %v1738 = vmul.f32 %v1735, 1.442695
        %v1739 = vpow.pop %v1738
        %1740 = vmatpush.msra.mxu0 %v868
        %1741 = vmatpush.msra.mxu0 %v867
        %1742 = vmatpush.msra.mxu0 %v866
        %1743 = vmatpush.msra.mxu0 %v865
        %1744 = vmatpush.msra.mxu0 %v864
        %1745 = vmatpush.msra.mxu0 %v863
        %1746 = vmatpush.msra.mxu0 %v862
        %1747 = vmatpush.msra.mxu0 %v861
        %1748 = vmatpush.msra.mxu0 %v860
        %1749 = vmatpush.msra.mxu0 %v859
        %1750 = vmatpush.msra.mxu0 %v858
        %1751 = vmatpush.msra.mxu0 %v857
        %1752 = vmatpush.msra.mxu0 %v856
        %1753 = vmatpush.msra.mxu0 %v855
        %1754 = vmatpush.msra.mxu0 %v854
        %1755 = vmatpush.msra.mxu0 %v853
        %1756 = vmatmul.f32.gmra.mxu0 %v1729
        %v1757 = vpop.f32.mrf.mxu0
        %v1758 = vadd.f32 0.0, %v1757
        %1759 = vmatmul.f32.gmra.mxu0 %v1730
        %v1760 = vpop.f32.mrf.mxu0
        %v1761 = vadd.f32 0.0, %v1760
        %1762 = vmatmul.f32.gmra.mxu0 %v1737
        %v1763 = vpop.f32.mrf.mxu0
        %v1764 = vadd.f32 0.0, %v1763
        %1765 = vmatmul.f32.gmra.mxu0 %v1739
        %v1766 = vpop.f32.mrf.mxu0
        %v1767 = vadd.f32 0.0, %v1766
        %1768 = vdwg.mxu0
        %1769 = vmatpush.xpose.msra.mxu0 0.0
        %1770 = vmatpush.xpose.msra.mxu0 0.0
        %1771 = vmatpush.xpose.msra.mxu0 0.0
        %1772 = vmatpush.xpose.msra.mxu0 0.0
        %1773 = vmatpush.xpose.msra.mxu0 0.0
        %1774 = vmatpush.xpose.msra.mxu0 0.0
        %1775 = vmatpush.xpose.msra.mxu0 0.0
        %1776 = vmatpush.xpose.msra.mxu0 0.0
        %1777 = vmatpush.xpose.msra.mxu0 0.0
        %1778 = vmatpush.xpose.msra.mxu0 0.0
        %1779 = vmatpush.xpose.msra.mxu0 0.0
        %1780 = vmatpush.xpose.msra.mxu0 0.0
        %1781 = vmatpush.xpose.msra.mxu0 0.0
        %1782 = vmatpush.xpose.msra.mxu0 0.0
        %1783 = vmatpush.xpose.msra.mxu0 %v1653
        %1784 = vmatpush.xpose.msra.mxu0 %v1650
        %1785 = vmatmul.f32.gmra.mxu0 %v1651
        %v1786 = vpop.f32.mrf.mxu0
        %v1787 = vadd.f32 0.0, %v1786
        %1788 = vmatmul.f32.gmra.mxu0 %v1654
        %v1789 = vpop.f32.mrf.mxu0
        %v1790 = vadd.f32 0.0, %v1789
        %1791 = vdwg.mxu0
        %v1792 = vmul.f32 %v1787, %v827
        %v1793 = vmul.f32 %v1790, %v828
        %v1794 = vmul.f32 %v1758, %v1649
        %v1795 = vmul.f32 %v1761, %v1652
        %vm1796 = vcmask 130048
        %v1798 = vsel %vm1796, %v1792, 0
        %v1801 = vsel %vm1796, %v1793, 0
        %1803 = vmatpush.msra.mxu0 0.0
        %1804 = vmatpush.msra.mxu0 0.0
        %1805 = vmatpush.msra.mxu0 0.0
        %1806 = vmatpush.msra.mxu0 0.0
        %1807 = vmatpush.msra.mxu0 0.0
        %1808 = vmatpush.msra.mxu0 0.0
        %1809 = vmatpush.msra.mxu0 0.0
        %1810 = vmatpush.msra.mxu0 0.0
        %1811 = vmatpush.msra.mxu0 0.0
        %1812 = vmatpush.msra.mxu0 0.0
        %1813 = vmatpush.msra.mxu0 0.0
        %1814 = vmatpush.msra.mxu0 0.0
        %1815 = vmatpush.msra.mxu0 0.0
        %1816 = vmatpush.msra.mxu0 0.0
        %1817 = vmatpush.msra.mxu0 %v1795
        %1818 = vmatpush.msra.mxu0 %v1794
        %1819 = vmatmul.f32.gmra.mxu0 %v1798
        %v1820 = vpop.f32.mrf.mxu0
        %v1821 = vadd.f32 0.0, %v1820
        %1822 = vmatmul.f32.gmra.mxu0 %v1801
        %v1823 = vpop.f32.mrf.mxu0
        %v1824 = vadd.f32 0.0, %v1823
        %1825 = vdwg.mxu0
        %v1826 = vmul.f32 %v1764, %v1821
        %v1827 = vmul.f32 %v1767, %v1824
        %v1828 = vld [vmem:[%s11] sm:$0x1]
        %v1830 = vperm.slane %v1828, 0
        %v1832 = vmul.f32 %v1830, %v1649
        %v1833 = vmul.f32 %v1830, %v1652
        %v1834 = vadd.f32 %v1826, %v1832
        %v1835 = vadd.f32 %v1827, %v1833
        %v1836 = vsub.f32 0.0, %v1330
        %v1837 = vsub.f32 0.0, %v1332
        %v1838 = vmul.f32 %v1836, 1.442695
        %v1839 = vpow.pop %v1838
        %v1840 = vmul.f32 %v1837, 1.442695
        %v1841 = vpow.pop %v1840
        %v1842 = vadd.f32 %v1839, 1.0
        %v1843 = vadd.f32 %v1841, 1.0
        %v1844 = vrcp.pop %v1842
        %v1845 = vmul.f32 %v1842, %v1844
        %v1846 = vsub.f32 1.0, %v1845
        %v1847 = vmul.f32 %v1844, %v1846
        %v1848 = vadd.f32 %v1844, %v1847
        %vm1849 = vweird.f32 %v1842
        %vm1850 = vweird.f32 %v1844
        %vm1851 = vmor %vm1849, %vm1850
        %v1852 = vsel %vm1851, %v1844, %v1848
        %v1853 = vand.u32 2147483647, %v1842
        %vm1854 = vcmp.eq.f32.partialorder %v1853, 8.507059e+37
        %v1855 = vand.u32 %v1842, 2147483648
        %v1856 = vor.u32 1.1754944e-38, %v1855
        %v1857 = vsel %vm1854, %v1856, %v1852
        %v1858 = vmul.f32 1.0, %v1857
        %v1859 = vrcp.pop %v1843
        %v1860 = vmul.f32 %v1843, %v1859
        %v1861 = vsub.f32 1.0, %v1860
        %v1862 = vmul.f32 %v1859, %v1861
        %v1863 = vadd.f32 %v1859, %v1862
        %vm1864 = vweird.f32 %v1843
        %vm1865 = vweird.f32 %v1859
        %vm1866 = vmor %vm1864, %vm1865
        %v1867 = vsel %vm1866, %v1859, %v1863
        %v1868 = vand.u32 2147483647, %v1843
        %vm1869 = vcmp.eq.f32.partialorder %v1868, 8.507059e+37
        %v1870 = vand.u32 %v1843, 2147483648
        %v1871 = vor.u32 1.1754944e-38, %v1870
        %v1872 = vsel %vm1869, %v1871, %v1867
        %v1873 = vmul.f32 1.0, %v1872
        %v1874 = vmul.f32 %v1330, %v1858
        %v1875 = vmul.f32 %v1332, %v1873
        %v1876 = vmul.f32 %v1834, %v1874
        %v1877 = vmul.f32 %v1835, %v1875
        %v1878 = vmul.f32 %v1876, %v1876
        %v1879 = vmul.f32 %v1877, %v1877
        %1880 = vadd.xlane.f32.xlu0 %v1878
        %v1881 = vpop.xlane.xlu0 %1880
        %1882 = vadd.xlane.f32.xlu0 %v1879
        %v1883 = vpop.xlane.xlu0 %1882
        %v1884 = vmul.f32 %v1881, 0.015625
        %v1885 = vmul.f32 %v1883, 0.015625
        %v1886 = vadd.f32 %v1884, 1e-05
        %v1887 = vadd.f32 %v1885, 1e-05
        %v1888 = vrsqrt.pop %v1886
        %v1889 = vmul.f32 %v1888, %v1886
        %v1890 = vmul.f32 %v1889, %v1888
        %v1891 = vmul.f32 0.5, %v1890
        %v1892 = vsub.f32 1.5, %v1891
        %v1893 = vmul.f32 %v1888, %v1892
        %vm1894 = vweird.f32 %v1886
        %vm1895 = vweird.f32 %v1888
        %vm1896 = vmor %vm1894, %vm1895
        %v1897 = vsel %vm1896, %v1888, %v1893
        %v1898 = vrsqrt.pop %v1887
        %v1899 = vmul.f32 %v1898, %v1887
        %v1900 = vmul.f32 %v1899, %v1898
        %v1901 = vmul.f32 0.5, %v1900
        %v1902 = vsub.f32 1.5, %v1901
        %v1903 = vmul.f32 %v1898, %v1902
        %vm1904 = vweird.f32 %v1887
        %vm1905 = vweird.f32 %v1898
        %vm1906 = vmor %vm1904, %vm1905
        %v1907 = vsel %vm1906, %v1898, %v1903
        %v1908 = vmul.f32 %v1876, %v1897
        %v1909 = vmul.f32 %v1877, %v1907
        %v1910 = vld [vmem:[%s12] sm:$0x1]
        %v1912 = vperm.slane %v1910, 0
        %v1914 = vmul.f32 %v1908, %v1912
        %v1915 = vmul.f32 %v1909, %v1912
        %v1916 = vpack.c.bf16 %v1915, %v1914
        %v1917 = vld [vmem:[%s13] sm:$0xf]
        %v1918 = vld [vmem:[%s13 + $0x4] sm:$0xf]
        %v1919 = vld [vmem:[%s13 + $0x8] sm:$0xf]
        %v1920 = vld [vmem:[%s13 + $0xc] sm:$0xf]
        %v1921 = vld [vmem:[%s13 + $0x10] sm:$0xf]
        %v1922 = vld [vmem:[%s13 + $0x14] sm:$0xf]
        %v1923 = vld [vmem:[%s13 + $0x18] sm:$0xf]
        %v1924 = vld [vmem:[%s13 + $0x1c] sm:$0xf]
        %v1925 = vld [vmem:[%s13 + $0x20] sm:$0xf]
        %v1926 = vld [vmem:[%s13 + $0x24] sm:$0xf]
        %v1927 = vld [vmem:[%s13 + $0x28] sm:$0xf]
        %v1928 = vld [vmem:[%s13 + $0x2c] sm:$0xf]
        %v1929 = vld [vmem:[%s13 + $0x30] sm:$0xf]
        %v1930 = vld [vmem:[%s13 + $0x34] sm:$0xf]
        %v1931 = vld [vmem:[%s13 + $0x38] sm:$0xf]
        %v1932 = vld [vmem:[%s13 + $0x3c] sm:$0xf]
        %v1949 = vunpack.c.l.b16 %v1917
        %v1950 = vunpack.c.l.b16 %v1918
        %v1951 = vunpack.c.l.b16 %v1919
        %v1952 = vunpack.c.l.b16 %v1920
        %v1953 = vunpack.c.l.b16 %v1921
        %v1954 = vunpack.c.l.b16 %v1922
        %v1955 = vunpack.c.l.b16 %v1923
        %v1956 = vunpack.c.l.b16 %v1924
        %v1957 = vunpack.c.l.b16 %v1925
        %v1958 = vunpack.c.l.b16 %v1926
        %v1959 = vunpack.c.l.b16 %v1927
        %v1960 = vunpack.c.l.b16 %v1928
        %v1961 = vunpack.c.l.b16 %v1929
        %v1962 = vunpack.c.l.b16 %v1930
        %v1963 = vunpack.c.l.b16 %v1931
        %v1964 = vunpack.c.l.b16 %v1932
        %v1965 = vpack.c.b16 %v1950, %v1949
        %v1966 = vpack.c.b16 %v1952, %v1951
        %v1967 = vpack.c.b16 %v1954, %v1953
        %v1968 = vpack.c.b16 %v1956, %v1955
        %v1969 = vpack.c.b16 %v1958, %v1957
        %v1970 = vpack.c.b16 %v1960, %v1959
        %v1971 = vpack.c.b16 %v1962, %v1961
        %v1972 = vpack.c.b16 %v1964, %v1963
        %1981 = vmatpush.bf16.msra.mxu0 %v1972
        %1982 = vmatpush.bf16.msra.mxu0 %v1971
        %1983 = vmatpush.bf16.msra.mxu0 %v1970
        %1984 = vmatpush.bf16.msra.mxu0 %v1969
        %1985 = vmatpush.bf16.msra.mxu0 %v1968
        %1986 = vmatpush.bf16.msra.mxu0 %v1967
        %1987 = vmatpush.bf16.msra.mxu0 %v1966
        %1988 = vmatpush.bf16.msra.mxu0 %v1965
        %1989 = vmatmul.bf16.gmra.mxu0 %v1916
        %v1990 = vpop.f32.mrf.mxu0
        %v1991 = vadd.f32 0.0, %v1990
        %v1992 = vpop.f32.mrf.mxu0
        %v1993 = vadd.f32 0.0, %v1992
        %1994 = vdwg.mxu0
        %1995 = vadd.xlane.f32.xlu0 %v1991
        %v1996 = vpop.xlane.xlu0 %1995
        %1997 = vadd.xlane.f32.xlu0 %v1993
        %v1998 = vpop.xlane.xlu0 %1997
        %v1999 = vmul.f32 %v1996, 0.03125
        %v2000 = vmul.f32 %v1998, 0.03125
        %v2001 = vsub.f32 %v1991, %v1999
        %v2002 = vsub.f32 %v1993, %v2000
        %v2003 = vmul.f32 %v2001, %v831
        %v2004 = vmul.f32 %v2002, %v831
        %v2005 = vmul.f32 %v2003, %v2003
        %v2006 = vmul.f32 %v2004, %v2004
        %2007 = vadd.xlane.f32.xlu0 %v2005
        %v2008 = vpop.xlane.xlu0 %2007
        %2009 = vadd.xlane.f32.xlu0 %v2006
        %v2010 = vpop.xlane.xlu0 %2009
        %v2011 = vmul.f32 %v2008, 0.03125
        %v2012 = vmul.f32 %v2010, 0.03125
        %v2013 = vadd.f32 %v2011, 1e-05
        %v2014 = vadd.f32 %v2012, 1e-05
        %v2015 = vrsqrt.pop %v2013
        %v2016 = vmul.f32 %v2015, %v2013
        %v2017 = vmul.f32 %v2016, %v2015
        %v2018 = vmul.f32 0.5, %v2017
        %v2019 = vsub.f32 1.5, %v2018
        %v2020 = vmul.f32 %v2015, %v2019
        %vm2021 = vweird.f32 %v2013
        %vm2022 = vweird.f32 %v2015
        %vm2023 = vmor %vm2021, %vm2022
        %v2024 = vsel %vm2023, %v2015, %v2020
        %v2025 = vrsqrt.pop %v2014
        %v2026 = vmul.f32 %v2025, %v2014
        %v2027 = vmul.f32 %v2026, %v2025
        %v2028 = vmul.f32 0.5, %v2027
        %v2029 = vsub.f32 1.5, %v2028
        %v2030 = vmul.f32 %v2025, %v2029
        %vm2031 = vweird.f32 %v2014
        %vm2032 = vweird.f32 %v2025
        %vm2033 = vmor %vm2031, %vm2032
        %v2034 = vsel %vm2033, %v2025, %v2030
        %v2035 = vmul.f32 %v2003, %v2024
        %v2036 = vmul.f32 %v2004, %v2034
        %v2037 = vld [vmem:[%s14] sm:$0x1]
        %v2039 = vperm.slane %v2037, 0
        %v2041 = vmul.f32 %v2035, %v2039
        %v2042 = vmul.f32 %v2036, %v2039
        %v2043 = vld [vmem:[%s15] sm:$0x1]
        %v2045 = vperm.slane %v2043, 0
        %v2047 = vadd.f32 %v2041, %v2045
        %v2048 = vadd.f32 %v2042, %v2045
        %v2049 = vmul.f32 %v2047, %v839
        %v2050 = vmul.f32 %v2048, %v840
        %v2051 = vadd.f32 %v1125, %v2049
        %v2052 = vadd.f32 %v1126, %v2050
        %v2053 = vpack.c.bf16 %v2052, %v2051
        %s2054 = scalar_lea.vmem [#allocation6], 256
        %v2055 = vld [vmem:[%s2054] sm:$0xff]
        %v2056 = vld [vmem:[%s2054 + $0x8] sm:$0xff]
        %v2057 = vld [vmem:[%s2054 + $0x10] sm:$0xff]
        %v2058 = vld [vmem:[%s2054 + $0x18] sm:$0xff]
        %v2059 = vld [vmem:[%s2054 + $0x20] sm:$0xff]
        %v2060 = vld [vmem:[%s2054 + $0x28] sm:$0xff]
        %v2061 = vld [vmem:[%s2054 + $0x30] sm:$0xff]
        %v2062 = vld [vmem:[%s2054 + $0x38] sm:$0xff]
        %v2063 = vld [vmem:[%s2054 + $0x40] sm:$0xff]
        %v2064 = vld [vmem:[%s2054 + $0x48] sm:$0xff]
        %v2065 = vld [vmem:[%s2054 + $0x50] sm:$0xff]
        %v2066 = vld [vmem:[%s2054 + $0x58] sm:$0xff]
        %v2067 = vld [vmem:[%s2054 + $0x60] sm:$0xff]
        %v2068 = vld [vmem:[%s2054 + $0x68] sm:$0xff]
        %v2069 = vld [vmem:[%s2054 + $0x70] sm:$0xff]
        %v2070 = vld [vmem:[%s2054 + $0x78] sm:$0xff]
        %v2071 = vld [vmem:[%s2054 + $0x80] sm:$0xff]
        %v2072 = vld [vmem:[%s2054 + $0x88] sm:$0xff]
        %v2073 = vld [vmem:[%s2054 + $0x90] sm:$0xff]
        %v2074 = vld [vmem:[%s2054 + $0x98] sm:$0xff]
        %v2075 = vld [vmem:[%s2054 + $0xa0] sm:$0xff]
        %v2076 = vld [vmem:[%s2054 + $0xa8] sm:$0xff]
        %v2077 = vld [vmem:[%s2054 + $0xb0] sm:$0xff]
        %v2078 = vld [vmem:[%s2054 + $0xb8] sm:$0xff]
        %v2079 = vld [vmem:[%s2054 + $0xc0] sm:$0xff]
        %v2080 = vld [vmem:[%s2054 + $0xc8] sm:$0xff]
        %v2081 = vld [vmem:[%s2054 + $0xd0] sm:$0xff]
        %v2082 = vld [vmem:[%s2054 + $0xd8] sm:$0xff]
        %v2083 = vld [vmem:[%s2054 + $0xe0] sm:$0xff]
        %v2084 = vld [vmem:[%s2054 + $0xe8] sm:$0xff]
        %v2085 = vld [vmem:[%s2054 + $0xf0] sm:$0xff]
        %v2086 = vld [vmem:[%s2054 + $0xf8] sm:$0xff]
        %v2119 = vunpack.c.l.b16 %v2055
        %v2120 = vunpack.c.h.b16 %v2055
        %v2121 = vunpack.c.l.b16 %v2056
        %v2122 = vunpack.c.h.b16 %v2056
        %v2123 = vunpack.c.l.b16 %v2057
        %v2124 = vunpack.c.h.b16 %v2057
        %v2125 = vunpack.c.l.b16 %v2058
        %v2126 = vunpack.c.h.b16 %v2058
        %v2127 = vunpack.c.l.b16 %v2059
        %v2128 = vunpack.c.h.b16 %v2059
        %v2129 = vunpack.c.l.b16 %v2060
        %v2130 = vunpack.c.h.b16 %v2060
        %v2131 = vunpack.c.l.b16 %v2061
        %v2132 = vunpack.c.h.b16 %v2061
        %v2133 = vunpack.c.l.b16 %v2062
        %v2134 = vunpack.c.h.b16 %v2062
        %v2135 = vunpack.c.l.b16 %v2063
        %v2136 = vunpack.c.h.b16 %v2063
        %v2137 = vunpack.c.l.b16 %v2064
        %v2138 = vunpack.c.h.b16 %v2064
        %v2139 = vunpack.c.l.b16 %v2065
        %v2140 = vunpack.c.h.b16 %v2065
        %v2141 = vunpack.c.l.b16 %v2066
        %v2142 = vunpack.c.h.b16 %v2066
        %v2143 = vunpack.c.l.b16 %v2067
        %v2144 = vunpack.c.h.b16 %v2067
        %v2145 = vunpack.c.l.b16 %v2068
        %v2146 = vunpack.c.h.b16 %v2068
        %v2147 = vunpack.c.l.b16 %v2069
        %v2148 = vunpack.c.h.b16 %v2069
        %v2149 = vunpack.c.l.b16 %v2070
        %v2150 = vunpack.c.h.b16 %v2070
        %v2151 = vunpack.c.l.b16 %v2071
        %v2152 = vunpack.c.h.b16 %v2071
        %v2153 = vunpack.c.l.b16 %v2072
        %v2154 = vunpack.c.h.b16 %v2072
        %v2155 = vunpack.c.l.b16 %v2073
        %v2156 = vunpack.c.h.b16 %v2073
        %v2157 = vunpack.c.l.b16 %v2074
        %v2158 = vunpack.c.h.b16 %v2074
        %v2159 = vunpack.c.l.b16 %v2075
        %v2160 = vunpack.c.h.b16 %v2075
        %v2161 = vunpack.c.l.b16 %v2076
        %v2162 = vunpack.c.h.b16 %v2076
        %v2163 = vunpack.c.l.b16 %v2077
        %v2164 = vunpack.c.h.b16 %v2077
        %v2165 = vunpack.c.l.b16 %v2078
        %v2166 = vunpack.c.h.b16 %v2078
        %v2167 = vunpack.c.l.b16 %v2079
        %v2168 = vunpack.c.h.b16 %v2079
        %v2169 = vunpack.c.l.b16 %v2080
        %v2170 = vunpack.c.h.b16 %v2080
        %v2171 = vunpack.c.l.b16 %v2081
        %v2172 = vunpack.c.h.b16 %v2081
        %v2173 = vunpack.c.l.b16 %v2082
        %v2174 = vunpack.c.h.b16 %v2082
        %v2175 = vunpack.c.l.b16 %v2083
        %v2176 = vunpack.c.h.b16 %v2083
        %v2177 = vunpack.c.l.b16 %v2084
        %v2178 = vunpack.c.h.b16 %v2084
        %v2179 = vunpack.c.l.b16 %v2085
        %v2180 = vunpack.c.h.b16 %v2085
        %v2181 = vunpack.c.l.b16 %v2086
        %v2182 = vunpack.c.h.b16 %v2086
        %v2183 = vpack.c.b16 %v2123, %v2119
        %v2184 = vpack.c.b16 %v2124, %v2120
        %v2185 = vpack.c.b16 %v2125, %v2121
        %v2186 = vpack.c.b16 %v2126, %v2122
        %v2187 = vpack.c.b16 %v2131, %v2127
        %v2188 = vpack.c.b16 %v2132, %v2128
        %v2189 = vpack.c.b16 %v2133, %v2129
        %v2190 = vpack.c.b16 %v2134, %v2130
        %v2191 = vpack.c.b16 %v2139, %v2135
        %v2192 = vpack.c.b16 %v2140, %v2136
        %v2193 = vpack.c.b16 %v2141, %v2137
        %v2194 = vpack.c.b16 %v2142, %v2138
        %v2195 = vpack.c.b16 %v2147, %v2143
        %v2196 = vpack.c.b16 %v2148, %v2144
        %v2197 = vpack.c.b16 %v2149, %v2145
        %v2198 = vpack.c.b16 %v2150, %v2146
        %v2199 = vpack.c.b16 %v2155, %v2151
        %v2200 = vpack.c.b16 %v2156, %v2152
        %v2201 = vpack.c.b16 %v2157, %v2153
        %v2202 = vpack.c.b16 %v2158, %v2154
        %v2203 = vpack.c.b16 %v2163, %v2159
        %v2204 = vpack.c.b16 %v2164, %v2160
        %v2205 = vpack.c.b16 %v2165, %v2161
        %v2206 = vpack.c.b16 %v2166, %v2162
        %v2207 = vpack.c.b16 %v2171, %v2167
        %v2208 = vpack.c.b16 %v2172, %v2168
        %v2209 = vpack.c.b16 %v2173, %v2169
        %v2210 = vpack.c.b16 %v2174, %v2170
        %v2211 = vpack.c.b16 %v2179, %v2175
        %v2212 = vpack.c.b16 %v2180, %v2176
        %v2213 = vpack.c.b16 %v2181, %v2177
        %v2214 = vpack.c.b16 %v2182, %v2178
        %2247 = vmatpush.bf16.msra.mxu0 %v2211
        %2248 = vmatpush.bf16.msra.mxu0 %v2207
        %2249 = vmatpush.bf16.msra.mxu0 %v2203
        %2250 = vmatpush.bf16.msra.mxu0 %v2199
        %2251 = vmatpush.bf16.msra.mxu0 %v2195
        %2252 = vmatpush.bf16.msra.mxu0 %v2191
        %2253 = vmatpush.bf16.msra.mxu0 %v2187
        %2254 = vmatpush.bf16.msra.mxu0 %v2183
        %2255 = vmatmul.bf16.gmra.mxu0 %v2053
        %v2256 = vpop.f32.mrf.mxu0
        %v2257 = vadd.f32 0.0, %v2256
        %v2258 = vpop.f32.mrf.mxu0
        %v2259 = vadd.f32 0.0, %v2258
        %2260 = vdwg.mxu0
        %2261 = vmatpush.bf16.msra.mxu0 %v2212
        %2262 = vmatpush.bf16.msra.mxu0 %v2208
        %2263 = vmatpush.bf16.msra.mxu0 %v2204
        %2264 = vmatpush.bf16.msra.mxu0 %v2200
        %2265 = vmatpush.bf16.msra.mxu0 %v2196
        %2266 = vmatpush.bf16.msra.mxu0 %v2192
        %2267 = vmatpush.bf16.msra.mxu0 %v2188
        %2268 = vmatpush.bf16.msra.mxu0 %v2184
        %2269 = vmatmul.bf16.gmra.mxu0 %v2053
        %v2270 = vpop.f32.mrf.mxu0
        %v2271 = vadd.f32 0.0, %v2270
        %v2272 = vpop.f32.mrf.mxu0
        %v2273 = vadd.f32 0.0, %v2272
        %2274 = vdwg.mxu0
        %2275 = vmatpush.bf16.msra.mxu0 %v2213
        %2276 = vmatpush.bf16.msra.mxu0 %v2209
        %2277 = vmatpush.bf16.msra.mxu0 %v2205
        %2278 = vmatpush.bf16.msra.mxu0 %v2201
        %2279 = vmatpush.bf16.msra.mxu0 %v2197
        %2280 = vmatpush.bf16.msra.mxu0 %v2193
        %2281 = vmatpush.bf16.msra.mxu0 %v2189
        %2282 = vmatpush.bf16.msra.mxu0 %v2185
        %2283 = vmatmul.bf16.gmra.mxu0 %v2053
        %v2284 = vpop.f32.mrf.mxu0
        %v2285 = vadd.f32 0.0, %v2284
        %v2286 = vpop.f32.mrf.mxu0
        %v2287 = vadd.f32 0.0, %v2286
        %2288 = vdwg.mxu0
        %2289 = vmatpush.bf16.msra.mxu0 %v2214
        %2290 = vmatpush.bf16.msra.mxu0 %v2210
        %2291 = vmatpush.bf16.msra.mxu0 %v2206
        %2292 = vmatpush.bf16.msra.mxu0 %v2202
        %2293 = vmatpush.bf16.msra.mxu0 %v2198
        %2294 = vmatpush.bf16.msra.mxu0 %v2194
        %2295 = vmatpush.bf16.msra.mxu0 %v2190
        %2296 = vmatpush.bf16.msra.mxu0 %v2186
        %2297 = vmatmul.bf16.gmra.mxu0 %v2053
        %v2298 = vpop.f32.mrf.mxu0
        %v2299 = vadd.f32 0.0, %v2298
        %v2300 = vpop.f32.mrf.mxu0
        %v2301 = vadd.f32 0.0, %v2300
        %2302 = vdwg.mxu0
        %s2303 = scalar_lea.vmem %s7, 12
        %v2304 = vld [vmem:[%s2303] sm:$0xff]
        %v2305 = vld [vmem:[%s2303 + $0x8] sm:$0xf]
        %v2308 = vperm.slane %v2304, 3
        %v2309 = vperm.slane %v2304, 7
        %v2310 = vperm.slane %v2305, 3
        %v2314 = vperm.slane %v2308, 3
        %v2315 = vperm.slane %v2309, 3
        %v2316 = vperm.slane %v2310, 3
        %v2317 = vmul.f32 %v2271, %v2314
        %v2318 = vmul.f32 %v2285, %v2315
        %v2319 = vmul.f32 %v2299, %v2316
        %v2320 = vmul.f32 %v2273, %v2314
        %v2321 = vmul.f32 %v2287, %v2315
        %v2322 = vmul.f32 %v2301, %v2316
        %v2323 = vrot.slane %v2271, 5
        %v2324 = vrot.slane %v2285, 5
        %v2325 = vrot.slane %v2299, 5
        %v2326 = vrot.slane %v2273, 5
        %v2327 = vrot.slane %v2287, 5
        %v2328 = vrot.slane %v2301, 5
        %v2329 = vsel %vm1401, %v2323, %v2326
        %v2330 = vsel %vm1401, %v2324, %v2327
        %v2331 = vsel %vm1401, %v2325, %v2328
        %v2332 = vsel %vm1401, %v2326, %v2323
        %v2333 = vsel %vm1401, %v2327, %v2324
        %v2334 = vsel %vm1401, %v2328, %v2325
        %v2335 = vsel %vm1408, %v2332, 0.0
        %v2336 = vsel %vm1408, %v2333, 0.0
        %v2337 = vsel %vm1408, %v2334, 0.0
        %v2338 = vsel %vm1409, %v2329, 0.0
        %v2339 = vsel %vm1409, %v2330, 0.0
        %v2340 = vsel %vm1409, %v2331, 0.0
        %v2341 = vperm.slane %v2304, 0
        %v2342 = vperm.slane %v2304, 4
        %v2343 = vperm.slane %v2305, 0
        %v2347 = vperm.slane %v2341, 0
        %v2348 = vperm.slane %v2342, 0
        %v2349 = vperm.slane %v2343, 0
        %v2350 = vmul.f32 %v2335, %v2347
        %v2351 = vmul.f32 %v2336, %v2348
        %v2352 = vmul.f32 %v2337, %v2349
        %v2353 = vmul.f32 %v2338, %v2347
        %v2354 = vmul.f32 %v2339, %v2348
        %v2355 = vmul.f32 %v2340, %v2349
        %v2356 = vadd.f32 %v2317, %v2350
        %v2357 = vadd.f32 %v2318, %v2351
        %v2358 = vadd.f32 %v2319, %v2352
        %v2359 = vadd.f32 %v2320, %v2353
        %v2360 = vadd.f32 %v2321, %v2354
        %v2361 = vadd.f32 %v2322, %v2355
        %v2362 = vrot.slane %v2271, 6
        %v2363 = vrot.slane %v2285, 6
        %v2364 = vrot.slane %v2299, 6
        %v2365 = vrot.slane %v2273, 6
        %v2366 = vrot.slane %v2287, 6
        %v2367 = vrot.slane %v2301, 6
        %v2368 = vsel %vm1443, %v2362, %v2365
        %v2369 = vsel %vm1443, %v2363, %v2366
        %v2370 = vsel %vm1443, %v2364, %v2367
        %v2371 = vsel %vm1443, %v2365, %v2362
        %v2372 = vsel %vm1443, %v2366, %v2363
        %v2373 = vsel %vm1443, %v2367, %v2364
        %v2374 = vsel %vm1450, %v2371, 0.0
        %v2375 = vsel %vm1450, %v2372, 0.0
        %v2376 = vsel %vm1450, %v2373, 0.0
        %v2377 = vsel %vm1451, %v2368, 0.0
        %v2378 = vsel %vm1451, %v2369, 0.0
        %v2379 = vsel %vm1451, %v2370, 0.0
        %v2380 = vperm.slane %v2304, 1
        %v2381 = vperm.slane %v2304, 5
        %v2382 = vperm.slane %v2305, 1
        %v2386 = vperm.slane %v2380, 1
        %v2387 = vperm.slane %v2381, 1
        %v2388 = vperm.slane %v2382, 1
        %v2389 = vmul.f32 %v2374, %v2386
        %v2390 = vmul.f32 %v2375, %v2387
        %v2391 = vmul.f32 %v2376, %v2388
        %v2392 = vmul.f32 %v2377, %v2386
        %v2393 = vmul.f32 %v2378, %v2387
        %v2394 = vmul.f32 %v2379, %v2388
        %v2395 = vadd.f32 %v2356, %v2389
        %v2396 = vadd.f32 %v2357, %v2390
        %v2397 = vadd.f32 %v2358, %v2391
        %v2398 = vadd.f32 %v2359, %v2392
        %v2399 = vadd.f32 %v2360, %v2393
        %v2400 = vadd.f32 %v2361, %v2394
        %v2401 = vrot.slane %v2271, 7
        %v2402 = vrot.slane %v2285, 7
        %v2403 = vrot.slane %v2299, 7
        %v2404 = vrot.slane %v2273, 7
        %v2405 = vrot.slane %v2287, 7
        %v2406 = vrot.slane %v2301, 7
        %v2407 = vsel %vm1485, %v2401, %v2404
        %v2408 = vsel %vm1485, %v2402, %v2405
        %v2409 = vsel %vm1485, %v2403, %v2406
        %v2410 = vsel %vm1485, %v2404, %v2401
        %v2411 = vsel %vm1485, %v2405, %v2402
        %v2412 = vsel %vm1485, %v2406, %v2403
        %v2413 = vsel %vm1492, %v2410, 0.0
        %v2414 = vsel %vm1492, %v2411, 0.0
        %v2415 = vsel %vm1492, %v2412, 0.0
        %v2416 = vsel %vm1493, %v2407, 0.0
        %v2417 = vsel %vm1493, %v2408, 0.0
        %v2418 = vsel %vm1493, %v2409, 0.0
        %v2419 = vperm.slane %v2304, 2
        %v2420 = vperm.slane %v2304, 6
        %v2421 = vperm.slane %v2305, 2
        %v2425 = vperm.slane %v2419, 2
        %v2426 = vperm.slane %v2420, 2
        %v2427 = vperm.slane %v2421, 2
        %v2428 = vmul.f32 %v2413, %v2425
        %v2429 = vmul.f32 %v2414, %v2426
        %v2430 = vmul.f32 %v2415, %v2427
        %v2431 = vmul.f32 %v2416, %v2425
        %v2432 = vmul.f32 %v2417, %v2426
        %v2433 = vmul.f32 %v2418, %v2427
        %v2434 = vadd.f32 %v2395, %v2428
        %v2435 = vadd.f32 %v2396, %v2429
        %v2436 = vadd.f32 %v2397, %v2430
        %v2437 = vadd.f32 %v2398, %v2431
        %v2438 = vadd.f32 %v2399, %v2432
        %v2439 = vadd.f32 %v2400, %v2433
        %s2440 = scalar_lea.vmem %s8, 3
        %v2441 = vld [vmem:[%s2440] sm:$0x7]
        %v2443 = vperm.slane %v2441, 0
        %v2444 = vperm.slane %v2441, 1
        %v2445 = vperm.slane %v2441, 2
        %v2449 = vadd.f32 %v2434, %v2443
        %v2450 = vadd.f32 %v2435, %v2444
        %v2451 = vadd.f32 %v2436, %v2445
        %v2452 = vadd.f32 %v2437, %v2443
        %v2453 = vadd.f32 %v2438, %v2444
        %v2454 = vadd.f32 %v2439, %v2445
        %v2455 = vsub.f32 0.0, %v2449
        %v2456 = vsub.f32 0.0, %v2450
        %v2457 = vsub.f32 0.0, %v2451
        %v2458 = vsub.f32 0.0, %v2452
        %v2459 = vsub.f32 0.0, %v2453
        %v2460 = vsub.f32 0.0, %v2454
        %v2461 = vmul.f32 %v2455, 1.442695
        %v2462 = vpow.pop %v2461
        %v2463 = vmul.f32 %v2456, 1.442695
        %v2464 = vpow.pop %v2463
        %v2465 = vmul.f32 %v2457, 1.442695
        %v2466 = vpow.pop %v2465
        %v2467 = vmul.f32 %v2458, 1.442695
        %v2468 = vpow.pop %v2467
        %v2469 = vmul.f32 %v2459, 1.442695
        %v2470 = vpow.pop %v2469
        %v2471 = vmul.f32 %v2460, 1.442695
        %v2472 = vpow.pop %v2471
        %v2473 = vadd.f32 %v2462, 1.0
        %v2474 = vadd.f32 %v2464, 1.0
        %v2475 = vadd.f32 %v2466, 1.0
        %v2476 = vadd.f32 %v2468, 1.0
        %v2477 = vadd.f32 %v2470, 1.0
        %v2478 = vadd.f32 %v2472, 1.0
        %v2479 = vrcp.pop %v2473
        %v2480 = vmul.f32 %v2473, %v2479
        %v2481 = vsub.f32 1.0, %v2480
        %v2482 = vmul.f32 %v2479, %v2481
        %v2483 = vadd.f32 %v2479, %v2482
        %vm2484 = vweird.f32 %v2473
        %vm2485 = vweird.f32 %v2479
        %vm2486 = vmor %vm2484, %vm2485
        %v2487 = vsel %vm2486, %v2479, %v2483
        %v2488 = vand.u32 2147483647, %v2473
        %vm2489 = vcmp.eq.f32.partialorder %v2488, 8.507059e+37
        %v2490 = vand.u32 %v2473, 2147483648
        %v2491 = vor.u32 1.1754944e-38, %v2490
        %v2492 = vsel %vm2489, %v2491, %v2487
        %v2493 = vmul.f32 1.0, %v2492
        %v2494 = vrcp.pop %v2474
        %v2495 = vmul.f32 %v2474, %v2494
        %v2496 = vsub.f32 1.0, %v2495
        %v2497 = vmul.f32 %v2494, %v2496
        %v2498 = vadd.f32 %v2494, %v2497
        %vm2499 = vweird.f32 %v2474
        %vm2500 = vweird.f32 %v2494
        %vm2501 = vmor %vm2499, %vm2500
        %v2502 = vsel %vm2501, %v2494, %v2498
        %v2503 = vand.u32 2147483647, %v2474
        %vm2504 = vcmp.eq.f32.partialorder %v2503, 8.507059e+37
        %v2505 = vand.u32 %v2474, 2147483648
        %v2506 = vor.u32 1.1754944e-38, %v2505
        %v2507 = vsel %vm2504, %v2506, %v2502
        %v2508 = vmul.f32 1.0, %v2507
        %v2509 = vrcp.pop %v2475
        %v2510 = vmul.f32 %v2475, %v2509
        %v2511 = vsub.f32 1.0, %v2510
        %v2512 = vmul.f32 %v2509, %v2511
        %v2513 = vadd.f32 %v2509, %v2512
        %vm2514 = vweird.f32 %v2475
        %vm2515 = vweird.f32 %v2509
        %vm2516 = vmor %vm2514, %vm2515
        %v2517 = vsel %vm2516, %v2509, %v2513
        %v2518 = vand.u32 2147483647, %v2475
        %vm2519 = vcmp.eq.f32.partialorder %v2518, 8.507059e+37
        %v2520 = vand.u32 %v2475, 2147483648
        %v2521 = vor.u32 1.1754944e-38, %v2520
        %v2522 = vsel %vm2519, %v2521, %v2517
        %v2523 = vmul.f32 1.0, %v2522
        %v2524 = vrcp.pop %v2476
        %v2525 = vmul.f32 %v2476, %v2524
        %v2526 = vsub.f32 1.0, %v2525
        %v2527 = vmul.f32 %v2524, %v2526
        %v2528 = vadd.f32 %v2524, %v2527
        %vm2529 = vweird.f32 %v2476
        %vm2530 = vweird.f32 %v2524
        %vm2531 = vmor %vm2529, %vm2530
        %v2532 = vsel %vm2531, %v2524, %v2528
        %v2533 = vand.u32 2147483647, %v2476
        %vm2534 = vcmp.eq.f32.partialorder %v2533, 8.507059e+37
        %v2535 = vand.u32 %v2476, 2147483648
        %v2536 = vor.u32 1.1754944e-38, %v2535
        %v2537 = vsel %vm2534, %v2536, %v2532
        %v2538 = vmul.f32 1.0, %v2537
        %v2539 = vrcp.pop %v2477
        %v2540 = vmul.f32 %v2477, %v2539
        %v2541 = vsub.f32 1.0, %v2540
        %v2542 = vmul.f32 %v2539, %v2541
        %v2543 = vadd.f32 %v2539, %v2542
        %vm2544 = vweird.f32 %v2477
        %vm2545 = vweird.f32 %v2539
        %vm2546 = vmor %vm2544, %vm2545
        %v2547 = vsel %vm2546, %v2539, %v2543
        %v2548 = vand.u32 2147483647, %v2477
        %vm2549 = vcmp.eq.f32.partialorder %v2548, 8.507059e+37
        %v2550 = vand.u32 %v2477, 2147483648
        %v2551 = vor.u32 1.1754944e-38, %v2550
        %v2552 = vsel %vm2549, %v2551, %v2547
        %v2553 = vmul.f32 1.0, %v2552
        %v2554 = vrcp.pop %v2478
        %v2555 = vmul.f32 %v2478, %v2554
        %v2556 = vsub.f32 1.0, %v2555
        %v2557 = vmul.f32 %v2554, %v2556
        %v2558 = vadd.f32 %v2554, %v2557
        %vm2559 = vweird.f32 %v2478
        %vm2560 = vweird.f32 %v2554
        %vm2561 = vmor %vm2559, %vm2560
        %v2562 = vsel %vm2561, %v2554, %v2558
        %v2563 = vand.u32 2147483647, %v2478
        %vm2564 = vcmp.eq.f32.partialorder %v2563, 8.507059e+37
        %v2565 = vand.u32 %v2478, 2147483648
        %v2566 = vor.u32 1.1754944e-38, %v2565
        %v2567 = vsel %vm2564, %v2566, %v2562
        %v2568 = vmul.f32 1.0, %v2567
        %v2569 = vmul.f32 %v2449, %v2493
        %v2570 = vmul.f32 %v2450, %v2508
        %v2571 = vmul.f32 %v2451, %v2523
        %v2572 = vmul.f32 %v2452, %v2538
        %v2573 = vmul.f32 %v2453, %v2553
        %v2574 = vmul.f32 %v2454, %v2568
        %2575 = vrot.lane.b32.xlu0 %v2257, 64
        %v2576 = vpop.permute.xlu0 %2575
        %2577 = vrot.lane.b32.xlu0 %v2259, 64
        %v2578 = vpop.permute.xlu0 %2577
        %s2579 = scalar_lea.vmem %s9, 1
        %v2580 = vld [vmem:[%s2579] sm:$0x1]
        %v2582 = vperm.slane %v2580, 0
        %v2584 = vadd.f32 %v2576, %v2582
        %v2585 = vadd.f32 %v2578, %v2582
        %v2586 = vmax.f32 %v2584, 0.0
        %v2587 = vmax.f32 %v2585, 0.0
        %v2588 = vand.u32 2147483647, %v2584
        %v2589 = vand.u32 2147483647, %v2585
        %v2590 = vsub.f32 0.0, %v2588
        %v2591 = vsub.f32 0.0, %v2589
        %v2592 = vmul.f32 %v2590, 1.442695
        %v2593 = vpow.pop %v2592
        %v2594 = vmul.f32 %v2591, 1.442695
        %v2595 = vpow.pop %v2594
        %v2596 = vadd.f32 %v2593, 1.0
        %v2597 = vadd.f32 %v2595, 1.0
        %v2598 = vlog2.pop %v2596
        %v2599 = vmul.f32 %v2598, 0.6931472
        %v2600 = vlog2.pop %v2597
        %v2601 = vmul.f32 %v2600, 0.6931472
        %v2602 = vadd.f32 %v2586, %v2599
        %v2603 = vadd.f32 %v2587, %v2601
        %v2604 = vmul.f32 %v2602, %v834
        %v2605 = vmul.f32 %v2603, %v834
        %v2606 = vrot.slane %v2604, 7
        %v2607 = vrot.slane %v2605, 7
        %v2608 = vsel %vm1485, %v2606, %v2607
        %v2609 = vsel %vm1485, %v2607, %v2606
        %v2610 = vsel %vm1492, %v2609, 0.0
        %v2611 = vsel %vm1493, %v2608, 0.0
        %v2612 = vadd.f32 %v2604, %v2610
        %v2613 = vadd.f32 %v2605, %v2611
        %v2614 = vrot.slane %v2612, 6
        %v2615 = vrot.slane %v2613, 6
        %v2616 = vsel %vm1443, %v2614, %v2615
        %v2617 = vsel %vm1443, %v2615, %v2614
        %v2618 = vsel %vm1450, %v2617, 0.0
        %v2619 = vsel %vm1451, %v2616, 0.0
        %v2620 = vadd.f32 %v2612, %v2618
        %v2621 = vadd.f32 %v2613, %v2619
        %v2622 = vrot.slane %v2620, 4
        %v2623 = vrot.slane %v2621, 4
        %v2624 = vsel %vm1705, %v2622, %v2623
        %v2625 = vsel %vm1705, %v2623, %v2622
        %v2626 = vsel %vm1701, %v2625, 0.0
        %v2627 = vsel %vm1702, %v2624, 0.0
        %v2628 = vadd.f32 %v2620, %v2626
        %v2629 = vadd.f32 %v2621, %v2627
        %v2630 = vsel %vm1712, %v2629, 0.0
        %v2631 = vsel %vm1713, %v2628, 0.0
        %v2632 = vadd.f32 %v2628, %v2630
        %v2633 = vadd.f32 %v2629, %v2631
        %s2634 = scalar_lea.vmem %s10, 1
        %v2635 = vld [vmem:[%s2634] sm:$0x1]
        %v2636 = vsub.f32 0.0, %v2635
        %v2638 = vperm.slane %v2636, 0
        %v2640 = vmul.f32 %v2638, %v2632
        %v2641 = vmul.f32 %v2638, %v2633
        %v2642 = vmul.f32 %v2640, 1.442695
        %v2643 = vpow.pop %v2642
        %v2644 = vmul.f32 %v2641, 1.442695
        %v2645 = vpow.pop %v2644
        %v2646 = vmul.f32 %v2604, %v2643
        %v2647 = vmul.f32 %v2605, %v2645
        %v2649 = vperm.slane %v2635, 0
        %v2651 = vmul.f32 %v2649, %v2632
        %v2652 = vmul.f32 %v2649, %v2633
        %v2653 = vmul.f32 %v2651, 1.442695
        %v2654 = vpow.pop %v2653
        %v2655 = vmul.f32 %v2652, 1.442695
        %v2656 = vpow.pop %v2655
        %2657 = vmatpush.msra.mxu0 %v868
        %2658 = vmatpush.msra.mxu0 %v867
        %2659 = vmatpush.msra.mxu0 %v866
        %2660 = vmatpush.msra.mxu0 %v865
        %2661 = vmatpush.msra.mxu0 %v864
        %2662 = vmatpush.msra.mxu0 %v863
        %2663 = vmatpush.msra.mxu0 %v862
        %2664 = vmatpush.msra.mxu0 %v861
        %2665 = vmatpush.msra.mxu0 %v860
        %2666 = vmatpush.msra.mxu0 %v859
        %2667 = vmatpush.msra.mxu0 %v858
        %2668 = vmatpush.msra.mxu0 %v857
        %2669 = vmatpush.msra.mxu0 %v856
        %2670 = vmatpush.msra.mxu0 %v855
        %2671 = vmatpush.msra.mxu0 %v854
        %2672 = vmatpush.msra.mxu0 %v853
        %2673 = vmatmul.f32.gmra.mxu0 %v2646
        %v2674 = vpop.f32.mrf.mxu0
        %v2675 = vadd.f32 0.0, %v2674
        %2676 = vmatmul.f32.gmra.mxu0 %v2647
        %v2677 = vpop.f32.mrf.mxu0
        %v2678 = vadd.f32 0.0, %v2677
        %2679 = vmatmul.f32.gmra.mxu0 %v2654
        %v2680 = vpop.f32.mrf.mxu0
        %v2681 = vadd.f32 0.0, %v2680
        %2682 = vmatmul.f32.gmra.mxu0 %v2656
        %v2683 = vpop.f32.mrf.mxu0
        %v2684 = vadd.f32 0.0, %v2683
        %2685 = vdwg.mxu0
        %2686 = vmatpush.xpose.msra.mxu0 0.0
        %2687 = vmatpush.xpose.msra.mxu0 0.0
        %2688 = vmatpush.xpose.msra.mxu0 0.0
        %2689 = vmatpush.xpose.msra.mxu0 0.0
        %2690 = vmatpush.xpose.msra.mxu0 0.0
        %2691 = vmatpush.xpose.msra.mxu0 0.0
        %2692 = vmatpush.xpose.msra.mxu0 0.0
        %2693 = vmatpush.xpose.msra.mxu0 0.0
        %2694 = vmatpush.xpose.msra.mxu0 0.0
        %2695 = vmatpush.xpose.msra.mxu0 0.0
        %2696 = vmatpush.xpose.msra.mxu0 0.0
        %2697 = vmatpush.xpose.msra.mxu0 0.0
        %2698 = vmatpush.xpose.msra.mxu0 0.0
        %2699 = vmatpush.xpose.msra.mxu0 0.0
        %2700 = vmatpush.xpose.msra.mxu0 %v2573
        %2701 = vmatpush.xpose.msra.mxu0 %v2570
        %2702 = vmatmul.f32.gmra.mxu0 %v2571
        %v2703 = vpop.f32.mrf.mxu0
        %v2704 = vadd.f32 0.0, %v2703
        %2705 = vmatmul.f32.gmra.mxu0 %v2574
        %v2706 = vpop.f32.mrf.mxu0
        %v2707 = vadd.f32 0.0, %v2706
        %2708 = vdwg.mxu0
        %v2709 = vmul.f32 %v2704, %v827
        %v2710 = vmul.f32 %v2707, %v828
        %v2711 = vmul.f32 %v2675, %v2569
        %v2712 = vmul.f32 %v2678, %v2572
        %v2714 = vsel %vm1796, %v2709, 0
        %v2717 = vsel %vm1796, %v2710, 0
        %2719 = vmatpush.msra.mxu0 0.0
        %2720 = vmatpush.msra.mxu0 0.0
        %2721 = vmatpush.msra.mxu0 0.0
        %2722 = vmatpush.msra.mxu0 0.0
        %2723 = vmatpush.msra.mxu0 0.0
        %2724 = vmatpush.msra.mxu0 0.0
        %2725 = vmatpush.msra.mxu0 0.0
        %2726 = vmatpush.msra.mxu0 0.0
        %2727 = vmatpush.msra.mxu0 0.0
        %2728 = vmatpush.msra.mxu0 0.0
        %2729 = vmatpush.msra.mxu0 0.0
        %2730 = vmatpush.msra.mxu0 0.0
        %2731 = vmatpush.msra.mxu0 0.0
        %2732 = vmatpush.msra.mxu0 0.0
        %2733 = vmatpush.msra.mxu0 %v2712
        %2734 = vmatpush.msra.mxu0 %v2711
        %2735 = vmatmul.f32.gmra.mxu0 %v2714
        %v2736 = vpop.f32.mrf.mxu0
        %v2737 = vadd.f32 0.0, %v2736
        %2738 = vmatmul.f32.gmra.mxu0 %v2717
        %v2739 = vpop.f32.mrf.mxu0
        %v2740 = vadd.f32 0.0, %v2739
        %2741 = vdwg.mxu0
        %v2742 = vmul.f32 %v2681, %v2737
        %v2743 = vmul.f32 %v2684, %v2740
        %s2744 = scalar_lea.vmem %s11, 1
        %v2745 = vld [vmem:[%s2744] sm:$0x1]
        %v2747 = vperm.slane %v2745, 0
        %v2749 = vmul.f32 %v2747, %v2569
        %v2750 = vmul.f32 %v2747, %v2572
        %v2751 = vadd.f32 %v2742, %v2749
        %v2752 = vadd.f32 %v2743, %v2750
        %v2753 = vsub.f32 0.0, %v2257
        %v2754 = vsub.f32 0.0, %v2259
        %v2755 = vmul.f32 %v2753, 1.442695
        %v2756 = vpow.pop %v2755
        %v2757 = vmul.f32 %v2754, 1.442695
        %v2758 = vpow.pop %v2757
        %v2759 = vadd.f32 %v2756, 1.0
        %v2760 = vadd.f32 %v2758, 1.0
        %v2761 = vrcp.pop %v2759
        %v2762 = vmul.f32 %v2759, %v2761
        %v2763 = vsub.f32 1.0, %v2762
        %v2764 = vmul.f32 %v2761, %v2763
        %v2765 = vadd.f32 %v2761, %v2764
        %vm2766 = vweird.f32 %v2759
        %vm2767 = vweird.f32 %v2761
        %vm2768 = vmor %vm2766, %vm2767
        %v2769 = vsel %vm2768, %v2761, %v2765
        %v2770 = vand.u32 2147483647, %v2759
        %vm2771 = vcmp.eq.f32.partialorder %v2770, 8.507059e+37
        %v2772 = vand.u32 %v2759, 2147483648
        %v2773 = vor.u32 1.1754944e-38, %v2772
        %v2774 = vsel %vm2771, %v2773, %v2769
        %v2775 = vmul.f32 1.0, %v2774
        %v2776 = vrcp.pop %v2760
        %v2777 = vmul.f32 %v2760, %v2776
        %v2778 = vsub.f32 1.0, %v2777
        %v2779 = vmul.f32 %v2776, %v2778
        %v2780 = vadd.f32 %v2776, %v2779
        %vm2781 = vweird.f32 %v2760
        %vm2782 = vweird.f32 %v2776
        %vm2783 = vmor %vm2781, %vm2782
        %v2784 = vsel %vm2783, %v2776, %v2780
        %v2785 = vand.u32 2147483647, %v2760
        %vm2786 = vcmp.eq.f32.partialorder %v2785, 8.507059e+37
        %v2787 = vand.u32 %v2760, 2147483648
        %v2788 = vor.u32 1.1754944e-38, %v2787
        %v2789 = vsel %vm2786, %v2788, %v2784
        %v2790 = vmul.f32 1.0, %v2789
        %v2791 = vmul.f32 %v2257, %v2775
        %v2792 = vmul.f32 %v2259, %v2790
        %v2793 = vmul.f32 %v2751, %v2791
        %v2794 = vmul.f32 %v2752, %v2792
        %v2795 = vmul.f32 %v2793, %v2793
        %v2796 = vmul.f32 %v2794, %v2794
        %2797 = vadd.xlane.f32.xlu0 %v2795
        %v2798 = vpop.xlane.xlu0 %2797
        %2799 = vadd.xlane.f32.xlu0 %v2796
        %v2800 = vpop.xlane.xlu0 %2799
        %v2801 = vmul.f32 %v2798, 0.015625
        %v2802 = vmul.f32 %v2800, 0.015625
        %v2803 = vadd.f32 %v2801, 1e-05
        %v2804 = vadd.f32 %v2802, 1e-05
        %v2805 = vrsqrt.pop %v2803
        %v2806 = vmul.f32 %v2805, %v2803
        %v2807 = vmul.f32 %v2806, %v2805
        %v2808 = vmul.f32 0.5, %v2807
        %v2809 = vsub.f32 1.5, %v2808
        %v2810 = vmul.f32 %v2805, %v2809
        %vm2811 = vweird.f32 %v2803
        %vm2812 = vweird.f32 %v2805
        %vm2813 = vmor %vm2811, %vm2812
        %v2814 = vsel %vm2813, %v2805, %v2810
        %v2815 = vrsqrt.pop %v2804
        %v2816 = vmul.f32 %v2815, %v2804
        %v2817 = vmul.f32 %v2816, %v2815
        %v2818 = vmul.f32 0.5, %v2817
        %v2819 = vsub.f32 1.5, %v2818
        %v2820 = vmul.f32 %v2815, %v2819
        %vm2821 = vweird.f32 %v2804
        %vm2822 = vweird.f32 %v2815
        %vm2823 = vmor %vm2821, %vm2822
        %v2824 = vsel %vm2823, %v2815, %v2820
        %v2825 = vmul.f32 %v2793, %v2814
        %v2826 = vmul.f32 %v2794, %v2824
        %s2827 = scalar_lea.vmem %s12, 1
        %v2828 = vld [vmem:[%s2827] sm:$0x1]
        %v2830 = vperm.slane %v2828, 0
        %v2832 = vmul.f32 %v2825, %v2830
        %v2833 = vmul.f32 %v2826, %v2830
        %v2834 = vpack.c.bf16 %v2833, %v2832
        %s2835 = scalar_lea.vmem %s13, 64
        %v2836 = vld [vmem:[%s2835] sm:$0xf]
        %v2837 = vld [vmem:[%s2835 + $0x4] sm:$0xf]
        %v2838 = vld [vmem:[%s2835 + $0x8] sm:$0xf]
        %v2839 = vld [vmem:[%s2835 + $0xc] sm:$0xf]
        %v2840 = vld [vmem:[%s2835 + $0x10] sm:$0xf]
        %v2841 = vld [vmem:[%s2835 + $0x14] sm:$0xf]
        %v2842 = vld [vmem:[%s2835 + $0x18] sm:$0xf]
        %v2843 = vld [vmem:[%s2835 + $0x1c] sm:$0xf]
        %v2844 = vld [vmem:[%s2835 + $0x20] sm:$0xf]
        %v2845 = vld [vmem:[%s2835 + $0x24] sm:$0xf]
        %v2846 = vld [vmem:[%s2835 + $0x28] sm:$0xf]
        %v2847 = vld [vmem:[%s2835 + $0x2c] sm:$0xf]
        %v2848 = vld [vmem:[%s2835 + $0x30] sm:$0xf]
        %v2849 = vld [vmem:[%s2835 + $0x34] sm:$0xf]
        %v2850 = vld [vmem:[%s2835 + $0x38] sm:$0xf]
        %v2851 = vld [vmem:[%s2835 + $0x3c] sm:$0xf]
        %v2868 = vunpack.c.l.b16 %v2836
        %v2869 = vunpack.c.l.b16 %v2837
        %v2870 = vunpack.c.l.b16 %v2838
        %v2871 = vunpack.c.l.b16 %v2839
        %v2872 = vunpack.c.l.b16 %v2840
        %v2873 = vunpack.c.l.b16 %v2841
        %v2874 = vunpack.c.l.b16 %v2842
        %v2875 = vunpack.c.l.b16 %v2843
        %v2876 = vunpack.c.l.b16 %v2844
        %v2877 = vunpack.c.l.b16 %v2845
        %v2878 = vunpack.c.l.b16 %v2846
        %v2879 = vunpack.c.l.b16 %v2847
        %v2880 = vunpack.c.l.b16 %v2848
        %v2881 = vunpack.c.l.b16 %v2849
        %v2882 = vunpack.c.l.b16 %v2850
        %v2883 = vunpack.c.l.b16 %v2851
        %v2884 = vpack.c.b16 %v2869, %v2868
        %v2885 = vpack.c.b16 %v2871, %v2870
        %v2886 = vpack.c.b16 %v2873, %v2872
        %v2887 = vpack.c.b16 %v2875, %v2874
        %v2888 = vpack.c.b16 %v2877, %v2876
        %v2889 = vpack.c.b16 %v2879, %v2878
        %v2890 = vpack.c.b16 %v2881, %v2880
        %v2891 = vpack.c.b16 %v2883, %v2882
        %2900 = vmatpush.bf16.msra.mxu0 %v2891
        %2901 = vmatpush.bf16.msra.mxu0 %v2890
        %2902 = vmatpush.bf16.msra.mxu0 %v2889
        %2903 = vmatpush.bf16.msra.mxu0 %v2888
        %2904 = vmatpush.bf16.msra.mxu0 %v2887
        %2905 = vmatpush.bf16.msra.mxu0 %v2886
        %2906 = vmatpush.bf16.msra.mxu0 %v2885
        %2907 = vmatpush.bf16.msra.mxu0 %v2884
        %2908 = vmatmul.bf16.gmra.mxu0 %v2834
        %v2909 = vpop.f32.mrf.mxu0
        %v2910 = vadd.f32 0.0, %v2909
        %v2911 = vpop.f32.mrf.mxu0
        %v2912 = vadd.f32 0.0, %v2911
        %2913 = vdwg.mxu0
        %2914 = vadd.xlane.f32.xlu0 %v2910
        %v2915 = vpop.xlane.xlu0 %2914
        %2916 = vadd.xlane.f32.xlu0 %v2912
        %v2917 = vpop.xlane.xlu0 %2916
        %v2918 = vmul.f32 %v2915, 0.03125
        %v2919 = vmul.f32 %v2917, 0.03125
        %v2920 = vsub.f32 %v2910, %v2918
        %v2921 = vsub.f32 %v2912, %v2919
        %v2922 = vmul.f32 %v2920, %v831
        %v2923 = vmul.f32 %v2921, %v831
        %v2924 = vmul.f32 %v2922, %v2922
        %v2925 = vmul.f32 %v2923, %v2923
        %2926 = vadd.xlane.f32.xlu0 %v2924
        %v2927 = vpop.xlane.xlu0 %2926
        %2928 = vadd.xlane.f32.xlu0 %v2925
        %v2929 = vpop.xlane.xlu0 %2928
        %v2930 = vmul.f32 %v2927, 0.03125
        %v2931 = vmul.f32 %v2929, 0.03125
        %v2932 = vadd.f32 %v2930, 1e-05
        %v2933 = vadd.f32 %v2931, 1e-05
        %v2934 = vrsqrt.pop %v2932
        %v2935 = vmul.f32 %v2934, %v2932
        %v2936 = vmul.f32 %v2935, %v2934
        %v2937 = vmul.f32 0.5, %v2936
        %v2938 = vsub.f32 1.5, %v2937
        %v2939 = vmul.f32 %v2934, %v2938
        %vm2940 = vweird.f32 %v2932
        %vm2941 = vweird.f32 %v2934
        %vm2942 = vmor %vm2940, %vm2941
        %v2943 = vsel %vm2942, %v2934, %v2939
        %v2944 = vrsqrt.pop %v2933
        %v2945 = vmul.f32 %v2944, %v2933
        %v2946 = vmul.f32 %v2945, %v2944
        %v2947 = vmul.f32 0.5, %v2946
        %v2948 = vsub.f32 1.5, %v2947
        %v2949 = vmul.f32 %v2944, %v2948
        %vm2950 = vweird.f32 %v2933
        %vm2951 = vweird.f32 %v2944
        %vm2952 = vmor %vm2950, %vm2951
        %v2953 = vsel %vm2952, %v2944, %v2949
        %v2954 = vmul.f32 %v2922, %v2943
        %v2955 = vmul.f32 %v2923, %v2953
        %s2956 = scalar_lea.vmem %s14, 1
        %v2957 = vld [vmem:[%s2956] sm:$0x1]
        %v2959 = vperm.slane %v2957, 0
        %v2961 = vmul.f32 %v2954, %v2959
        %v2962 = vmul.f32 %v2955, %v2959
        %s2963 = scalar_lea.vmem %s15, 1
        %v2964 = vld [vmem:[%s2963] sm:$0x1]
        %v2966 = vperm.slane %v2964, 0
        %v2968 = vadd.f32 %v2961, %v2966
        %v2969 = vadd.f32 %v2962, %v2966
        %v2970 = vmul.f32 %v2968, %v839
        %v2971 = vmul.f32 %v2969, %v840
        %v2972 = vadd.f32 %v2051, %v2970
        %v2973 = vadd.f32 %v2052, %v2971
        %2974 = vst [vmem:[%s814] sm:$0xff] %v2972
        %2975 = vst [vmem:[%s814 + $0x8] sm:$0xff] %v2973
        %v2976 = vmul.f32 %v2972, %v851
        %v2977 = vmul.f32 %v2973, %v852
        %v2978 = vadd.f32 %v2976, %v2977
        %v2979 = vrot.slane %v2978, 4
        %v2980 = vadd.f32 %v2978, %v2979
        %v2981 = vrot.slane %v2980, 2
        %v2982 = vadd.f32 %v2980, %v2981
        %v2983 = vrot.slane %v2982, 1
        %v2984 = vadd.f32 %v2982, %v2983
        %2985 = vadd.xlane.f32.xlu0 %v2984
        %v2986 = vpop.xlane.xlu0 %2985
        %v2987 = vmul.f32 %v2986, 0.03125
        %v2988 = vsub.f32 %v2984, %v2987
        %v2989 = vmul.f32 %v2988, %v831
        %v2990 = vmul.f32 %v2989, %v2989
        %2991 = vadd.xlane.f32.xlu0 %v2990
        %v2992 = vpop.xlane.xlu0 %2991
        %v2993 = vmul.f32 %v2992, 0.03125
        %v2994 = vadd.f32 %v2993, 1e-05
        %v2995 = vrsqrt.pop %v2994
        %v2996 = vmul.f32 %v2995, %v2994
        %v2997 = vmul.f32 %v2996, %v2995
        %v2998 = vmul.f32 0.5, %v2997
        %v2999 = vsub.f32 1.5, %v2998
        %v3000 = vmul.f32 %v2995, %v2999
        %vm3001 = vweird.f32 %v2994
        %vm3002 = vweird.f32 %v2995
        %vm3003 = vmor %vm3001, %vm3002
        %v3004 = vsel %vm3003, %v2995, %v3000
        %v3005 = vmul.f32 %v2989, %v3004
        %v3006 = vld [vmem:[#allocation9] sm:$0x1]
        %v3007 = vmul.f32 %v3005, %v3006
        %v3008 = vld [vmem:[#allocation10] sm:$0x1]
        %v3009 = vadd.f32 %v3007, %v3008
        %v3010 = vpack.c.bf16 %v3009, %v3009
        %v3011 = vld [vmem:[#allocation12] sm:$0xf]
        %v3012 = vld [vmem:[#allocation12 + $0x4] sm:$0xf]
        %v3013 = vld [vmem:[#allocation12 + $0x8] sm:$0xf]
        %v3014 = vld [vmem:[#allocation12 + $0xc] sm:$0xf]
        %v3015 = vld [vmem:[#allocation12 + $0x10] sm:$0xf]
        %v3016 = vld [vmem:[#allocation12 + $0x14] sm:$0xf]
        %v3017 = vld [vmem:[#allocation12 + $0x18] sm:$0xf]
        %v3018 = vld [vmem:[#allocation12 + $0x1c] sm:$0xf]
        %v3019 = vld [vmem:[#allocation12 + $0x20] sm:$0xf]
        %v3020 = vld [vmem:[#allocation12 + $0x24] sm:$0xf]
        %v3021 = vld [vmem:[#allocation12 + $0x28] sm:$0xf]
        %v3022 = vld [vmem:[#allocation12 + $0x2c] sm:$0xf]
        %v3023 = vld [vmem:[#allocation12 + $0x30] sm:$0xf]
        %v3024 = vld [vmem:[#allocation12 + $0x34] sm:$0xf]
        %v3025 = vld [vmem:[#allocation12 + $0x38] sm:$0xf]
        %v3026 = vld [vmem:[#allocation12 + $0x3c] sm:$0xf]
        %v3027 = vld [vmem:[#allocation13] sm:$0x1]
        %v3044 = vunpack.c.l.b16 %v3011
        %v3045 = vunpack.c.l.b16 %v3012
        %v3046 = vunpack.c.l.b16 %v3013
        %v3047 = vunpack.c.l.b16 %v3014
        %v3048 = vunpack.c.l.b16 %v3015
        %v3049 = vunpack.c.l.b16 %v3016
        %v3050 = vunpack.c.l.b16 %v3017
        %v3051 = vunpack.c.l.b16 %v3018
        %v3052 = vunpack.c.l.b16 %v3019
        %v3053 = vunpack.c.l.b16 %v3020
        %v3054 = vunpack.c.l.b16 %v3021
        %v3055 = vunpack.c.l.b16 %v3022
        %v3056 = vunpack.c.l.b16 %v3023
        %v3057 = vunpack.c.l.b16 %v3024
        %v3058 = vunpack.c.l.b16 %v3025
        %v3059 = vunpack.c.l.b16 %v3026
        %v3060 = vpack.c.b16 %v3045, %v3044
        %v3061 = vpack.c.b16 %v3047, %v3046
        %v3062 = vpack.c.b16 %v3049, %v3048
        %v3063 = vpack.c.b16 %v3051, %v3050
        %v3064 = vpack.c.b16 %v3053, %v3052
        %v3065 = vpack.c.b16 %v3055, %v3054
        %v3066 = vpack.c.b16 %v3057, %v3056
        %v3067 = vpack.c.b16 %v3059, %v3058
        %3076 = vmatpush.bf16.msra.mxu0 %v3067
        %3077 = vmatpush.bf16.msra.mxu0 %v3066
        %3078 = vmatpush.bf16.msra.mxu0 %v3065
        %3079 = vmatpush.bf16.msra.mxu0 %v3064
        %3080 = vmatpush.bf16.msra.mxu0 %v3063
        %3081 = vmatpush.bf16.msra.mxu0 %v3062
        %3082 = vmatpush.bf16.msra.mxu0 %v3061
        %3083 = vmatpush.bf16.msra.mxu0 %v3060
        %3084 = vmatmul.bf16.gmra.mxu0 %v3010
        %v3085 = vpop.f32.mrf.mxu0
        %v3086 = vadd.f32 %v3027, %v3085
        %v3087 = vpop.f32.mrf.mxu0
        %3088 = vdwg.mxu0
        %3089 = vst [vmem:[%s817] sm:$0x1] %v3086
        %p3090 = scmp.lt.s32.totalorder %s39, 1
        %s3091 = scalar_select %p3090, %s39, 1
        %s3092 = smul.addr %s3091, 2
        %s3093 = smul.addr %s3092, 8
        %s3094 = scalar_lea.vmem %s21, %s3093
        %p3095 = scmp.lt.s32.totalorder %s39, 1
        %s3096 = scalar_select %p3095, %s39, 1
        %s3097 = scalar_lea.vmem %s22, %s3096
        // Predicated region
        $region137: #{forward.1} parent=103 // pred_check
          %p3098 = pneg %p503
        $region138: #{forward.1} parent=103 // pred_check_branch
          %3100 = sbr.rel (%p3098) target = $region140
        $region139: #{forward.1} parent=103 // pred_region
          _
        $region140: #{forward.1} parent=103 // pred_fallthru
          _
        // Predicated region
        $region141: #{forward.1} parent=103 // pred_check
          %p3101 = pneg %p529
        $region142: #{forward.1} parent=103 // pred_check_branch
          %3103 = sbr.rel (%p3101) target = $region144
        $region143: #{forward.1} parent=103 // pred_region
          _
        $region144: #{forward.1} parent=103 // pred_fallthru
          _
      $region104: #{forward.1} parent=5 // pred_fallthru
        _
      %p3104 = scmp.le.s32.totalorder 2, %s34
      // Predicated region
      $region145: #{forward.1} parent=5 // pred_check
        %p3105 = pneg %p3104
      $region146: #{forward.1} parent=5 // pred_check_branch
        %3107 = sbr.rel (%p3105) target = $region148
      $region147: #{forward.1} parent=5 // pred_region
        %s3108 = ssub.s32 %s34, 2
        // Predicated region
        $region149: #{forward.1} parent=147 // pred_check
          %p3109 = pneg %p509
        $region150: #{forward.1} parent=147 // pred_check_branch
          %3111 = sbr.rel (%p3109) target = $region152
        $region151: #{forward.1} parent=147 // pred_region
          %p3112 = scmp.lt.s32.totalorder %s40, 1
          %s3113 = scalar_select %p3112, %s40, 1
          %s3114 = smul.addr %s3113, 2
          %s3115 = smul.addr %s3114, 8
          %s3116 = scalar_lea.vmem %s21, %s3115
        $region152: #{forward.1} parent=147 // pred_fallthru
          _
        // Predicated region
        $region153: #{forward.1} parent=147 // pred_check
          %p3117 = pneg %p535
        $region154: #{forward.1} parent=147 // pred_check_branch
          %3119 = sbr.rel (%p3117) target = $region156
        $region155: #{forward.1} parent=147 // pred_region
          %p3120 = scmp.lt.s32.totalorder %s40, 1
          %s3121 = scalar_select %p3120, %s40, 1
          %s3122 = scalar_lea.vmem %s22, %s3121
        $region156: #{forward.1} parent=147 // pred_fallthru
          _
      $region148: #{forward.1} parent=5 // pred_fallthru
        _
    $region6: #{forward.1} parent=1 // loop_footer
      %s38 = sadd.s32 1, %s34
    $region7: #{forward.1} parent=1 // loop_footer_branch
      %33 = sbr.rel target = $region3
    $region8: #{forward.1} parent=1 // loop_exit
      _
    %3123 = vsyncpa [#allocation3], 1
    %s3124 = scalar_lea.sflag [#allocation3], 1
    %3125 = vsyncpa %s3124, 1
    %3126 = vsyncpa [#allocation5], 1
    %3127 = vsyncpa [#allocation8], 1
    %3128 = vsyncpa [#allocation11], 1
    %3129 = vsyncpa [#allocation14], 1

</llo_original>
